<compile_context>
chip_gen: v6e
topology: v6e:2x2x1
jax: 0.10.0
libtpu: 0.0.40
codegen_flags: <defaults>
</compile_context>

<pallas_src>
import math

import jax
import jax.numpy as jnp
from jax.experimental import pallas as pl
from jax.experimental.pallas import tpu as pltpu


def build_pe(d_model: int, max_len: int = 5000, dtype=jnp.float32):
    """Deterministic positional-encoding buffer, identical to the module's __init__."""
    position = jnp.arange(max_len, dtype=jnp.float32)[:, None]              # (max_len, 1)
    div_term = jnp.exp(
        jnp.arange(0, d_model, 2, dtype=jnp.float32) * (-math.log(10000.0) / d_model)
    )                                                                        # (ceil(D/2),)
    angles = position * div_term                                             # (max_len, ceil(D/2))
    pe = jnp.zeros((max_len, d_model), dtype=dtype)
    pe = pe.at[:, 0::2].set(jnp.sin(angles).astype(dtype))
    # Guard for odd d_model (review note): cos fills only floor(D/2) columns.
    pe = pe.at[:, 1::2].set(jnp.cos(angles[:, : d_model // 2]).astype(dtype))
    return pe                                                                # (max_len, D)


def _posenc_kernel(x_ref, pe_ref, o_ref):
    # x_ref : (TS, B, D)     activations for TS sequence positions
    # pe_ref: (TS, 1, D)     matching positional-encoding rows
    # o_ref : (TS, B, D*D)   lane-dense block: o[t, b, i*D + j] = x[t, b, i] + pe[t, 0, j]
    x = x_ref[...]                                     # (TS, B, D)
    pe = jnp.broadcast_to(pe_ref[...], x.shape)        # hoist the sublane broadcast once
    d = x.shape[-1]
    for i in range(d):                                 # static unroll over chunk index i
        # (TS, B, 1) lane-broadcast + resident pe -> one (TS, B, D) slab stored at lane
        # offset i*D inside the lane-dense output block.
        o_ref[:, :, i * d:(i + 1) * d] = x[:, :, i:i + 1] + pe


def positional_encoding_forward(x: jax.Array, pe: jax.Array,
                                out_block_bytes: int = 4 * 1024 * 1024) -> jax.Array:
    """x: (S, B, D); pe: (max_len, D). Returns (S, B, D*D)."""
    S, B, D = x.shape
    DD = D * D
    pe_s = pe[:S].reshape(S, 1, D)                     # matches self.pe[:S, ...]

    # Sequence-tile size: as many positions per grid step as the (double-buffered)
    # output block budget allows.  Large problems then get >= 2 grid steps, which the
    # "parallel" axis splits across v7x's two TensorCores; the toy problem is 1 step.
    bytes_per_pos = B * DD * x.dtype.itemsize
    ts = int(max(1, min(S, out_block_bytes // max(1, bytes_per_pos))))
    grid = (pl.cdiv(S, ts),)

    return pl.pallas_call(
        _posenc_kernel,
        out_shape=jax.ShapeDtypeStruct((S, B, DD), x.dtype),
        grid=grid,
        in_specs=[
            pl.BlockSpec((ts, B, D), lambda s: (s, 0, 0)),
            pl.BlockSpec((ts, 1, D), lambda s: (s, 0, 0)),
        ],
        out_specs=pl.BlockSpec((ts, B, DD), lambda s: (s, 0, 0)),
        compiler_params=pltpu.CompilerParams(
            dimension_semantics=("parallel",),
            # ~8.3 MiB actually used (double-buffered blocks); 32 MiB cap is safe on
            # v5e (128 MiB phys), v6e (128 MiB) and v7x (64 MiB phys / 32 MiB default).
            vmem_limit_bytes=32 * 1024 * 1024,
        ),
    )(x, pe_s)


if __name__ == "__main__":
    S, B, D = 8, 2, 32   # seq=8, batch=2, d_model=32 (small, consistent with forward)
    key = jax.random.PRNGKey(0)
    x = jax.random.normal(key, (S, B, D), dtype=jnp.float32)

    pe = build_pe(d_model=D, max_len=5000)

    fwd = jax.jit(positional_encoding_forward)
    out = jax.block_until_ready(fwd(x, pe))

    # Pure-JAX reference of the exact PyTorch semantics.
    ref = (x[:, :, :, None] + pe[:S][:, None, None, :]).reshape(S, B, D * D)
    assert out.shape == (S, B, D * D)
    assert jnp.allclose(out, ref, atol=1e-6, rtol=1e-6)

    print("KERNEL_OK")
</pallas_src>

<mosaic_0001>
module attributes {stable_mosaic.version = 11 : i64} {
  func.func @_posenc_kernel(%arg0: i32, %arg1: memref<8x2x32xf32, #tpu.memory_space<vmem>>, %arg2: memref<8x1x32xf32, #tpu.memory_space<vmem>>, %arg3: memref<8x2x1024xf32, #tpu.memory_space<vmem>>) attributes {dimension_semantics = [#tpu.dimension_semantics<parallel>], iteration_bounds = array<i64: 1>, scalar_prefetch = 0 : i64, scratch_operands = 0 : i64, tpu.core_type = #tpu.core_type<tc>, window_params = [{transform_indices = @transform_0, window_bounds = array<i64: 8, 2, 32>}, {transform_indices = @transform_1, window_bounds = array<i64: 8, 1, 32>}, {transform_indices = @transform_2, window_bounds = array<i64: 8, 2, 1024>}]} {
    %c0 = arith.constant 0 : index
    %c0_0 = arith.constant 0 : index
    %c0_1 = arith.constant 0 : index
    %0 = vector.load %arg1[%c0, %c0_0, %c0_1] : memref<8x2x32xf32, #tpu.memory_space<vmem>>, vector<8x2x32xf32>
    %c0_2 = arith.constant 0 : index
    %c0_3 = arith.constant 0 : index
    %c0_4 = arith.constant 0 : index
    %1 = vector.load %arg2[%c0_2, %c0_3, %c0_4] : memref<8x1x32xf32, #tpu.memory_space<vmem>>, vector<8x1x32xf32>
    %2 = vector.shape_cast %1 : vector<8x1x32xf32> to vector<8x1x32xf32>
    %3 = vector.broadcast %2 : vector<8x1x32xf32> to vector<8x2x32xf32>
    %4 = vector.extract_strided_slice %0 {offsets = [0, 0, 0], sizes = [8, 2, 1], strides = [1, 1, 1]} : vector<8x2x32xf32> to vector<8x2x1xf32>
    %5 = vector.broadcast %4 : vector<8x2x1xf32> to vector<8x2x32xf32>
    %6 = arith.addf %5, %3 : vector<8x2x32xf32>
    %c0_5 = arith.constant 0 : index
    %c0_6 = arith.constant 0 : index
    %c0_7 = arith.constant 0 : index
    %7 = vector.load %arg3[%c0_5, %c0_6, %c0_7] : memref<8x2x1024xf32, #tpu.memory_space<vmem>>, vector<8x2x32xf32>
    tpu.vector_store %arg3[%c0_5, %c0_6, %c0_7], %6 {strides = array<i32>} : memref<8x2x1024xf32, #tpu.memory_space<vmem>>, vector<8x2x32xf32>,
    %8 = vector.extract_strided_slice %0 {offsets = [0, 0, 1], sizes = [8, 2, 1], strides = [1, 1, 1]} : vector<8x2x32xf32> to vector<8x2x1xf32>
    %9 = vector.broadcast %8 : vector<8x2x1xf32> to vector<8x2x32xf32>
    %10 = arith.addf %9, %3 : vector<8x2x32xf32>
    %c0_8 = arith.constant 0 : index
    %c0_9 = arith.constant 0 : index
    %c32 = arith.constant 32 : index
    %11 = vector.load %arg3[%c0_8, %c0_9, %c32] : memref<8x2x1024xf32, #tpu.memory_space<vmem>>, vector<8x2x32xf32>
    tpu.vector_store %arg3[%c0_8, %c0_9, %c32], %10 {strides = array<i32>} : memref<8x2x1024xf32, #tpu.memory_space<vmem>>, vector<8x2x32xf32>,
    %12 = vector.extract_strided_slice %0 {offsets = [0, 0, 2], sizes = [8, 2, 1], strides = [1, 1, 1]} : vector<8x2x32xf32> to vector<8x2x1xf32>
    %13 = vector.broadcast %12 : vector<8x2x1xf32> to vector<8x2x32xf32>
    %14 = arith.addf %13, %3 : vector<8x2x32xf32>
    %c0_10 = arith.constant 0 : index
    %c0_11 = arith.constant 0 : index
    %c64 = arith.constant 64 : index
    %15 = vector.load %arg3[%c0_10, %c0_11, %c64] : memref<8x2x1024xf32, #tpu.memory_space<vmem>>, vector<8x2x32xf32>
    tpu.vector_store %arg3[%c0_10, %c0_11, %c64], %14 {strides = array<i32>} : memref<8x2x1024xf32, #tpu.memory_space<vmem>>, vector<8x2x32xf32>,
    %16 = vector.extract_strided_slice %0 {offsets = [0, 0, 3], sizes = [8, 2, 1], strides = [1, 1, 1]} : vector<8x2x32xf32> to vector<8x2x1xf32>
    %17 = vector.broadcast %16 : vector<8x2x1xf32> to vector<8x2x32xf32>
    %18 = arith.addf %17, %3 : vector<8x2x32xf32>
    %c0_12 = arith.constant 0 : index
    %c0_13 = arith.constant 0 : index
    %c96 = arith.constant 96 : index
    %19 = vector.load %arg3[%c0_12, %c0_13, %c96] : memref<8x2x1024xf32, #tpu.memory_space<vmem>>, vector<8x2x32xf32>
    tpu.vector_store %arg3[%c0_12, %c0_13, %c96], %18 {strides = array<i32>} : memref<8x2x1024xf32, #tpu.memory_space<vmem>>, vector<8x2x32xf32>,
    %20 = vector.extract_strided_slice %0 {offsets = [0, 0, 4], sizes = [8, 2, 1], strides = [1, 1, 1]} : vector<8x2x32xf32> to vector<8x2x1xf32>
    %21 = vector.broadcast %20 : vector<8x2x1xf32> to vector<8x2x32xf32>
    %22 = arith.addf %21, %3 : vector<8x2x32xf32>
    %c0_14 = arith.constant 0 : index
    %c0_15 = arith.constant 0 : index
    %c128 = arith.constant 128 : index
    %23 = vector.load %arg3[%c0_14, %c0_15, %c128] : memref<8x2x1024xf32, #tpu.memory_space<vmem>>, vector<8x2x32xf32>
    tpu.vector_store %arg3[%c0_14, %c0_15, %c128], %22 {strides = array<i32>} : memref<8x2x1024xf32, #tpu.memory_space<vmem>>, vector<8x2x32xf32>,
    %24 = vector.extract_strided_slice %0 {offsets = [0, 0, 5], sizes = [8, 2, 1], strides = [1, 1, 1]} : vector<8x2x32xf32> to vector<8x2x1xf32>
    %25 = vector.broadcast %24 : vector<8x2x1xf32> to vector<8x2x32xf32>
    %26 = arith.addf %25, %3 : vector<8x2x32xf32>
    %c0_16 = arith.constant 0 : index
    %c0_17 = arith.constant 0 : index
    %c160 = arith.constant 160 : index
    %27 = vector.load %arg3[%c0_16, %c0_17, %c160] : memref<8x2x1024xf32, #tpu.memory_space<vmem>>, vector<8x2x32xf32>
    tpu.vector_store %arg3[%c0_16, %c0_17, %c160], %26 {strides = array<i32>} : memref<8x2x1024xf32, #tpu.memory_space<vmem>>, vector<8x2x32xf32>,
    %28 = vector.extract_strided_slice %0 {offsets = [0, 0, 6], sizes = [8, 2, 1], strides = [1, 1, 1]} : vector<8x2x32xf32> to vector<8x2x1xf32>
    %29 = vector.broadcast %28 : vector<8x2x1xf32> to vector<8x2x32xf32>
    %30 = arith.addf %29, %3 : vector<8x2x32xf32>
    %c0_18 = arith.constant 0 : index
    %c0_19 = arith.constant 0 : index
    %c192 = arith.constant 192 : index
    %31 = vector.load %arg3[%c0_18, %c0_19, %c192] : memref<8x2x1024xf32, #tpu.memory_space<vmem>>, vector<8x2x32xf32>
    tpu.vector_store %arg3[%c0_18, %c0_19, %c192], %30 {strides = array<i32>} : memref<8x2x1024xf32, #tpu.memory_space<vmem>>, vector<8x2x32xf32>,
    %32 = vector.extract_strided_slice %0 {offsets = [0, 0, 7], sizes = [8, 2, 1], strides = [1, 1, 1]} : vector<8x2x32xf32> to vector<8x2x1xf32>
    %33 = vector.broadcast %32 : vector<8x2x1xf32> to vector<8x2x32xf32>
    %34 = arith.addf %33, %3 : vector<8x2x32xf32>
    %c0_20 = arith.constant 0 : index
    %c0_21 = arith.constant 0 : index
    %c224 = arith.constant 224 : index
    %35 = vector.load %arg3[%c0_20, %c0_21, %c224] : memref<8x2x1024xf32, #tpu.memory_space<vmem>>, vector<8x2x32xf32>
    tpu.vector_store %arg3[%c0_20, %c0_21, %c224], %34 {strides = array<i32>} : memref<8x2x1024xf32, #tpu.memory_space<vmem>>, vector<8x2x32xf32>,
    %36 = vector.extract_strided_slice %0 {offsets = [0, 0, 8], sizes = [8, 2, 1], strides = [1, 1, 1]} : vector<8x2x32xf32> to vector<8x2x1xf32>
    %37 = vector.broadcast %36 : vector<8x2x1xf32> to vector<8x2x32xf32>
    %38 = arith.addf %37, %3 : vector<8x2x32xf32>
    %c0_22 = arith.constant 0 : index
    %c0_23 = arith.constant 0 : index
    %c256 = arith.constant 256 : index
    %39 = vector.load %arg3[%c0_22, %c0_23, %c256] : memref<8x2x1024xf32, #tpu.memory_space<vmem>>, vector<8x2x32xf32>
    tpu.vector_store %arg3[%c0_22, %c0_23, %c256], %38 {strides = array<i32>} : memref<8x2x1024xf32, #tpu.memory_space<vmem>>, vector<8x2x32xf32>,
    %40 = vector.extract_strided_slice %0 {offsets = [0, 0, 9], sizes = [8, 2, 1], strides = [1, 1, 1]} : vector<8x2x32xf32> to vector<8x2x1xf32>
    %41 = vector.broadcast %40 : vector<8x2x1xf32> to vector<8x2x32xf32>
    %42 = arith.addf %41, %3 : vector<8x2x32xf32>
    %c0_24 = arith.constant 0 : index
    %c0_25 = arith.constant 0 : index
    %c288 = arith.constant 288 : index
    %43 = vector.load %arg3[%c0_24, %c0_25, %c288] : memref<8x2x1024xf32, #tpu.memory_space<vmem>>, vector<8x2x32xf32>
    tpu.vector_store %arg3[%c0_24, %c0_25, %c288], %42 {strides = array<i32>} : memref<8x2x1024xf32, #tpu.memory_space<vmem>>, vector<8x2x32xf32>,
    %44 = vector.extract_strided_slice %0 {offsets = [0, 0, 10], sizes = [8, 2, 1], strides = [1, 1, 1]} : vector<8x2x32xf32> to vector<8x2x1xf32>
    %45 = vector.broadcast %44 : vector<8x2x1xf32> to vector<8x2x32xf32>
    %46 = arith.addf %45, %3 : vector<8x2x32xf32>
    %c0_26 = arith.constant 0 : index
    %c0_27 = arith.constant 0 : index
    %c320 = arith.constant 320 : index
    %47 = vector.load %arg3[%c0_26, %c0_27, %c320] : memref<8x2x1024xf32, #tpu.memory_space<vmem>>, vector<8x2x32xf32>
    tpu.vector_store %arg3[%c0_26, %c0_27, %c320], %46 {strides = array<i32>} : memref<8x2x1024xf32, #tpu.memory_space<vmem>>, vector<8x2x32xf32>,
    %48 = vector.extract_strided_slice %0 {offsets = [0, 0, 11], sizes = [8, 2, 1], strides = [1, 1, 1]} : vector<8x2x32xf32> to vector<8x2x1xf32>
    %49 = vector.broadcast %48 : vector<8x2x1xf32> to vector<8x2x32xf32>
    %50 = arith.addf %49, %3 : vector<8x2x32xf32>
    %c0_28 = arith.constant 0 : index
    %c0_29 = arith.constant 0 : index
    %c352 = arith.constant 352 : index
    %51 = vector.load %arg3[%c0_28, %c0_29, %c352] : memref<8x2x1024xf32, #tpu.memory_space<vmem>>, vector<8x2x32xf32>
    tpu.vector_store %arg3[%c0_28, %c0_29, %c352], %50 {strides = array<i32>} : memref<8x2x1024xf32, #tpu.memory_space<vmem>>, vector<8x2x32xf32>,
    %52 = vector.extract_strided_slice %0 {offsets = [0, 0, 12], sizes = [8, 2, 1], strides = [1, 1, 1]} : vector<8x2x32xf32> to vector<8x2x1xf32>
    %53 = vector.broadcast %52 : vector<8x2x1xf32> to vector<8x2x32xf32>
    %54 = arith.addf %53, %3 : vector<8x2x32xf32>
    %c0_30 = arith.constant 0 : index
    %c0_31 = arith.constant 0 : index
    %c384 = arith.constant 384 : index
    %55 = vector.load %arg3[%c0_30, %c0_31, %c384] : memref<8x2x1024xf32, #tpu.memory_space<vmem>>, vector<8x2x32xf32>
    tpu.vector_store %arg3[%c0_30, %c0_31, %c384], %54 {strides = array<i32>} : memref<8x2x1024xf32, #tpu.memory_space<vmem>>, vector<8x2x32xf32>,
    %56 = vector.extract_strided_slice %0 {offsets = [0, 0, 13], sizes = [8, 2, 1], strides = [1, 1, 1]} : vector<8x2x32xf32> to vector<8x2x1xf32>
    %57 = vector.broadcast %56 : vector<8x2x1xf32> to vector<8x2x32xf32>
    %58 = arith.addf %57, %3 : vector<8x2x32xf32>
    %c0_32 = arith.constant 0 : index
    %c0_33 = arith.constant 0 : index
    %c416 = arith.constant 416 : index
    %59 = vector.load %arg3[%c0_32, %c0_33, %c416] : memref<8x2x1024xf32, #tpu.memory_space<vmem>>, vector<8x2x32xf32>
    tpu.vector_store %arg3[%c0_32, %c0_33, %c416], %58 {strides = array<i32>} : memref<8x2x1024xf32, #tpu.memory_space<vmem>>, vector<8x2x32xf32>,
    %60 = vector.extract_strided_slice %0 {offsets = [0, 0, 14], sizes = [8, 2, 1], strides = [1, 1, 1]} : vector<8x2x32xf32> to vector<8x2x1xf32>
    %61 = vector.broadcast %60 : vector<8x2x1xf32> to vector<8x2x32xf32>
    %62 = arith.addf %61, %3 : vector<8x2x32xf32>
    %c0_34 = arith.constant 0 : index
    %c0_35 = arith.constant 0 : index
    %c448 = arith.constant 448 : index
    %63 = vector.load %arg3[%c0_34, %c0_35, %c448] : memref<8x2x1024xf32, #tpu.memory_space<vmem>>, vector<8x2x32xf32>
    tpu.vector_store %arg3[%c0_34, %c0_35, %c448], %62 {strides = array<i32>} : memref<8x2x1024xf32, #tpu.memory_space<vmem>>, vector<8x2x32xf32>,
    %64 = vector.extract_strided_slice %0 {offsets = [0, 0, 15], sizes = [8, 2, 1], strides = [1, 1, 1]} : vector<8x2x32xf32> to vector<8x2x1xf32>
    %65 = vector.broadcast %64 : vector<8x2x1xf32> to vector<8x2x32xf32>
    %66 = arith.addf %65, %3 : vector<8x2x32xf32>
    %c0_36 = arith.constant 0 : index
    %c0_37 = arith.constant 0 : index
    %c480 = arith.constant 480 : index
    %67 = vector.load %arg3[%c0_36, %c0_37, %c480] : memref<8x2x1024xf32, #tpu.memory_space<vmem>>, vector<8x2x32xf32>
    tpu.vector_store %arg3[%c0_36, %c0_37, %c480], %66 {strides = array<i32>} : memref<8x2x1024xf32, #tpu.memory_space<vmem>>, vector<8x2x32xf32>,
    %68 = vector.extract_strided_slice %0 {offsets = [0, 0, 16], sizes = [8, 2, 1], strides = [1, 1, 1]} : vector<8x2x32xf32> to vector<8x2x1xf32>
    %69 = vector.broadcast %68 : vector<8x2x1xf32> to vector<8x2x32xf32>
    %70 = arith.addf %69, %3 : vector<8x2x32xf32>
    %c0_38 = arith.constant 0 : index
    %c0_39 = arith.constant 0 : index
    %c512 = arith.constant 512 : index
    %71 = vector.load %arg3[%c0_38, %c0_39, %c512] : memref<8x2x1024xf32, #tpu.memory_space<vmem>>, vector<8x2x32xf32>
    tpu.vector_store %arg3[%c0_38, %c0_39, %c512], %70 {strides = array<i32>} : memref<8x2x1024xf32, #tpu.memory_space<vmem>>, vector<8x2x32xf32>,
    %72 = vector.extract_strided_slice %0 {offsets = [0, 0, 17], sizes = [8, 2, 1], strides = [1, 1, 1]} : vector<8x2x32xf32> to vector<8x2x1xf32>
    %73 = vector.broadcast %72 : vector<8x2x1xf32> to vector<8x2x32xf32>
    %74 = arith.addf %73, %3 : vector<8x2x32xf32>
    %c0_40 = arith.constant 0 : index
    %c0_41 = arith.constant 0 : index
    %c544 = arith.constant 544 : index
    %75 = vector.load %arg3[%c0_40, %c0_41, %c544] : memref<8x2x1024xf32, #tpu.memory_space<vmem>>, vector<8x2x32xf32>
    tpu.vector_store %arg3[%c0_40, %c0_41, %c544], %74 {strides = array<i32>} : memref<8x2x1024xf32, #tpu.memory_space<vmem>>, vector<8x2x32xf32>,
    %76 = vector.extract_strided_slice %0 {offsets = [0, 0, 18], sizes = [8, 2, 1], strides = [1, 1, 1]} : vector<8x2x32xf32> to vector<8x2x1xf32>
    %77 = vector.broadcast %76 : vector<8x2x1xf32> to vector<8x2x32xf32>
    %78 = arith.addf %77, %3 : vector<8x2x32xf32>
    %c0_42 = arith.constant 0 : index
    %c0_43 = arith.constant 0 : index
    %c576 = arith.constant 576 : index
    %79 = vector.load %arg3[%c0_42, %c0_43, %c576] : memref<8x2x1024xf32, #tpu.memory_space<vmem>>, vector<8x2x32xf32>
    tpu.vector_store %arg3[%c0_42, %c0_43, %c576], %78 {strides = array<i32>} : memref<8x2x1024xf32, #tpu.memory_space<vmem>>, vector<8x2x32xf32>,
    %80 = vector.extract_strided_slice %0 {offsets = [0, 0, 19], sizes = [8, 2, 1], strides = [1, 1, 1]} : vector<8x2x32xf32> to vector<8x2x1xf32>
    %81 = vector.broadcast %80 : vector<8x2x1xf32> to vector<8x2x32xf32>
    %82 = arith.addf %81, %3 : vector<8x2x32xf32>
    %c0_44 = arith.constant 0 : index
    %c0_45 = arith.constant 0 : index
    %c608 = arith.constant 608 : index
    %83 = vector.load %arg3[%c0_44, %c0_45, %c608] : memref<8x2x1024xf32, #tpu.memory_space<vmem>>, vector<8x2x32xf32>
    tpu.vector_store %arg3[%c0_44, %c0_45, %c608], %82 {strides = array<i32>} : memref<8x2x1024xf32, #tpu.memory_space<vmem>>, vector<8x2x32xf32>,
    %84 = vector.extract_strided_slice %0 {offsets = [0, 0, 20], sizes = [8, 2, 1], strides = [1, 1, 1]} : vector<8x2x32xf32> to vector<8x2x1xf32>
    %85 = vector.broadcast %84 : vector<8x2x1xf32> to vector<8x2x32xf32>
    %86 = arith.addf %85, %3 : vector<8x2x32xf32>
    %c0_46 = arith.constant 0 : index
    %c0_47 = arith.constant 0 : index
    %c640 = arith.constant 640 : index
    %87 = vector.load %arg3[%c0_46, %c0_47, %c640] : memref<8x2x1024xf32, #tpu.memory_space<vmem>>, vector<8x2x32xf32>
    tpu.vector_store %arg3[%c0_46, %c0_47, %c640], %86 {strides = array<i32>} : memref<8x2x1024xf32, #tpu.memory_space<vmem>>, vector<8x2x32xf32>,
    %88 = vector.extract_strided_slice %0 {offsets = [0, 0, 21], sizes = [8, 2, 1], strides = [1, 1, 1]} : vector<8x2x32xf32> to vector<8x2x1xf32>
    %89 = vector.broadcast %88 : vector<8x2x1xf32> to vector<8x2x32xf32>
    %90 = arith.addf %89, %3 : vector<8x2x32xf32>
    %c0_48 = arith.constant 0 : index
    %c0_49 = arith.constant 0 : index
    %c672 = arith.constant 672 : index
    %91 = vector.load %arg3[%c0_48, %c0_49, %c672] : memref<8x2x1024xf32, #tpu.memory_space<vmem>>, vector<8x2x32xf32>
    tpu.vector_store %arg3[%c0_48, %c0_49, %c672], %90 {strides = array<i32>} : memref<8x2x1024xf32, #tpu.memory_space<vmem>>, vector<8x2x32xf32>,
    %92 = vector.extract_strided_slice %0 {offsets = [0, 0, 22], sizes = [8, 2, 1], strides = [1, 1, 1]} : vector<8x2x32xf32> to vector<8x2x1xf32>
    %93 = vector.broadcast %92 : vector<8x2x1xf32> to vector<8x2x32xf32>
    %94 = arith.addf %93, %3 : vector<8x2x32xf32>
    %c0_50 = arith.constant 0 : index
    %c0_51 = arith.constant 0 : index
    %c704 = arith.constant 704 : index
    %95 = vector.load %arg3[%c0_50, %c0_51, %c704] : memref<8x2x1024xf32, #tpu.memory_space<vmem>>, vector<8x2x32xf32>
    tpu.vector_store %arg3[%c0_50, %c0_51, %c704], %94 {strides = array<i32>} : memref<8x2x1024xf32, #tpu.memory_space<vmem>>, vector<8x2x32xf32>,
    %96 = vector.extract_strided_slice %0 {offsets = [0, 0, 23], sizes = [8, 2, 1], strides = [1, 1, 1]} : vector<8x2x32xf32> to vector<8x2x1xf32>
    %97 = vector.broadcast %96 : vector<8x2x1xf32> to vector<8x2x32xf32>
    %98 = arith.addf %97, %3 : vector<8x2x32xf32>
    %c0_52 = arith.constant 0 : index
    %c0_53 = arith.constant 0 : index
    %c736 = arith.constant 736 : index
    %99 = vector.load %arg3[%c0_52, %c0_53, %c736] : memref<8x2x1024xf32, #tpu.memory_space<vmem>>, vector<8x2x32xf32>
    tpu.vector_store %arg3[%c0_52, %c0_53, %c736], %98 {strides = array<i32>} : memref<8x2x1024xf32, #tpu.memory_space<vmem>>, vector<8x2x32xf32>,
    %100 = vector.extract_strided_slice %0 {offsets = [0, 0, 24], sizes = [8, 2, 1], strides = [1, 1, 1]} : vector<8x2x32xf32> to vector<8x2x1xf32>
    %101 = vector.broadcast %100 : vector<8x2x1xf32> to vector<8x2x32xf32>
    %102 = arith.addf %101, %3 : vector<8x2x32xf32>
    %c0_54 = arith.constant 0 : index
    %c0_55 = arith.constant 0 : index
    %c768 = arith.constant 768 : index
    %103 = vector.load %arg3[%c0_54, %c0_55, %c768] : memref<8x2x1024xf32, #tpu.memory_space<vmem>>, vector<8x2x32xf32>
    tpu.vector_store %arg3[%c0_54, %c0_55, %c768], %102 {strides = array<i32>} : memref<8x2x1024xf32, #tpu.memory_space<vmem>>, vector<8x2x32xf32>,
    %104 = vector.extract_strided_slice %0 {offsets = [0, 0, 25], sizes = [8, 2, 1], strides = [1, 1, 1]} : vector<8x2x32xf32> to vector<8x2x1xf32>
    %105 = vector.broadcast %104 : vector<8x2x1xf32> to vector<8x2x32xf32>
    %106 = arith.addf %105, %3 : vector<8x2x32xf32>
    %c0_56 = arith.constant 0 : index
    %c0_57 = arith.constant 0 : index
    %c800 = arith.constant 800 : index
    %107 = vector.load %arg3[%c0_56, %c0_57, %c800] : memref<8x2x1024xf32, #tpu.memory_space<vmem>>, vector<8x2x32xf32>
    tpu.vector_store %arg3[%c0_56, %c0_57, %c800], %106 {strides = array<i32>} : memref<8x2x1024xf32, #tpu.memory_space<vmem>>, vector<8x2x32xf32>,
    %108 = vector.extract_strided_slice %0 {offsets = [0, 0, 26], sizes = [8, 2, 1], strides = [1, 1, 1]} : vector<8x2x32xf32> to vector<8x2x1xf32>
    %109 = vector.broadcast %108 : vector<8x2x1xf32> to vector<8x2x32xf32>
    %110 = arith.addf %109, %3 : vector<8x2x32xf32>
    %c0_58 = arith.constant 0 : index
    %c0_59 = arith.constant 0 : index
    %c832 = arith.constant 832 : index
    %111 = vector.load %arg3[%c0_58, %c0_59, %c832] : memref<8x2x1024xf32, #tpu.memory_space<vmem>>, vector<8x2x32xf32>
    tpu.vector_store %arg3[%c0_58, %c0_59, %c832], %110 {strides = array<i32>} : memref<8x2x1024xf32, #tpu.memory_space<vmem>>, vector<8x2x32xf32>,
    %112 = vector.extract_strided_slice %0 {offsets = [0, 0, 27], sizes = [8, 2, 1], strides = [1, 1, 1]} : vector<8x2x32xf32> to vector<8x2x1xf32>
    %113 = vector.broadcast %112 : vector<8x2x1xf32> to vector<8x2x32xf32>
    %114 = arith.addf %113, %3 : vector<8x2x32xf32>
    %c0_60 = arith.constant 0 : index
    %c0_61 = arith.constant 0 : index
    %c864 = arith.constant 864 : index
    %115 = vector.load %arg3[%c0_60, %c0_61, %c864] : memref<8x2x1024xf32, #tpu.memory_space<vmem>>, vector<8x2x32xf32>
    tpu.vector_store %arg3[%c0_60, %c0_61, %c864], %114 {strides = array<i32>} : memref<8x2x1024xf32, #tpu.memory_space<vmem>>, vector<8x2x32xf32>,
    %116 = vector.extract_strided_slice %0 {offsets = [0, 0, 28], sizes = [8, 2, 1], strides = [1, 1, 1]} : vector<8x2x32xf32> to vector<8x2x1xf32>
    %117 = vector.broadcast %116 : vector<8x2x1xf32> to vector<8x2x32xf32>
    %118 = arith.addf %117, %3 : vector<8x2x32xf32>
    %c0_62 = arith.constant 0 : index
    %c0_63 = arith.constant 0 : index
    %c896 = arith.constant 896 : index
    %119 = vector.load %arg3[%c0_62, %c0_63, %c896] : memref<8x2x1024xf32, #tpu.memory_space<vmem>>, vector<8x2x32xf32>
    tpu.vector_store %arg3[%c0_62, %c0_63, %c896], %118 {strides = array<i32>} : memref<8x2x1024xf32, #tpu.memory_space<vmem>>, vector<8x2x32xf32>,
    %120 = vector.extract_strided_slice %0 {offsets = [0, 0, 29], sizes = [8, 2, 1], strides = [1, 1, 1]} : vector<8x2x32xf32> to vector<8x2x1xf32>
    %121 = vector.broadcast %120 : vector<8x2x1xf32> to vector<8x2x32xf32>
    %122 = arith.addf %121, %3 : vector<8x2x32xf32>
    %c0_64 = arith.constant 0 : index
    %c0_65 = arith.constant 0 : index
    %c928 = arith.constant 928 : index
    %123 = vector.load %arg3[%c0_64, %c0_65, %c928] : memref<8x2x1024xf32, #tpu.memory_space<vmem>>, vector<8x2x32xf32>
    tpu.vector_store %arg3[%c0_64, %c0_65, %c928], %122 {strides = array<i32>} : memref<8x2x1024xf32, #tpu.memory_space<vmem>>, vector<8x2x32xf32>,
    %124 = vector.extract_strided_slice %0 {offsets = [0, 0, 30], sizes = [8, 2, 1], strides = [1, 1, 1]} : vector<8x2x32xf32> to vector<8x2x1xf32>
    %125 = vector.broadcast %124 : vector<8x2x1xf32> to vector<8x2x32xf32>
    %126 = arith.addf %125, %3 : vector<8x2x32xf32>
    %c0_66 = arith.constant 0 : index
    %c0_67 = arith.constant 0 : index
    %c960 = arith.constant 960 : index
    %127 = vector.load %arg3[%c0_66, %c0_67, %c960] : memref<8x2x1024xf32, #tpu.memory_space<vmem>>, vector<8x2x32xf32>
    tpu.vector_store %arg3[%c0_66, %c0_67, %c960], %126 {strides = array<i32>} : memref<8x2x1024xf32, #tpu.memory_space<vmem>>, vector<8x2x32xf32>,
    %128 = vector.extract_strided_slice %0 {offsets = [0, 0, 31], sizes = [8, 2, 1], strides = [1, 1, 1]} : vector<8x2x32xf32> to vector<8x2x1xf32>
    %129 = vector.broadcast %128 : vector<8x2x1xf32> to vector<8x2x32xf32>
    %130 = arith.addf %129, %3 : vector<8x2x32xf32>
    %c0_68 = arith.constant 0 : index
    %c0_69 = arith.constant 0 : index
    %c992 = arith.constant 992 : index
    %131 = vector.load %arg3[%c0_68, %c0_69, %c992] : memref<8x2x1024xf32, #tpu.memory_space<vmem>>, vector<8x2x32xf32>
    tpu.vector_store %arg3[%c0_68, %c0_69, %c992], %130 {strides = array<i32>} : memref<8x2x1024xf32, #tpu.memory_space<vmem>>, vector<8x2x32xf32>,
    return
  }
  func.func @transform_0(%arg0: i32) -> (i32, i32, i32) {
    %c0_i32 = arith.constant 0 : i32
    %c0_i32_0 = arith.constant 0 : i32
    %c0_i32_1 = arith.constant 0 : i32
    return %arg0, %c0_i32, %c0_i32_0 : i32, i32, i32
  }
  func.func @transform_1(%arg0: i32) -> (i32, i32, i32) {
    %c0_i32 = arith.constant 0 : i32
    %c0_i32_0 = arith.constant 0 : i32
    %c0_i32_1 = arith.constant 0 : i32
    return %arg0, %c0_i32, %c0_i32_0 : i32, i32, i32
  }
  func.func @transform_2(%arg0: i32) -> (i32, i32, i32) {
    %c0_i32 = arith.constant 0 : i32
    %c0_i32_0 = arith.constant 0 : i32
    %c0_i32_1 = arith.constant 0 : i32
    return %arg0, %c0_i32, %c0_i32_0 : i32, i32, i32
  }
}

</mosaic_0001>

<llo_original>
// kernel: positional_encoding_forward.1
$region0: #{positional_encoding_forward.1}
  #allocation0 [shape = 'u32[]', space=smem, size = 0x4, offset = 0x4, fixed_abs, tag = 'smem constant byte address 0x4 - core index']
  #allocation1 [shape = 'u32[144,128]{1,0:T(1,128)}', space=vmem, size = 0x12000, scoped, tag = 'internal scratch']
  %s0 = inlined_call_operand.vmem [shape: f32[8,2,32], index: 0, kind: input, shape index: {}]
  %s1 = inlined_call_operand.vmem [shape: f32[8,1,32], index: 1, kind: input, shape index: {}]
  %s2 = inlined_call_operand.hbm [shape: f32[8,2,1024], index: 2, kind: output, shape index: {}]
  %s3 = sld [smem:[#allocation0]]
  $region18: #{positional_encoding_forward.1} parent=0
    _
  %s5 = ssub.s32 1, %s3
  %s6 = scalar_select 0, %s5, %s3
  $region1: #{positional_encoding_forward.1} parent=0
    #allocation2 [shape = 'u8[65536]{0}', space=vmem, size = 0x10000, scoped, tag = 'output window, operand 0, single buffered']
    #allocation3 [shape = 's32[1]{0}', space=sflag, size = 0x4, scoped, tag = 'scoped memory for positional_encoding_forward.1']
    %7 = vsyncpa [#allocation3], 0
    // Predicated region
    $region2: #{positional_encoding_forward.1} parent=1 // pred_check
      _
    $region3: #{positional_encoding_forward.1} parent=1 // pred_check_branch
      %9 = sbr.rel (0) target = $region5
    $region4: #{positional_encoding_forward.1} parent=1 // pred_region
      _
    $region5: #{positional_encoding_forward.1} parent=1 // pred_fallthru
      _
    // Predicated region
    $region6: #{positional_encoding_forward.1} parent=1 // pred_check
      _
    $region7: #{positional_encoding_forward.1} parent=1 // pred_check_branch
      %11 = sbr.rel (0) target = $region9
    $region8: #{positional_encoding_forward.1} parent=1 // pred_region
      _
    $region9: #{positional_encoding_forward.1} parent=1 // pred_fallthru
      _
    %v12 = vld [vmem:[%s0] sm:$0x3]
    %v13 = vld [vmem:[%s0 + $0x2] sm:$0x3]
    %v14 = vld [vmem:[%s0 + $0x4] sm:$0x3]
    %v15 = vld [vmem:[%s0 + $0x6] sm:$0x3]
    %v16 = vld [vmem:[%s0 + $0x8] sm:$0x3]
    %v17 = vld [vmem:[%s0 + $0xa] sm:$0x3]
    %v18 = vld [vmem:[%s0 + $0xc] sm:$0x3]
    %v19 = vld [vmem:[%s0 + $0xe] sm:$0x3]
    %v20 = vld [vmem:[%s1] sm:$0x1]
    %v21 = vld [vmem:[%s1 + $0x1] sm:$0x1]
    %v22 = vld [vmem:[%s1 + $0x2] sm:$0x1]
    %v23 = vld [vmem:[%s1 + $0x3] sm:$0x1]
    %v24 = vld [vmem:[%s1 + $0x4] sm:$0x1]
    %v25 = vld [vmem:[%s1 + $0x5] sm:$0x1]
    %v26 = vld [vmem:[%s1 + $0x6] sm:$0x1]
    %v27 = vld [vmem:[%s1 + $0x7] sm:$0x1]
    %v36 = vlaneseq
    %v37 = vshrl.u32 %v36, 7
    %v38 = vsub.s32 0, %v37
    %v39 = vrot.slane %v20, %v38
    %v40 = vlaneseq
    %v41 = vshrl.u32 %v40, 7
    %v42 = vsub.s32 0, %v41
    %v43 = vrot.slane %v21, %v42
    %v44 = vlaneseq
    %v45 = vshrl.u32 %v44, 7
    %v46 = vsub.s32 0, %v45
    %v47 = vrot.slane %v22, %v46
    %v48 = vlaneseq
    %v49 = vshrl.u32 %v48, 7
    %v50 = vsub.s32 0, %v49
    %v51 = vrot.slane %v23, %v50
    %v52 = vlaneseq
    %v53 = vshrl.u32 %v52, 7
    %v54 = vsub.s32 0, %v53
    %v55 = vrot.slane %v24, %v54
    %v56 = vlaneseq
    %v57 = vshrl.u32 %v56, 7
    %v58 = vsub.s32 0, %v57
    %v59 = vrot.slane %v25, %v58
    %v60 = vlaneseq
    %v61 = vshrl.u32 %v60, 7
    %v62 = vsub.s32 0, %v61
    %v63 = vrot.slane %v26, %v62
    %v64 = vlaneseq
    %v65 = vshrl.u32 %v64, 7
    %v66 = vsub.s32 0, %v65
    %v67 = vrot.slane %v27, %v66
    %77 = vset.pattern.permute.xlu0 0
    %78 = vperm.xlu0 %77, %v12
    %v79 = vpop.permute.xlu0 %78
    %82 = vset.pattern.permute.xlu0 0
    %83 = vperm.xlu0 %82, %v13
    %v84 = vpop.permute.xlu0 %83
    %87 = vset.pattern.permute.xlu0 0
    %88 = vperm.xlu0 %87, %v14
    %v89 = vpop.permute.xlu0 %88
    %92 = vset.pattern.permute.xlu0 0
    %93 = vperm.xlu0 %92, %v15
    %v94 = vpop.permute.xlu0 %93
    %97 = vset.pattern.permute.xlu0 0
    %98 = vperm.xlu0 %97, %v16
    %v99 = vpop.permute.xlu0 %98
    %102 = vset.pattern.permute.xlu0 0
    %103 = vperm.xlu0 %102, %v17
    %v104 = vpop.permute.xlu0 %103
    %107 = vset.pattern.permute.xlu0 0
    %108 = vperm.xlu0 %107, %v18
    %v109 = vpop.permute.xlu0 %108
    %112 = vset.pattern.permute.xlu0 0
    %113 = vperm.xlu0 %112, %v19
    %v114 = vpop.permute.xlu0 %113
    %v116 = vadd.f32 %v79, %v39
    %v117 = vadd.f32 %v84, %v43
    %v118 = vadd.f32 %v89, %v47
    %v119 = vadd.f32 %v94, %v51
    %v120 = vadd.f32 %v99, %v55
    %v121 = vadd.f32 %v104, %v59
    %v122 = vadd.f32 %v109, %v63
    %v123 = vadd.f32 %v114, %v67
    %vm124 = vcmask 254976
    %125 = vst.msk [vmem:[#allocation2] sm:$0x3] %vm124, %v116
    %126 = vst.msk [vmem:[#allocation2 + $0x10] sm:$0x3] %vm124, %v117
    %127 = vst.msk [vmem:[#allocation2 + $0x20] sm:$0x3] %vm124, %v118
    %128 = vst.msk [vmem:[#allocation2 + $0x30] sm:$0x3] %vm124, %v119
    %129 = vst.msk [vmem:[#allocation2 + $0x40] sm:$0x3] %vm124, %v120
    %130 = vst.msk [vmem:[#allocation2 + $0x50] sm:$0x3] %vm124, %v121
    %131 = vst.msk [vmem:[#allocation2 + $0x60] sm:$0x3] %vm124, %v122
    %132 = vst.msk [vmem:[#allocation2 + $0x70] sm:$0x3] %vm124, %v123
    %133 = vset.pattern.permute.xlu0 1
    %134 = vperm.xlu0 %133, %v12
    %v135 = vpop.permute.xlu0 %134
    %137 = vset.pattern.permute.xlu0 1
    %138 = vperm.xlu0 %137, %v13
    %v139 = vpop.permute.xlu0 %138
    %141 = vset.pattern.permute.xlu0 1
    %142 = vperm.xlu0 %141, %v14
    %v143 = vpop.permute.xlu0 %142
    %145 = vset.pattern.permute.xlu0 1
    %146 = vperm.xlu0 %145, %v15
    %v147 = vpop.permute.xlu0 %146
    %149 = vset.pattern.permute.xlu0 1
    %150 = vperm.xlu0 %149, %v16
    %v151 = vpop.permute.xlu0 %150
    %153 = vset.pattern.permute.xlu0 1
    %154 = vperm.xlu0 %153, %v17
    %v155 = vpop.permute.xlu0 %154
    %157 = vset.pattern.permute.xlu0 1
    %158 = vperm.xlu0 %157, %v18
    %v159 = vpop.permute.xlu0 %158
    %161 = vset.pattern.permute.xlu0 1
    %162 = vperm.xlu0 %161, %v19
    %v163 = vpop.permute.xlu0 %162
    %v165 = vadd.f32 %v135, %v39
    %v166 = vadd.f32 %v139, %v43
    %v167 = vadd.f32 %v143, %v47
    %v168 = vadd.f32 %v147, %v51
    %v169 = vadd.f32 %v151, %v55
    %v170 = vadd.f32 %v155, %v59
    %v171 = vadd.f32 %v159, %v63
    %v172 = vadd.f32 %v163, %v67
    %v182 = vunpack.c.l.s4 1983009808
    %v183 = vunpack.c.0.s8 %v182
    %v184 = vlaneseq
    %v185 = vshrl.u32 %v184, 7
    %v186 = vsub.s32 %v183, %v185
    %v187 = vrot.slane %v165, %v186
    %v189 = vunpack.c.l.s4 1983009808
    %v190 = vunpack.c.0.s8 %v189
    %v191 = vlaneseq
    %v192 = vshrl.u32 %v191, 7
    %v193 = vsub.s32 %v190, %v192
    %v194 = vrot.slane %v166, %v193
    %v196 = vunpack.c.l.s4 1983009808
    %v197 = vunpack.c.0.s8 %v196
    %v198 = vlaneseq
    %v199 = vshrl.u32 %v198, 7
    %v200 = vsub.s32 %v197, %v199
    %v201 = vrot.slane %v167, %v200
    %v203 = vunpack.c.l.s4 1983009808
    %v204 = vunpack.c.0.s8 %v203
    %v205 = vlaneseq
    %v206 = vshrl.u32 %v205, 7
    %v207 = vsub.s32 %v204, %v206
    %v208 = vrot.slane %v168, %v207
    %v210 = vunpack.c.l.s4 1983009808
    %v211 = vunpack.c.0.s8 %v210
    %v212 = vlaneseq
    %v213 = vshrl.u32 %v212, 7
    %v214 = vsub.s32 %v211, %v213
    %v215 = vrot.slane %v169, %v214
    %v217 = vunpack.c.l.s4 1983009808
    %v218 = vunpack.c.0.s8 %v217
    %v219 = vlaneseq
    %v220 = vshrl.u32 %v219, 7
    %v221 = vsub.s32 %v218, %v220
    %v222 = vrot.slane %v170, %v221
    %v224 = vunpack.c.l.s4 1983009808
    %v225 = vunpack.c.0.s8 %v224
    %v226 = vlaneseq
    %v227 = vshrl.u32 %v226, 7
    %v228 = vsub.s32 %v225, %v227
    %v229 = vrot.slane %v171, %v228
    %v231 = vunpack.c.l.s4 1983009808
    %v232 = vunpack.c.0.s8 %v231
    %v233 = vlaneseq
    %v234 = vshrl.u32 %v233, 7
    %v235 = vsub.s32 %v232, %v234
    %v236 = vrot.slane %v172, %v235
    %237 = vrot.lane.b32.xlu0 %v187, 32
    %v238 = vpop.permute.xlu0 %237
    %239 = vrot.lane.b32.xlu0 %v194, 32
    %v240 = vpop.permute.xlu0 %239
    %241 = vrot.lane.b32.xlu0 %v201, 32
    %v242 = vpop.permute.xlu0 %241
    %243 = vrot.lane.b32.xlu0 %v208, 32
    %v244 = vpop.permute.xlu0 %243
    %245 = vrot.lane.b32.xlu0 %v215, 32
    %v246 = vpop.permute.xlu0 %245
    %247 = vrot.lane.b32.xlu0 %v222, 32
    %v248 = vpop.permute.xlu0 %247
    %249 = vrot.lane.b32.xlu0 %v229, 32
    %v250 = vpop.permute.xlu0 %249
    %251 = vrot.lane.b32.xlu0 %v236, 32
    %v252 = vpop.permute.xlu0 %251
    %vm261 = vcmask 517376
    %262 = vst.msk [vmem:[#allocation2] sm:$0x3] %vm261, %v238
    %263 = vst.msk [vmem:[#allocation2 + $0x10] sm:$0x3] %vm261, %v240
    %264 = vst.msk [vmem:[#allocation2 + $0x20] sm:$0x3] %vm261, %v242
    %265 = vst.msk [vmem:[#allocation2 + $0x30] sm:$0x3] %vm261, %v244
    %266 = vst.msk [vmem:[#allocation2 + $0x40] sm:$0x3] %vm261, %v246
    %267 = vst.msk [vmem:[#allocation2 + $0x50] sm:$0x3] %vm261, %v248
    %268 = vst.msk [vmem:[#allocation2 + $0x60] sm:$0x3] %vm261, %v250
    %269 = vst.msk [vmem:[#allocation2 + $0x70] sm:$0x3] %vm261, %v252
    %270 = vset.pattern.permute.xlu0 2
    %271 = vperm.xlu0 %270, %v12
    %v272 = vpop.permute.xlu0 %271
    %274 = vset.pattern.permute.xlu0 2
    %275 = vperm.xlu0 %274, %v13
    %v276 = vpop.permute.xlu0 %275
    %278 = vset.pattern.permute.xlu0 2
    %279 = vperm.xlu0 %278, %v14
    %v280 = vpop.permute.xlu0 %279
    %282 = vset.pattern.permute.xlu0 2
    %283 = vperm.xlu0 %282, %v15
    %v284 = vpop.permute.xlu0 %283
    %286 = vset.pattern.permute.xlu0 2
    %287 = vperm.xlu0 %286, %v16
    %v288 = vpop.permute.xlu0 %287
    %290 = vset.pattern.permute.xlu0 2
    %291 = vperm.xlu0 %290, %v17
    %v292 = vpop.permute.xlu0 %291
    %294 = vset.pattern.permute.xlu0 2
    %295 = vperm.xlu0 %294, %v18
    %v296 = vpop.permute.xlu0 %295
    %298 = vset.pattern.permute.xlu0 2
    %299 = vperm.xlu0 %298, %v19
    %v300 = vpop.permute.xlu0 %299
    %v302 = vadd.f32 %v272, %v39
    %v303 = vadd.f32 %v276, %v43
    %v304 = vadd.f32 %v280, %v47
    %v305 = vadd.f32 %v284, %v51
    %v306 = vadd.f32 %v288, %v55
    %v307 = vadd.f32 %v292, %v59
    %v308 = vadd.f32 %v296, %v63
    %v309 = vadd.f32 %v300, %v67
    %v319 = vunpack.c.l.s4 1983009808
    %v320 = vunpack.c.0.s8 %v319
    %v321 = vlaneseq
    %v322 = vshrl.u32 %v321, 7
    %v323 = vsub.s32 %v320, %v322
    %v324 = vrot.slane %v302, %v323
    %v326 = vunpack.c.l.s4 1983009808
    %v327 = vunpack.c.0.s8 %v326
    %v328 = vlaneseq
    %v329 = vshrl.u32 %v328, 7
    %v330 = vsub.s32 %v327, %v329
    %v331 = vrot.slane %v303, %v330
    %v333 = vunpack.c.l.s4 1983009808
    %v334 = vunpack.c.0.s8 %v333
    %v335 = vlaneseq
    %v336 = vshrl.u32 %v335, 7
    %v337 = vsub.s32 %v334, %v336
    %v338 = vrot.slane %v304, %v337
    %v340 = vunpack.c.l.s4 1983009808
    %v341 = vunpack.c.0.s8 %v340
    %v342 = vlaneseq
    %v343 = vshrl.u32 %v342, 7
    %v344 = vsub.s32 %v341, %v343
    %v345 = vrot.slane %v305, %v344
    %v347 = vunpack.c.l.s4 1983009808
    %v348 = vunpack.c.0.s8 %v347
    %v349 = vlaneseq
    %v350 = vshrl.u32 %v349, 7
    %v351 = vsub.s32 %v348, %v350
    %v352 = vrot.slane %v306, %v351
    %v354 = vunpack.c.l.s4 1983009808
    %v355 = vunpack.c.0.s8 %v354
    %v356 = vlaneseq
    %v357 = vshrl.u32 %v356, 7
    %v358 = vsub.s32 %v355, %v357
    %v359 = vrot.slane %v307, %v358
    %v361 = vunpack.c.l.s4 1983009808
    %v362 = vunpack.c.0.s8 %v361
    %v363 = vlaneseq
    %v364 = vshrl.u32 %v363, 7
    %v365 = vsub.s32 %v362, %v364
    %v366 = vrot.slane %v308, %v365
    %v368 = vunpack.c.l.s4 1983009808
    %v369 = vunpack.c.0.s8 %v368
    %v370 = vlaneseq
    %v371 = vshrl.u32 %v370, 7
    %v372 = vsub.s32 %v369, %v371
    %v373 = vrot.slane %v309, %v372
    %374 = vrot.lane.b32.xlu0 %v324, 64
    %v375 = vpop.permute.xlu0 %374
    %376 = vrot.lane.b32.xlu0 %v331, 64
    %v377 = vpop.permute.xlu0 %376
    %378 = vrot.lane.b32.xlu0 %v338, 64
    %v379 = vpop.permute.xlu0 %378
    %380 = vrot.lane.b32.xlu0 %v345, 64
    %v381 = vpop.permute.xlu0 %380
    %382 = vrot.lane.b32.xlu0 %v352, 64
    %v383 = vpop.permute.xlu0 %382
    %384 = vrot.lane.b32.xlu0 %v359, 64
    %v385 = vpop.permute.xlu0 %384
    %386 = vrot.lane.b32.xlu0 %v366, 64
    %v387 = vpop.permute.xlu0 %386
    %388 = vrot.lane.b32.xlu0 %v373, 64
    %v389 = vpop.permute.xlu0 %388
    %vm398 = vcmask 779776
    %399 = vst.msk [vmem:[#allocation2] sm:$0x3] %vm398, %v375
    %400 = vst.msk [vmem:[#allocation2 + $0x10] sm:$0x3] %vm398, %v377
    %401 = vst.msk [vmem:[#allocation2 + $0x20] sm:$0x3] %vm398, %v379
    %402 = vst.msk [vmem:[#allocation2 + $0x30] sm:$0x3] %vm398, %v381
    %403 = vst.msk [vmem:[#allocation2 + $0x40] sm:$0x3] %vm398, %v383
    %404 = vst.msk [vmem:[#allocation2 + $0x50] sm:$0x3] %vm398, %v385
    %405 = vst.msk [vmem:[#allocation2 + $0x60] sm:$0x3] %vm398, %v387
    %406 = vst.msk [vmem:[#allocation2 + $0x70] sm:$0x3] %vm398, %v389
    %407 = vset.pattern.permute.xlu0 3
    %408 = vperm.xlu0 %407, %v12
    %v409 = vpop.permute.xlu0 %408
    %411 = vset.pattern.permute.xlu0 3
    %412 = vperm.xlu0 %411, %v13
    %v413 = vpop.permute.xlu0 %412
    %415 = vset.pattern.permute.xlu0 3
    %416 = vperm.xlu0 %415, %v14
    %v417 = vpop.permute.xlu0 %416
    %419 = vset.pattern.permute.xlu0 3
    %420 = vperm.xlu0 %419, %v15
    %v421 = vpop.permute.xlu0 %420
    %423 = vset.pattern.permute.xlu0 3
    %424 = vperm.xlu0 %423, %v16
    %v425 = vpop.permute.xlu0 %424
    %427 = vset.pattern.permute.xlu0 3
    %428 = vperm.xlu0 %427, %v17
    %v429 = vpop.permute.xlu0 %428
    %431 = vset.pattern.permute.xlu0 3
    %432 = vperm.xlu0 %431, %v18
    %v433 = vpop.permute.xlu0 %432
    %435 = vset.pattern.permute.xlu0 3
    %436 = vperm.xlu0 %435, %v19
    %v437 = vpop.permute.xlu0 %436
    %v439 = vadd.f32 %v409, %v39
    %v440 = vadd.f32 %v413, %v43
    %v441 = vadd.f32 %v417, %v47
    %v442 = vadd.f32 %v421, %v51
    %v443 = vadd.f32 %v425, %v55
    %v444 = vadd.f32 %v429, %v59
    %v445 = vadd.f32 %v433, %v63
    %v446 = vadd.f32 %v437, %v67
    %v456 = vunpack.c.l.s4 1983009808
    %v457 = vunpack.c.0.s8 %v456
    %v458 = vlaneseq
    %v459 = vshrl.u32 %v458, 7
    %v460 = vsub.s32 %v457, %v459
    %v461 = vrot.slane %v439, %v460
    %v463 = vunpack.c.l.s4 1983009808
    %v464 = vunpack.c.0.s8 %v463
    %v465 = vlaneseq
    %v466 = vshrl.u32 %v465, 7
    %v467 = vsub.s32 %v464, %v466
    %v468 = vrot.slane %v440, %v467
    %v470 = vunpack.c.l.s4 1983009808
    %v471 = vunpack.c.0.s8 %v470
    %v472 = vlaneseq
    %v473 = vshrl.u32 %v472, 7
    %v474 = vsub.s32 %v471, %v473
    %v475 = vrot.slane %v441, %v474
    %v477 = vunpack.c.l.s4 1983009808
    %v478 = vunpack.c.0.s8 %v477
    %v479 = vlaneseq
    %v480 = vshrl.u32 %v479, 7
    %v481 = vsub.s32 %v478, %v480
    %v482 = vrot.slane %v442, %v481
    %v484 = vunpack.c.l.s4 1983009808
    %v485 = vunpack.c.0.s8 %v484
    %v486 = vlaneseq
    %v487 = vshrl.u32 %v486, 7
    %v488 = vsub.s32 %v485, %v487
    %v489 = vrot.slane %v443, %v488
    %v491 = vunpack.c.l.s4 1983009808
    %v492 = vunpack.c.0.s8 %v491
    %v493 = vlaneseq
    %v494 = vshrl.u32 %v493, 7
    %v495 = vsub.s32 %v492, %v494
    %v496 = vrot.slane %v444, %v495
    %v498 = vunpack.c.l.s4 1983009808
    %v499 = vunpack.c.0.s8 %v498
    %v500 = vlaneseq
    %v501 = vshrl.u32 %v500, 7
    %v502 = vsub.s32 %v499, %v501
    %v503 = vrot.slane %v445, %v502
    %v505 = vunpack.c.l.s4 1983009808
    %v506 = vunpack.c.0.s8 %v505
    %v507 = vlaneseq
    %v508 = vshrl.u32 %v507, 7
    %v509 = vsub.s32 %v506, %v508
    %v510 = vrot.slane %v446, %v509
    %511 = vrot.lane.b32.xlu0 %v461, 96
    %v512 = vpop.permute.xlu0 %511
    %513 = vrot.lane.b32.xlu0 %v468, 96
    %v514 = vpop.permute.xlu0 %513
    %515 = vrot.lane.b32.xlu0 %v475, 96
    %v516 = vpop.permute.xlu0 %515
    %517 = vrot.lane.b32.xlu0 %v482, 96
    %v518 = vpop.permute.xlu0 %517
    %519 = vrot.lane.b32.xlu0 %v489, 96
    %v520 = vpop.permute.xlu0 %519
    %521 = vrot.lane.b32.xlu0 %v496, 96
    %v522 = vpop.permute.xlu0 %521
    %523 = vrot.lane.b32.xlu0 %v503, 96
    %v524 = vpop.permute.xlu0 %523
    %525 = vrot.lane.b32.xlu0 %v510, 96
    %v526 = vpop.permute.xlu0 %525
    %vm535 = vcmask 1042176
    %536 = vst.msk [vmem:[#allocation2] sm:$0x3] %vm535, %v512
    %537 = vst.msk [vmem:[#allocation2 + $0x10] sm:$0x3] %vm535, %v514
    %538 = vst.msk [vmem:[#allocation2 + $0x20] sm:$0x3] %vm535, %v516
    %539 = vst.msk [vmem:[#allocation2 + $0x30] sm:$0x3] %vm535, %v518
    %540 = vst.msk [vmem:[#allocation2 + $0x40] sm:$0x3] %vm535, %v520
    %541 = vst.msk [vmem:[#allocation2 + $0x50] sm:$0x3] %vm535, %v522
    %542 = vst.msk [vmem:[#allocation2 + $0x60] sm:$0x3] %vm535, %v524
    %543 = vst.msk [vmem:[#allocation2 + $0x70] sm:$0x3] %vm535, %v526
    %544 = vset.pattern.permute.xlu0 4
    %545 = vperm.xlu0 %544, %v12
    %v546 = vpop.permute.xlu0 %545
    %548 = vset.pattern.permute.xlu0 4
    %549 = vperm.xlu0 %548, %v13
    %v550 = vpop.permute.xlu0 %549
    %552 = vset.pattern.permute.xlu0 4
    %553 = vperm.xlu0 %552, %v14
    %v554 = vpop.permute.xlu0 %553
    %556 = vset.pattern.permute.xlu0 4
    %557 = vperm.xlu0 %556, %v15
    %v558 = vpop.permute.xlu0 %557
    %560 = vset.pattern.permute.xlu0 4
    %561 = vperm.xlu0 %560, %v16
    %v562 = vpop.permute.xlu0 %561
    %564 = vset.pattern.permute.xlu0 4
    %565 = vperm.xlu0 %564, %v17
    %v566 = vpop.permute.xlu0 %565
    %568 = vset.pattern.permute.xlu0 4
    %569 = vperm.xlu0 %568, %v18
    %v570 = vpop.permute.xlu0 %569
    %572 = vset.pattern.permute.xlu0 4
    %573 = vperm.xlu0 %572, %v19
    %v574 = vpop.permute.xlu0 %573
    %v576 = vadd.f32 %v546, %v39
    %v577 = vadd.f32 %v550, %v43
    %v578 = vadd.f32 %v554, %v47
    %v579 = vadd.f32 %v558, %v51
    %v580 = vadd.f32 %v562, %v55
    %v581 = vadd.f32 %v566, %v59
    %v582 = vadd.f32 %v570, %v63
    %v583 = vadd.f32 %v574, %v67
    %584 = vst.msk [vmem:[#allocation2 + $0x2] sm:$0x3] %vm124, %v576
    %585 = vst.msk [vmem:[#allocation2 + $0x12] sm:$0x3] %vm124, %v577
    %586 = vst.msk [vmem:[#allocation2 + $0x22] sm:$0x3] %vm124, %v578
    %587 = vst.msk [vmem:[#allocation2 + $0x32] sm:$0x3] %vm124, %v579
    %588 = vst.msk [vmem:[#allocation2 + $0x42] sm:$0x3] %vm124, %v580
    %589 = vst.msk [vmem:[#allocation2 + $0x52] sm:$0x3] %vm124, %v581
    %590 = vst.msk [vmem:[#allocation2 + $0x62] sm:$0x3] %vm124, %v582
    %591 = vst.msk [vmem:[#allocation2 + $0x72] sm:$0x3] %vm124, %v583
    %592 = vset.pattern.permute.xlu0 5
    %593 = vperm.xlu0 %592, %v12
    %v594 = vpop.permute.xlu0 %593
    %596 = vset.pattern.permute.xlu0 5
    %597 = vperm.xlu0 %596, %v13
    %v598 = vpop.permute.xlu0 %597
    %600 = vset.pattern.permute.xlu0 5
    %601 = vperm.xlu0 %600, %v14
    %v602 = vpop.permute.xlu0 %601
    %604 = vset.pattern.permute.xlu0 5
    %605 = vperm.xlu0 %604, %v15
    %v606 = vpop.permute.xlu0 %605
    %608 = vset.pattern.permute.xlu0 5
    %609 = vperm.xlu0 %608, %v16
    %v610 = vpop.permute.xlu0 %609
    %612 = vset.pattern.permute.xlu0 5
    %613 = vperm.xlu0 %612, %v17
    %v614 = vpop.permute.xlu0 %613
    %616 = vset.pattern.permute.xlu0 5
    %617 = vperm.xlu0 %616, %v18
    %v618 = vpop.permute.xlu0 %617
    %620 = vset.pattern.permute.xlu0 5
    %621 = vperm.xlu0 %620, %v19
    %v622 = vpop.permute.xlu0 %621
    %v624 = vadd.f32 %v594, %v39
    %v625 = vadd.f32 %v598, %v43
    %v626 = vadd.f32 %v602, %v47
    %v627 = vadd.f32 %v606, %v51
    %v628 = vadd.f32 %v610, %v55
    %v629 = vadd.f32 %v614, %v59
    %v630 = vadd.f32 %v618, %v63
    %v631 = vadd.f32 %v622, %v67
    %v641 = vunpack.c.l.s4 1983009808
    %v642 = vunpack.c.0.s8 %v641
    %v643 = vlaneseq
    %v644 = vshrl.u32 %v643, 7
    %v645 = vsub.s32 %v642, %v644
    %v646 = vrot.slane %v624, %v645
    %v648 = vunpack.c.l.s4 1983009808
    %v649 = vunpack.c.0.s8 %v648
    %v650 = vlaneseq
    %v651 = vshrl.u32 %v650, 7
    %v652 = vsub.s32 %v649, %v651
    %v653 = vrot.slane %v625, %v652
    %v655 = vunpack.c.l.s4 1983009808
    %v656 = vunpack.c.0.s8 %v655
    %v657 = vlaneseq
    %v658 = vshrl.u32 %v657, 7
    %v659 = vsub.s32 %v656, %v658
    %v660 = vrot.slane %v626, %v659
    %v662 = vunpack.c.l.s4 1983009808
    %v663 = vunpack.c.0.s8 %v662
    %v664 = vlaneseq
    %v665 = vshrl.u32 %v664, 7
    %v666 = vsub.s32 %v663, %v665
    %v667 = vrot.slane %v627, %v666
    %v669 = vunpack.c.l.s4 1983009808
    %v670 = vunpack.c.0.s8 %v669
    %v671 = vlaneseq
    %v672 = vshrl.u32 %v671, 7
    %v673 = vsub.s32 %v670, %v672
    %v674 = vrot.slane %v628, %v673
    %v676 = vunpack.c.l.s4 1983009808
    %v677 = vunpack.c.0.s8 %v676
    %v678 = vlaneseq
    %v679 = vshrl.u32 %v678, 7
    %v680 = vsub.s32 %v677, %v679
    %v681 = vrot.slane %v629, %v680
    %v683 = vunpack.c.l.s4 1983009808
    %v684 = vunpack.c.0.s8 %v683
    %v685 = vlaneseq
    %v686 = vshrl.u32 %v685, 7
    %v687 = vsub.s32 %v684, %v686
    %v688 = vrot.slane %v630, %v687
    %v690 = vunpack.c.l.s4 1983009808
    %v691 = vunpack.c.0.s8 %v690
    %v692 = vlaneseq
    %v693 = vshrl.u32 %v692, 7
    %v694 = vsub.s32 %v691, %v693
    %v695 = vrot.slane %v631, %v694
    %696 = vrot.lane.b32.xlu0 %v646, 32
    %v697 = vpop.permute.xlu0 %696
    %698 = vrot.lane.b32.xlu0 %v653, 32
    %v699 = vpop.permute.xlu0 %698
    %700 = vrot.lane.b32.xlu0 %v660, 32
    %v701 = vpop.permute.xlu0 %700
    %702 = vrot.lane.b32.xlu0 %v667, 32
    %v703 = vpop.permute.xlu0 %702
    %704 = vrot.lane.b32.xlu0 %v674, 32
    %v705 = vpop.permute.xlu0 %704
    %706 = vrot.lane.b32.xlu0 %v681, 32
    %v707 = vpop.permute.xlu0 %706
    %708 = vrot.lane.b32.xlu0 %v688, 32
    %v709 = vpop.permute.xlu0 %708
    %710 = vrot.lane.b32.xlu0 %v695, 32
    %v711 = vpop.permute.xlu0 %710
    %720 = vst.msk [vmem:[#allocation2 + $0x2] sm:$0x3] %vm261, %v697
    %721 = vst.msk [vmem:[#allocation2 + $0x12] sm:$0x3] %vm261, %v699
    %722 = vst.msk [vmem:[#allocation2 + $0x22] sm:$0x3] %vm261, %v701
    %723 = vst.msk [vmem:[#allocation2 + $0x32] sm:$0x3] %vm261, %v703
    %724 = vst.msk [vmem:[#allocation2 + $0x42] sm:$0x3] %vm261, %v705
    %725 = vst.msk [vmem:[#allocation2 + $0x52] sm:$0x3] %vm261, %v707
    %726 = vst.msk [vmem:[#allocation2 + $0x62] sm:$0x3] %vm261, %v709
    %727 = vst.msk [vmem:[#allocation2 + $0x72] sm:$0x3] %vm261, %v711
    %728 = vset.pattern.permute.xlu0 6
    %729 = vperm.xlu0 %728, %v12
    %v730 = vpop.permute.xlu0 %729
    %732 = vset.pattern.permute.xlu0 6
    %733 = vperm.xlu0 %732, %v13
    %v734 = vpop.permute.xlu0 %733
    %736 = vset.pattern.permute.xlu0 6
    %737 = vperm.xlu0 %736, %v14
    %v738 = vpop.permute.xlu0 %737
    %740 = vset.pattern.permute.xlu0 6
    %741 = vperm.xlu0 %740, %v15
    %v742 = vpop.permute.xlu0 %741
    %744 = vset.pattern.permute.xlu0 6
    %745 = vperm.xlu0 %744, %v16
    %v746 = vpop.permute.xlu0 %745
    %748 = vset.pattern.permute.xlu0 6
    %749 = vperm.xlu0 %748, %v17
    %v750 = vpop.permute.xlu0 %749
    %752 = vset.pattern.permute.xlu0 6
    %753 = vperm.xlu0 %752, %v18
    %v754 = vpop.permute.xlu0 %753
    %756 = vset.pattern.permute.xlu0 6
    %757 = vperm.xlu0 %756, %v19
    %v758 = vpop.permute.xlu0 %757
    %v760 = vadd.f32 %v730, %v39
    %v761 = vadd.f32 %v734, %v43
    %v762 = vadd.f32 %v738, %v47
    %v763 = vadd.f32 %v742, %v51
    %v764 = vadd.f32 %v746, %v55
    %v765 = vadd.f32 %v750, %v59
    %v766 = vadd.f32 %v754, %v63
    %v767 = vadd.f32 %v758, %v67
    %v777 = vunpack.c.l.s4 1983009808
    %v778 = vunpack.c.0.s8 %v777
    %v779 = vlaneseq
    %v780 = vshrl.u32 %v779, 7
    %v781 = vsub.s32 %v778, %v780
    %v782 = vrot.slane %v760, %v781
    %v784 = vunpack.c.l.s4 1983009808
    %v785 = vunpack.c.0.s8 %v784
    %v786 = vlaneseq
    %v787 = vshrl.u32 %v786, 7
    %v788 = vsub.s32 %v785, %v787
    %v789 = vrot.slane %v761, %v788
    %v791 = vunpack.c.l.s4 1983009808
    %v792 = vunpack.c.0.s8 %v791
    %v793 = vlaneseq
    %v794 = vshrl.u32 %v793, 7
    %v795 = vsub.s32 %v792, %v794
    %v796 = vrot.slane %v762, %v795
    %v798 = vunpack.c.l.s4 1983009808
    %v799 = vunpack.c.0.s8 %v798
    %v800 = vlaneseq
    %v801 = vshrl.u32 %v800, 7
    %v802 = vsub.s32 %v799, %v801
    %v803 = vrot.slane %v763, %v802
    %v805 = vunpack.c.l.s4 1983009808
    %v806 = vunpack.c.0.s8 %v805
    %v807 = vlaneseq
    %v808 = vshrl.u32 %v807, 7
    %v809 = vsub.s32 %v806, %v808
    %v810 = vrot.slane %v764, %v809
    %v812 = vunpack.c.l.s4 1983009808
    %v813 = vunpack.c.0.s8 %v812
    %v814 = vlaneseq
    %v815 = vshrl.u32 %v814, 7
    %v816 = vsub.s32 %v813, %v815
    %v817 = vrot.slane %v765, %v816
    %v819 = vunpack.c.l.s4 1983009808
    %v820 = vunpack.c.0.s8 %v819
    %v821 = vlaneseq
    %v822 = vshrl.u32 %v821, 7
    %v823 = vsub.s32 %v820, %v822
    %v824 = vrot.slane %v766, %v823
    %v826 = vunpack.c.l.s4 1983009808
    %v827 = vunpack.c.0.s8 %v826
    %v828 = vlaneseq
    %v829 = vshrl.u32 %v828, 7
    %v830 = vsub.s32 %v827, %v829
    %v831 = vrot.slane %v767, %v830
    %832 = vrot.lane.b32.xlu0 %v782, 64
    %v833 = vpop.permute.xlu0 %832
    %834 = vrot.lane.b32.xlu0 %v789, 64
    %v835 = vpop.permute.xlu0 %834
    %836 = vrot.lane.b32.xlu0 %v796, 64
    %v837 = vpop.permute.xlu0 %836
    %838 = vrot.lane.b32.xlu0 %v803, 64
    %v839 = vpop.permute.xlu0 %838
    %840 = vrot.lane.b32.xlu0 %v810, 64
    %v841 = vpop.permute.xlu0 %840
    %842 = vrot.lane.b32.xlu0 %v817, 64
    %v843 = vpop.permute.xlu0 %842
    %844 = vrot.lane.b32.xlu0 %v824, 64
    %v845 = vpop.permute.xlu0 %844
    %846 = vrot.lane.b32.xlu0 %v831, 64
    %v847 = vpop.permute.xlu0 %846
    %856 = vst.msk [vmem:[#allocation2 + $0x2] sm:$0x3] %vm398, %v833
    %857 = vst.msk [vmem:[#allocation2 + $0x12] sm:$0x3] %vm398, %v835
    %858 = vst.msk [vmem:[#allocation2 + $0x22] sm:$0x3] %vm398, %v837
    %859 = vst.msk [vmem:[#allocation2 + $0x32] sm:$0x3] %vm398, %v839
    %860 = vst.msk [vmem:[#allocation2 + $0x42] sm:$0x3] %vm398, %v841
    %861 = vst.msk [vmem:[#allocation2 + $0x52] sm:$0x3] %vm398, %v843
    %862 = vst.msk [vmem:[#allocation2 + $0x62] sm:$0x3] %vm398, %v845
    %863 = vst.msk [vmem:[#allocation2 + $0x72] sm:$0x3] %vm398, %v847
    %864 = vset.pattern.permute.xlu0 7
    %865 = vperm.xlu0 %864, %v12
    %v866 = vpop.permute.xlu0 %865
    %868 = vset.pattern.permute.xlu0 7
    %869 = vperm.xlu0 %868, %v13
    %v870 = vpop.permute.xlu0 %869
    %872 = vset.pattern.permute.xlu0 7
    %873 = vperm.xlu0 %872, %v14
    %v874 = vpop.permute.xlu0 %873
    %876 = vset.pattern.permute.xlu0 7
    %877 = vperm.xlu0 %876, %v15
    %v878 = vpop.permute.xlu0 %877
    %880 = vset.pattern.permute.xlu0 7
    %881 = vperm.xlu0 %880, %v16
    %v882 = vpop.permute.xlu0 %881
    %884 = vset.pattern.permute.xlu0 7
    %885 = vperm.xlu0 %884, %v17
    %v886 = vpop.permute.xlu0 %885
    %888 = vset.pattern.permute.xlu0 7
    %889 = vperm.xlu0 %888, %v18
    %v890 = vpop.permute.xlu0 %889
    %892 = vset.pattern.permute.xlu0 7
    %893 = vperm.xlu0 %892, %v19
    %v894 = vpop.permute.xlu0 %893
    %v896 = vadd.f32 %v866, %v39
    %v897 = vadd.f32 %v870, %v43
    %v898 = vadd.f32 %v874, %v47
    %v899 = vadd.f32 %v878, %v51
    %v900 = vadd.f32 %v882, %v55
    %v901 = vadd.f32 %v886, %v59
    %v902 = vadd.f32 %v890, %v63
    %v903 = vadd.f32 %v894, %v67
    %v913 = vunpack.c.l.s4 1983009808
    %v914 = vunpack.c.0.s8 %v913
    %v915 = vlaneseq
    %v916 = vshrl.u32 %v915, 7
    %v917 = vsub.s32 %v914, %v916
    %v918 = vrot.slane %v896, %v917
    %v920 = vunpack.c.l.s4 1983009808
    %v921 = vunpack.c.0.s8 %v920
    %v922 = vlaneseq
    %v923 = vshrl.u32 %v922, 7
    %v924 = vsub.s32 %v921, %v923
    %v925 = vrot.slane %v897, %v924
    %v927 = vunpack.c.l.s4 1983009808
    %v928 = vunpack.c.0.s8 %v927
    %v929 = vlaneseq
    %v930 = vshrl.u32 %v929, 7
    %v931 = vsub.s32 %v928, %v930
    %v932 = vrot.slane %v898, %v931
    %v934 = vunpack.c.l.s4 1983009808
    %v935 = vunpack.c.0.s8 %v934
    %v936 = vlaneseq
    %v937 = vshrl.u32 %v936, 7
    %v938 = vsub.s32 %v935, %v937
    %v939 = vrot.slane %v899, %v938
    %v941 = vunpack.c.l.s4 1983009808
    %v942 = vunpack.c.0.s8 %v941
    %v943 = vlaneseq
    %v944 = vshrl.u32 %v943, 7
    %v945 = vsub.s32 %v942, %v944
    %v946 = vrot.slane %v900, %v945
    %v948 = vunpack.c.l.s4 1983009808
    %v949 = vunpack.c.0.s8 %v948
    %v950 = vlaneseq
    %v951 = vshrl.u32 %v950, 7
    %v952 = vsub.s32 %v949, %v951
    %v953 = vrot.slane %v901, %v952
    %v955 = vunpack.c.l.s4 1983009808
    %v956 = vunpack.c.0.s8 %v955
    %v957 = vlaneseq
    %v958 = vshrl.u32 %v957, 7
    %v959 = vsub.s32 %v956, %v958
    %v960 = vrot.slane %v902, %v959
    %v962 = vunpack.c.l.s4 1983009808
    %v963 = vunpack.c.0.s8 %v962
    %v964 = vlaneseq
    %v965 = vshrl.u32 %v964, 7
    %v966 = vsub.s32 %v963, %v965
    %v967 = vrot.slane %v903, %v966
    %968 = vrot.lane.b32.xlu0 %v918, 96
    %v969 = vpop.permute.xlu0 %968
    %970 = vrot.lane.b32.xlu0 %v925, 96
    %v971 = vpop.permute.xlu0 %970
    %972 = vrot.lane.b32.xlu0 %v932, 96
    %v973 = vpop.permute.xlu0 %972
    %974 = vrot.lane.b32.xlu0 %v939, 96
    %v975 = vpop.permute.xlu0 %974
    %976 = vrot.lane.b32.xlu0 %v946, 96
    %v977 = vpop.permute.xlu0 %976
    %978 = vrot.lane.b32.xlu0 %v953, 96
    %v979 = vpop.permute.xlu0 %978
    %980 = vrot.lane.b32.xlu0 %v960, 96
    %v981 = vpop.permute.xlu0 %980
    %982 = vrot.lane.b32.xlu0 %v967, 96
    %v983 = vpop.permute.xlu0 %982
    %992 = vst.msk [vmem:[#allocation2 + $0x2] sm:$0x3] %vm535, %v969
    %993 = vst.msk [vmem:[#allocation2 + $0x12] sm:$0x3] %vm535, %v971
    %994 = vst.msk [vmem:[#allocation2 + $0x22] sm:$0x3] %vm535, %v973
    %995 = vst.msk [vmem:[#allocation2 + $0x32] sm:$0x3] %vm535, %v975
    %996 = vst.msk [vmem:[#allocation2 + $0x42] sm:$0x3] %vm535, %v977
    %997 = vst.msk [vmem:[#allocation2 + $0x52] sm:$0x3] %vm535, %v979
    %998 = vst.msk [vmem:[#allocation2 + $0x62] sm:$0x3] %vm535, %v981
    %999 = vst.msk [vmem:[#allocation2 + $0x72] sm:$0x3] %vm535, %v983
    %1000 = vset.pattern.permute.xlu0 8
    %1001 = vperm.xlu0 %1000, %v12
    %v1002 = vpop.permute.xlu0 %1001
    %1004 = vset.pattern.permute.xlu0 8
    %1005 = vperm.xlu0 %1004, %v13
    %v1006 = vpop.permute.xlu0 %1005
    %1008 = vset.pattern.permute.xlu0 8
    %1009 = vperm.xlu0 %1008, %v14
    %v1010 = vpop.permute.xlu0 %1009
    %1012 = vset.pattern.permute.xlu0 8
    %1013 = vperm.xlu0 %1012, %v15
    %v1014 = vpop.permute.xlu0 %1013
    %1016 = vset.pattern.permute.xlu0 8
    %1017 = vperm.xlu0 %1016, %v16
    %v1018 = vpop.permute.xlu0 %1017
    %1020 = vset.pattern.permute.xlu0 8
    %1021 = vperm.xlu0 %1020, %v17
    %v1022 = vpop.permute.xlu0 %1021
    %1024 = vset.pattern.permute.xlu0 8
    %1025 = vperm.xlu0 %1024, %v18
    %v1026 = vpop.permute.xlu0 %1025
    %1028 = vset.pattern.permute.xlu0 8
    %1029 = vperm.xlu0 %1028, %v19
    %v1030 = vpop.permute.xlu0 %1029
    %v1032 = vadd.f32 %v1002, %v39
    %v1033 = vadd.f32 %v1006, %v43
    %v1034 = vadd.f32 %v1010, %v47
    %v1035 = vadd.f32 %v1014, %v51
    %v1036 = vadd.f32 %v1018, %v55
    %v1037 = vadd.f32 %v1022, %v59
    %v1038 = vadd.f32 %v1026, %v63
    %v1039 = vadd.f32 %v1030, %v67
    %1040 = vst.msk [vmem:[#allocation2 + $0x4] sm:$0x3] %vm124, %v1032
    %1041 = vst.msk [vmem:[#allocation2 + $0x14] sm:$0x3] %vm124, %v1033
    %1042 = vst.msk [vmem:[#allocation2 + $0x24] sm:$0x3] %vm124, %v1034
    %1043 = vst.msk [vmem:[#allocation2 + $0x34] sm:$0x3] %vm124, %v1035
    %1044 = vst.msk [vmem:[#allocation2 + $0x44] sm:$0x3] %vm124, %v1036
    %1045 = vst.msk [vmem:[#allocation2 + $0x54] sm:$0x3] %vm124, %v1037
    %1046 = vst.msk [vmem:[#allocation2 + $0x64] sm:$0x3] %vm124, %v1038
    %1047 = vst.msk [vmem:[#allocation2 + $0x74] sm:$0x3] %vm124, %v1039
    %1048 = vset.pattern.permute.xlu0 9
    %1049 = vperm.xlu0 %1048, %v12
    %v1050 = vpop.permute.xlu0 %1049
    %1052 = vset.pattern.permute.xlu0 9
    %1053 = vperm.xlu0 %1052, %v13
    %v1054 = vpop.permute.xlu0 %1053
    %1056 = vset.pattern.permute.xlu0 9
    %1057 = vperm.xlu0 %1056, %v14
    %v1058 = vpop.permute.xlu0 %1057
    %1060 = vset.pattern.permute.xlu0 9
    %1061 = vperm.xlu0 %1060, %v15
    %v1062 = vpop.permute.xlu0 %1061
    %1064 = vset.pattern.permute.xlu0 9
    %1065 = vperm.xlu0 %1064, %v16
    %v1066 = vpop.permute.xlu0 %1065
    %1068 = vset.pattern.permute.xlu0 9
    %1069 = vperm.xlu0 %1068, %v17
    %v1070 = vpop.permute.xlu0 %1069
    %1072 = vset.pattern.permute.xlu0 9
    %1073 = vperm.xlu0 %1072, %v18
    %v1074 = vpop.permute.xlu0 %1073
    %1076 = vset.pattern.permute.xlu0 9
    %1077 = vperm.xlu0 %1076, %v19
    %v1078 = vpop.permute.xlu0 %1077
    %v1080 = vadd.f32 %v1050, %v39
    %v1081 = vadd.f32 %v1054, %v43
    %v1082 = vadd.f32 %v1058, %v47
    %v1083 = vadd.f32 %v1062, %v51
    %v1084 = vadd.f32 %v1066, %v55
    %v1085 = vadd.f32 %v1070, %v59
    %v1086 = vadd.f32 %v1074, %v63
    %v1087 = vadd.f32 %v1078, %v67
    %v1097 = vunpack.c.l.s4 1983009808
    %v1098 = vunpack.c.0.s8 %v1097
    %v1099 = vlaneseq
    %v1100 = vshrl.u32 %v1099, 7
    %v1101 = vsub.s32 %v1098, %v1100
    %v1102 = vrot.slane %v1080, %v1101
    %v1104 = vunpack.c.l.s4 1983009808
    %v1105 = vunpack.c.0.s8 %v1104
    %v1106 = vlaneseq
    %v1107 = vshrl.u32 %v1106, 7
    %v1108 = vsub.s32 %v1105, %v1107
    %v1109 = vrot.slane %v1081, %v1108
    %v1111 = vunpack.c.l.s4 1983009808
    %v1112 = vunpack.c.0.s8 %v1111
    %v1113 = vlaneseq
    %v1114 = vshrl.u32 %v1113, 7
    %v1115 = vsub.s32 %v1112, %v1114
    %v1116 = vrot.slane %v1082, %v1115
    %v1118 = vunpack.c.l.s4 1983009808
    %v1119 = vunpack.c.0.s8 %v1118
    %v1120 = vlaneseq
    %v1121 = vshrl.u32 %v1120, 7
    %v1122 = vsub.s32 %v1119, %v1121
    %v1123 = vrot.slane %v1083, %v1122
    %v1125 = vunpack.c.l.s4 1983009808
    %v1126 = vunpack.c.0.s8 %v1125
    %v1127 = vlaneseq
    %v1128 = vshrl.u32 %v1127, 7
    %v1129 = vsub.s32 %v1126, %v1128
    %v1130 = vrot.slane %v1084, %v1129
    %v1132 = vunpack.c.l.s4 1983009808
    %v1133 = vunpack.c.0.s8 %v1132
    %v1134 = vlaneseq
    %v1135 = vshrl.u32 %v1134, 7
    %v1136 = vsub.s32 %v1133, %v1135
    %v1137 = vrot.slane %v1085, %v1136
    %v1139 = vunpack.c.l.s4 1983009808
    %v1140 = vunpack.c.0.s8 %v1139
    %v1141 = vlaneseq
    %v1142 = vshrl.u32 %v1141, 7
    %v1143 = vsub.s32 %v1140, %v1142
    %v1144 = vrot.slane %v1086, %v1143
    %v1146 = vunpack.c.l.s4 1983009808
    %v1147 = vunpack.c.0.s8 %v1146
    %v1148 = vlaneseq
    %v1149 = vshrl.u32 %v1148, 7
    %v1150 = vsub.s32 %v1147, %v1149
    %v1151 = vrot.slane %v1087, %v1150
    %1152 = vrot.lane.b32.xlu0 %v1102, 32
    %v1153 = vpop.permute.xlu0 %1152
    %1154 = vrot.lane.b32.xlu0 %v1109, 32
    %v1155 = vpop.permute.xlu0 %1154
    %1156 = vrot.lane.b32.xlu0 %v1116, 32
    %v1157 = vpop.permute.xlu0 %1156
    %1158 = vrot.lane.b32.xlu0 %v1123, 32
    %v1159 = vpop.permute.xlu0 %1158
    %1160 = vrot.lane.b32.xlu0 %v1130, 32
    %v1161 = vpop.permute.xlu0 %1160
    %1162 = vrot.lane.b32.xlu0 %v1137, 32
    %v1163 = vpop.permute.xlu0 %1162
    %1164 = vrot.lane.b32.xlu0 %v1144, 32
    %v1165 = vpop.permute.xlu0 %1164
    %1166 = vrot.lane.b32.xlu0 %v1151, 32
    %v1167 = vpop.permute.xlu0 %1166
    %1176 = vst.msk [vmem:[#allocation2 + $0x4] sm:$0x3] %vm261, %v1153
    %1177 = vst.msk [vmem:[#allocation2 + $0x14] sm:$0x3] %vm261, %v1155
    %1178 = vst.msk [vmem:[#allocation2 + $0x24] sm:$0x3] %vm261, %v1157
    %1179 = vst.msk [vmem:[#allocation2 + $0x34] sm:$0x3] %vm261, %v1159
    %1180 = vst.msk [vmem:[#allocation2 + $0x44] sm:$0x3] %vm261, %v1161
    %1181 = vst.msk [vmem:[#allocation2 + $0x54] sm:$0x3] %vm261, %v1163
    %1182 = vst.msk [vmem:[#allocation2 + $0x64] sm:$0x3] %vm261, %v1165
    %1183 = vst.msk [vmem:[#allocation2 + $0x74] sm:$0x3] %vm261, %v1167
    %1184 = vset.pattern.permute.xlu0 10
    %1185 = vperm.xlu0 %1184, %v12
    %v1186 = vpop.permute.xlu0 %1185
    %1188 = vset.pattern.permute.xlu0 10
    %1189 = vperm.xlu0 %1188, %v13
    %v1190 = vpop.permute.xlu0 %1189
    %1192 = vset.pattern.permute.xlu0 10
    %1193 = vperm.xlu0 %1192, %v14
    %v1194 = vpop.permute.xlu0 %1193
    %1196 = vset.pattern.permute.xlu0 10
    %1197 = vperm.xlu0 %1196, %v15
    %v1198 = vpop.permute.xlu0 %1197
    %1200 = vset.pattern.permute.xlu0 10
    %1201 = vperm.xlu0 %1200, %v16
    %v1202 = vpop.permute.xlu0 %1201
    %1204 = vset.pattern.permute.xlu0 10
    %1205 = vperm.xlu0 %1204, %v17
    %v1206 = vpop.permute.xlu0 %1205
    %1208 = vset.pattern.permute.xlu0 10
    %1209 = vperm.xlu0 %1208, %v18
    %v1210 = vpop.permute.xlu0 %1209
    %1212 = vset.pattern.permute.xlu0 10
    %1213 = vperm.xlu0 %1212, %v19
    %v1214 = vpop.permute.xlu0 %1213
    %v1216 = vadd.f32 %v1186, %v39
    %v1217 = vadd.f32 %v1190, %v43
    %v1218 = vadd.f32 %v1194, %v47
    %v1219 = vadd.f32 %v1198, %v51
    %v1220 = vadd.f32 %v1202, %v55
    %v1221 = vadd.f32 %v1206, %v59
    %v1222 = vadd.f32 %v1210, %v63
    %v1223 = vadd.f32 %v1214, %v67
    %v1233 = vunpack.c.l.s4 1983009808
    %v1234 = vunpack.c.0.s8 %v1233
    %v1235 = vlaneseq
    %v1236 = vshrl.u32 %v1235, 7
    %v1237 = vsub.s32 %v1234, %v1236
    %v1238 = vrot.slane %v1216, %v1237
    %v1240 = vunpack.c.l.s4 1983009808
    %v1241 = vunpack.c.0.s8 %v1240
    %v1242 = vlaneseq
    %v1243 = vshrl.u32 %v1242, 7
    %v1244 = vsub.s32 %v1241, %v1243
    %v1245 = vrot.slane %v1217, %v1244
    %v1247 = vunpack.c.l.s4 1983009808
    %v1248 = vunpack.c.0.s8 %v1247
    %v1249 = vlaneseq
    %v1250 = vshrl.u32 %v1249, 7
    %v1251 = vsub.s32 %v1248, %v1250
    %v1252 = vrot.slane %v1218, %v1251
    %v1254 = vunpack.c.l.s4 1983009808
    %v1255 = vunpack.c.0.s8 %v1254
    %v1256 = vlaneseq
    %v1257 = vshrl.u32 %v1256, 7
    %v1258 = vsub.s32 %v1255, %v1257
    %v1259 = vrot.slane %v1219, %v1258
    %v1261 = vunpack.c.l.s4 1983009808
    %v1262 = vunpack.c.0.s8 %v1261
    %v1263 = vlaneseq
    %v1264 = vshrl.u32 %v1263, 7
    %v1265 = vsub.s32 %v1262, %v1264
    %v1266 = vrot.slane %v1220, %v1265
    %v1268 = vunpack.c.l.s4 1983009808
    %v1269 = vunpack.c.0.s8 %v1268
    %v1270 = vlaneseq
    %v1271 = vshrl.u32 %v1270, 7
    %v1272 = vsub.s32 %v1269, %v1271
    %v1273 = vrot.slane %v1221, %v1272
    %v1275 = vunpack.c.l.s4 1983009808
    %v1276 = vunpack.c.0.s8 %v1275
    %v1277 = vlaneseq
    %v1278 = vshrl.u32 %v1277, 7
    %v1279 = vsub.s32 %v1276, %v1278
    %v1280 = vrot.slane %v1222, %v1279
    %v1282 = vunpack.c.l.s4 1983009808
    %v1283 = vunpack.c.0.s8 %v1282
    %v1284 = vlaneseq
    %v1285 = vshrl.u32 %v1284, 7
    %v1286 = vsub.s32 %v1283, %v1285
    %v1287 = vrot.slane %v1223, %v1286
    %1288 = vrot.lane.b32.xlu0 %v1238, 64
    %v1289 = vpop.permute.xlu0 %1288
    %1290 = vrot.lane.b32.xlu0 %v1245, 64
    %v1291 = vpop.permute.xlu0 %1290
    %1292 = vrot.lane.b32.xlu0 %v1252, 64
    %v1293 = vpop.permute.xlu0 %1292
    %1294 = vrot.lane.b32.xlu0 %v1259, 64
    %v1295 = vpop.permute.xlu0 %1294
    %1296 = vrot.lane.b32.xlu0 %v1266, 64
    %v1297 = vpop.permute.xlu0 %1296
    %1298 = vrot.lane.b32.xlu0 %v1273, 64
    %v1299 = vpop.permute.xlu0 %1298
    %1300 = vrot.lane.b32.xlu0 %v1280, 64
    %v1301 = vpop.permute.xlu0 %1300
    %1302 = vrot.lane.b32.xlu0 %v1287, 64
    %v1303 = vpop.permute.xlu0 %1302
    %1312 = vst.msk [vmem:[#allocation2 + $0x4] sm:$0x3] %vm398, %v1289
    %1313 = vst.msk [vmem:[#allocation2 + $0x14] sm:$0x3] %vm398, %v1291
    %1314 = vst.msk [vmem:[#allocation2 + $0x24] sm:$0x3] %vm398, %v1293
    %1315 = vst.msk [vmem:[#allocation2 + $0x34] sm:$0x3] %vm398, %v1295
    %1316 = vst.msk [vmem:[#allocation2 + $0x44] sm:$0x3] %vm398, %v1297
    %1317 = vst.msk [vmem:[#allocation2 + $0x54] sm:$0x3] %vm398, %v1299
    %1318 = vst.msk [vmem:[#allocation2 + $0x64] sm:$0x3] %vm398, %v1301
    %1319 = vst.msk [vmem:[#allocation2 + $0x74] sm:$0x3] %vm398, %v1303
    %1320 = vset.pattern.permute.xlu0 11
    %1321 = vperm.xlu0 %1320, %v12
    %v1322 = vpop.permute.xlu0 %1321
    %1324 = vset.pattern.permute.xlu0 11
    %1325 = vperm.xlu0 %1324, %v13
    %v1326 = vpop.permute.xlu0 %1325
    %1328 = vset.pattern.permute.xlu0 11
    %1329 = vperm.xlu0 %1328, %v14
    %v1330 = vpop.permute.xlu0 %1329
    %1332 = vset.pattern.permute.xlu0 11
    %1333 = vperm.xlu0 %1332, %v15
    %v1334 = vpop.permute.xlu0 %1333
    %1336 = vset.pattern.permute.xlu0 11
    %1337 = vperm.xlu0 %1336, %v16
    %v1338 = vpop.permute.xlu0 %1337
    %1340 = vset.pattern.permute.xlu0 11
    %1341 = vperm.xlu0 %1340, %v17
    %v1342 = vpop.permute.xlu0 %1341
    %1344 = vset.pattern.permute.xlu0 11
    %1345 = vperm.xlu0 %1344, %v18
    %v1346 = vpop.permute.xlu0 %1345
    %1348 = vset.pattern.permute.xlu0 11
    %1349 = vperm.xlu0 %1348, %v19
    %v1350 = vpop.permute.xlu0 %1349
    %v1352 = vadd.f32 %v1322, %v39
    %v1353 = vadd.f32 %v1326, %v43
    %v1354 = vadd.f32 %v1330, %v47
    %v1355 = vadd.f32 %v1334, %v51
    %v1356 = vadd.f32 %v1338, %v55
    %v1357 = vadd.f32 %v1342, %v59
    %v1358 = vadd.f32 %v1346, %v63
    %v1359 = vadd.f32 %v1350, %v67
    %v1369 = vunpack.c.l.s4 1983009808
    %v1370 = vunpack.c.0.s8 %v1369
    %v1371 = vlaneseq
    %v1372 = vshrl.u32 %v1371, 7
    %v1373 = vsub.s32 %v1370, %v1372
    %v1374 = vrot.slane %v1352, %v1373
    %v1376 = vunpack.c.l.s4 1983009808
    %v1377 = vunpack.c.0.s8 %v1376
    %v1378 = vlaneseq
    %v1379 = vshrl.u32 %v1378, 7
    %v1380 = vsub.s32 %v1377, %v1379
    %v1381 = vrot.slane %v1353, %v1380
    %v1383 = vunpack.c.l.s4 1983009808
    %v1384 = vunpack.c.0.s8 %v1383
    %v1385 = vlaneseq
    %v1386 = vshrl.u32 %v1385, 7
    %v1387 = vsub.s32 %v1384, %v1386
    %v1388 = vrot.slane %v1354, %v1387
    %v1390 = vunpack.c.l.s4 1983009808
    %v1391 = vunpack.c.0.s8 %v1390
    %v1392 = vlaneseq
    %v1393 = vshrl.u32 %v1392, 7
    %v1394 = vsub.s32 %v1391, %v1393
    %v1395 = vrot.slane %v1355, %v1394
    %v1397 = vunpack.c.l.s4 1983009808
    %v1398 = vunpack.c.0.s8 %v1397
    %v1399 = vlaneseq
    %v1400 = vshrl.u32 %v1399, 7
    %v1401 = vsub.s32 %v1398, %v1400
    %v1402 = vrot.slane %v1356, %v1401
    %v1404 = vunpack.c.l.s4 1983009808
    %v1405 = vunpack.c.0.s8 %v1404
    %v1406 = vlaneseq
    %v1407 = vshrl.u32 %v1406, 7
    %v1408 = vsub.s32 %v1405, %v1407
    %v1409 = vrot.slane %v1357, %v1408
    %v1411 = vunpack.c.l.s4 1983009808
    %v1412 = vunpack.c.0.s8 %v1411
    %v1413 = vlaneseq
    %v1414 = vshrl.u32 %v1413, 7
    %v1415 = vsub.s32 %v1412, %v1414
    %v1416 = vrot.slane %v1358, %v1415
    %v1418 = vunpack.c.l.s4 1983009808
    %v1419 = vunpack.c.0.s8 %v1418
    %v1420 = vlaneseq
    %v1421 = vshrl.u32 %v1420, 7
    %v1422 = vsub.s32 %v1419, %v1421
    %v1423 = vrot.slane %v1359, %v1422
    %1424 = vrot.lane.b32.xlu0 %v1374, 96
    %v1425 = vpop.permute.xlu0 %1424
    %1426 = vrot.lane.b32.xlu0 %v1381, 96
    %v1427 = vpop.permute.xlu0 %1426
    %1428 = vrot.lane.b32.xlu0 %v1388, 96
    %v1429 = vpop.permute.xlu0 %1428
    %1430 = vrot.lane.b32.xlu0 %v1395, 96
    %v1431 = vpop.permute.xlu0 %1430
    %1432 = vrot.lane.b32.xlu0 %v1402, 96
    %v1433 = vpop.permute.xlu0 %1432
    %1434 = vrot.lane.b32.xlu0 %v1409, 96
    %v1435 = vpop.permute.xlu0 %1434
    %1436 = vrot.lane.b32.xlu0 %v1416, 96
    %v1437 = vpop.permute.xlu0 %1436
    %1438 = vrot.lane.b32.xlu0 %v1423, 96
    %v1439 = vpop.permute.xlu0 %1438
    %1448 = vst.msk [vmem:[#allocation2 + $0x4] sm:$0x3] %vm535, %v1425
    %1449 = vst.msk [vmem:[#allocation2 + $0x14] sm:$0x3] %vm535, %v1427
    %1450 = vst.msk [vmem:[#allocation2 + $0x24] sm:$0x3] %vm535, %v1429
    %1451 = vst.msk [vmem:[#allocation2 + $0x34] sm:$0x3] %vm535, %v1431
    %1452 = vst.msk [vmem:[#allocation2 + $0x44] sm:$0x3] %vm535, %v1433
    %1453 = vst.msk [vmem:[#allocation2 + $0x54] sm:$0x3] %vm535, %v1435
    %1454 = vst.msk [vmem:[#allocation2 + $0x64] sm:$0x3] %vm535, %v1437
    %1455 = vst.msk [vmem:[#allocation2 + $0x74] sm:$0x3] %vm535, %v1439
    %1456 = vset.pattern.permute.xlu0 12
    %1457 = vperm.xlu0 %1456, %v12
    %v1458 = vpop.permute.xlu0 %1457
    %1460 = vset.pattern.permute.xlu0 12
    %1461 = vperm.xlu0 %1460, %v13
    %v1462 = vpop.permute.xlu0 %1461
    %1464 = vset.pattern.permute.xlu0 12
    %1465 = vperm.xlu0 %1464, %v14
    %v1466 = vpop.permute.xlu0 %1465
    %1468 = vset.pattern.permute.xlu0 12
    %1469 = vperm.xlu0 %1468, %v15
    %v1470 = vpop.permute.xlu0 %1469
    %1472 = vset.pattern.permute.xlu0 12
    %1473 = vperm.xlu0 %1472, %v16
    %v1474 = vpop.permute.xlu0 %1473
    %1476 = vset.pattern.permute.xlu0 12
    %1477 = vperm.xlu0 %1476, %v17
    %v1478 = vpop.permute.xlu0 %1477
    %1480 = vset.pattern.permute.xlu0 12
    %1481 = vperm.xlu0 %1480, %v18
    %v1482 = vpop.permute.xlu0 %1481
    %1484 = vset.pattern.permute.xlu0 12
    %1485 = vperm.xlu0 %1484, %v19
    %v1486 = vpop.permute.xlu0 %1485
    %v1488 = vadd.f32 %v1458, %v39
    %v1489 = vadd.f32 %v1462, %v43
    %v1490 = vadd.f32 %v1466, %v47
    %v1491 = vadd.f32 %v1470, %v51
    %v1492 = vadd.f32 %v1474, %v55
    %v1493 = vadd.f32 %v1478, %v59
    %v1494 = vadd.f32 %v1482, %v63
    %v1495 = vadd.f32 %v1486, %v67
    %1496 = vst.msk [vmem:[#allocation2 + $0x6] sm:$0x3] %vm124, %v1488
    %1497 = vst.msk [vmem:[#allocation2 + $0x16] sm:$0x3] %vm124, %v1489
    %1498 = vst.msk [vmem:[#allocation2 + $0x26] sm:$0x3] %vm124, %v1490
    %1499 = vst.msk [vmem:[#allocation2 + $0x36] sm:$0x3] %vm124, %v1491
    %1500 = vst.msk [vmem:[#allocation2 + $0x46] sm:$0x3] %vm124, %v1492
    %1501 = vst.msk [vmem:[#allocation2 + $0x56] sm:$0x3] %vm124, %v1493
    %1502 = vst.msk [vmem:[#allocation2 + $0x66] sm:$0x3] %vm124, %v1494
    %1503 = vst.msk [vmem:[#allocation2 + $0x76] sm:$0x3] %vm124, %v1495
    %1504 = vset.pattern.permute.xlu0 13
    %1505 = vperm.xlu0 %1504, %v12
    %v1506 = vpop.permute.xlu0 %1505
    %1508 = vset.pattern.permute.xlu0 13
    %1509 = vperm.xlu0 %1508, %v13
    %v1510 = vpop.permute.xlu0 %1509
    %1512 = vset.pattern.permute.xlu0 13
    %1513 = vperm.xlu0 %1512, %v14
    %v1514 = vpop.permute.xlu0 %1513
    %1516 = vset.pattern.permute.xlu0 13
    %1517 = vperm.xlu0 %1516, %v15
    %v1518 = vpop.permute.xlu0 %1517
    %1520 = vset.pattern.permute.xlu0 13
    %1521 = vperm.xlu0 %1520, %v16
    %v1522 = vpop.permute.xlu0 %1521
    %1524 = vset.pattern.permute.xlu0 13
    %1525 = vperm.xlu0 %1524, %v17
    %v1526 = vpop.permute.xlu0 %1525
    %1528 = vset.pattern.permute.xlu0 13
    %1529 = vperm.xlu0 %1528, %v18
    %v1530 = vpop.permute.xlu0 %1529
    %1532 = vset.pattern.permute.xlu0 13
    %1533 = vperm.xlu0 %1532, %v19
    %v1534 = vpop.permute.xlu0 %1533
    %v1536 = vadd.f32 %v1506, %v39
    %v1537 = vadd.f32 %v1510, %v43
    %v1538 = vadd.f32 %v1514, %v47
    %v1539 = vadd.f32 %v1518, %v51
    %v1540 = vadd.f32 %v1522, %v55
    %v1541 = vadd.f32 %v1526, %v59
    %v1542 = vadd.f32 %v1530, %v63
    %v1543 = vadd.f32 %v1534, %v67
    %v1553 = vunpack.c.l.s4 1983009808
    %v1554 = vunpack.c.0.s8 %v1553
    %v1555 = vlaneseq
    %v1556 = vshrl.u32 %v1555, 7
    %v1557 = vsub.s32 %v1554, %v1556
    %v1558 = vrot.slane %v1536, %v1557
    %v1560 = vunpack.c.l.s4 1983009808
    %v1561 = vunpack.c.0.s8 %v1560
    %v1562 = vlaneseq
    %v1563 = vshrl.u32 %v1562, 7
    %v1564 = vsub.s32 %v1561, %v1563
    %v1565 = vrot.slane %v1537, %v1564
    %v1567 = vunpack.c.l.s4 1983009808
    %v1568 = vunpack.c.0.s8 %v1567
    %v1569 = vlaneseq
    %v1570 = vshrl.u32 %v1569, 7
    %v1571 = vsub.s32 %v1568, %v1570
    %v1572 = vrot.slane %v1538, %v1571
    %v1574 = vunpack.c.l.s4 1983009808
    %v1575 = vunpack.c.0.s8 %v1574
    %v1576 = vlaneseq
    %v1577 = vshrl.u32 %v1576, 7
    %v1578 = vsub.s32 %v1575, %v1577
    %v1579 = vrot.slane %v1539, %v1578
    %v1581 = vunpack.c.l.s4 1983009808
    %v1582 = vunpack.c.0.s8 %v1581
    %v1583 = vlaneseq
    %v1584 = vshrl.u32 %v1583, 7
    %v1585 = vsub.s32 %v1582, %v1584
    %v1586 = vrot.slane %v1540, %v1585
    %v1588 = vunpack.c.l.s4 1983009808
    %v1589 = vunpack.c.0.s8 %v1588
    %v1590 = vlaneseq
    %v1591 = vshrl.u32 %v1590, 7
    %v1592 = vsub.s32 %v1589, %v1591
    %v1593 = vrot.slane %v1541, %v1592
    %v1595 = vunpack.c.l.s4 1983009808
    %v1596 = vunpack.c.0.s8 %v1595
    %v1597 = vlaneseq
    %v1598 = vshrl.u32 %v1597, 7
    %v1599 = vsub.s32 %v1596, %v1598
    %v1600 = vrot.slane %v1542, %v1599
    %v1602 = vunpack.c.l.s4 1983009808
    %v1603 = vunpack.c.0.s8 %v1602
    %v1604 = vlaneseq
    %v1605 = vshrl.u32 %v1604, 7
    %v1606 = vsub.s32 %v1603, %v1605
    %v1607 = vrot.slane %v1543, %v1606
    %1608 = vrot.lane.b32.xlu0 %v1558, 32
    %v1609 = vpop.permute.xlu0 %1608
    %1610 = vrot.lane.b32.xlu0 %v1565, 32
    %v1611 = vpop.permute.xlu0 %1610
    %1612 = vrot.lane.b32.xlu0 %v1572, 32
    %v1613 = vpop.permute.xlu0 %1612
    %1614 = vrot.lane.b32.xlu0 %v1579, 32
    %v1615 = vpop.permute.xlu0 %1614
    %1616 = vrot.lane.b32.xlu0 %v1586, 32
    %v1617 = vpop.permute.xlu0 %1616
    %1618 = vrot.lane.b32.xlu0 %v1593, 32
    %v1619 = vpop.permute.xlu0 %1618
    %1620 = vrot.lane.b32.xlu0 %v1600, 32
    %v1621 = vpop.permute.xlu0 %1620
    %1622 = vrot.lane.b32.xlu0 %v1607, 32
    %v1623 = vpop.permute.xlu0 %1622
    %1632 = vst.msk [vmem:[#allocation2 + $0x6] sm:$0x3] %vm261, %v1609
    %1633 = vst.msk [vmem:[#allocation2 + $0x16] sm:$0x3] %vm261, %v1611
    %1634 = vst.msk [vmem:[#allocation2 + $0x26] sm:$0x3] %vm261, %v1613
    %1635 = vst.msk [vmem:[#allocation2 + $0x36] sm:$0x3] %vm261, %v1615
    %1636 = vst.msk [vmem:[#allocation2 + $0x46] sm:$0x3] %vm261, %v1617
    %1637 = vst.msk [vmem:[#allocation2 + $0x56] sm:$0x3] %vm261, %v1619
    %1638 = vst.msk [vmem:[#allocation2 + $0x66] sm:$0x3] %vm261, %v1621
    %1639 = vst.msk [vmem:[#allocation2 + $0x76] sm:$0x3] %vm261, %v1623
    %1640 = vset.pattern.permute.xlu0 14
    %1641 = vperm.xlu0 %1640, %v12
    %v1642 = vpop.permute.xlu0 %1641
    %1644 = vset.pattern.permute.xlu0 14
    %1645 = vperm.xlu0 %1644, %v13
    %v1646 = vpop.permute.xlu0 %1645
    %1648 = vset.pattern.permute.xlu0 14
    %1649 = vperm.xlu0 %1648, %v14
    %v1650 = vpop.permute.xlu0 %1649
    %1652 = vset.pattern.permute.xlu0 14
    %1653 = vperm.xlu0 %1652, %v15
    %v1654 = vpop.permute.xlu0 %1653
    %1656 = vset.pattern.permute.xlu0 14
    %1657 = vperm.xlu0 %1656, %v16
    %v1658 = vpop.permute.xlu0 %1657
    %1660 = vset.pattern.permute.xlu0 14
    %1661 = vperm.xlu0 %1660, %v17
    %v1662 = vpop.permute.xlu0 %1661
    %1664 = vset.pattern.permute.xlu0 14
    %1665 = vperm.xlu0 %1664, %v18
    %v1666 = vpop.permute.xlu0 %1665
    %1668 = vset.pattern.permute.xlu0 14
    %1669 = vperm.xlu0 %1668, %v19
    %v1670 = vpop.permute.xlu0 %1669
    %v1672 = vadd.f32 %v1642, %v39
    %v1673 = vadd.f32 %v1646, %v43
    %v1674 = vadd.f32 %v1650, %v47
    %v1675 = vadd.f32 %v1654, %v51
    %v1676 = vadd.f32 %v1658, %v55
    %v1677 = vadd.f32 %v1662, %v59
    %v1678 = vadd.f32 %v1666, %v63
    %v1679 = vadd.f32 %v1670, %v67
    %v1689 = vunpack.c.l.s4 1983009808
    %v1690 = vunpack.c.0.s8 %v1689
    %v1691 = vlaneseq
    %v1692 = vshrl.u32 %v1691, 7
    %v1693 = vsub.s32 %v1690, %v1692
    %v1694 = vrot.slane %v1672, %v1693
    %v1696 = vunpack.c.l.s4 1983009808
    %v1697 = vunpack.c.0.s8 %v1696
    %v1698 = vlaneseq
    %v1699 = vshrl.u32 %v1698, 7
    %v1700 = vsub.s32 %v1697, %v1699
    %v1701 = vrot.slane %v1673, %v1700
    %v1703 = vunpack.c.l.s4 1983009808
    %v1704 = vunpack.c.0.s8 %v1703
    %v1705 = vlaneseq
    %v1706 = vshrl.u32 %v1705, 7
    %v1707 = vsub.s32 %v1704, %v1706
    %v1708 = vrot.slane %v1674, %v1707
    %v1710 = vunpack.c.l.s4 1983009808
    %v1711 = vunpack.c.0.s8 %v1710
    %v1712 = vlaneseq
    %v1713 = vshrl.u32 %v1712, 7
    %v1714 = vsub.s32 %v1711, %v1713
    %v1715 = vrot.slane %v1675, %v1714
    %v1717 = vunpack.c.l.s4 1983009808
    %v1718 = vunpack.c.0.s8 %v1717
    %v1719 = vlaneseq
    %v1720 = vshrl.u32 %v1719, 7
    %v1721 = vsub.s32 %v1718, %v1720
    %v1722 = vrot.slane %v1676, %v1721
    %v1724 = vunpack.c.l.s4 1983009808
    %v1725 = vunpack.c.0.s8 %v1724
    %v1726 = vlaneseq
    %v1727 = vshrl.u32 %v1726, 7
    %v1728 = vsub.s32 %v1725, %v1727
    %v1729 = vrot.slane %v1677, %v1728
    %v1731 = vunpack.c.l.s4 1983009808
    %v1732 = vunpack.c.0.s8 %v1731
    %v1733 = vlaneseq
    %v1734 = vshrl.u32 %v1733, 7
    %v1735 = vsub.s32 %v1732, %v1734
    %v1736 = vrot.slane %v1678, %v1735
    %v1738 = vunpack.c.l.s4 1983009808
    %v1739 = vunpack.c.0.s8 %v1738
    %v1740 = vlaneseq
    %v1741 = vshrl.u32 %v1740, 7
    %v1742 = vsub.s32 %v1739, %v1741
    %v1743 = vrot.slane %v1679, %v1742
    %1744 = vrot.lane.b32.xlu0 %v1694, 64
    %v1745 = vpop.permute.xlu0 %1744
    %1746 = vrot.lane.b32.xlu0 %v1701, 64
    %v1747 = vpop.permute.xlu0 %1746
    %1748 = vrot.lane.b32.xlu0 %v1708, 64
    %v1749 = vpop.permute.xlu0 %1748
    %1750 = vrot.lane.b32.xlu0 %v1715, 64
    %v1751 = vpop.permute.xlu0 %1750
    %1752 = vrot.lane.b32.xlu0 %v1722, 64
    %v1753 = vpop.permute.xlu0 %1752
    %1754 = vrot.lane.b32.xlu0 %v1729, 64
    %v1755 = vpop.permute.xlu0 %1754
    %1756 = vrot.lane.b32.xlu0 %v1736, 64
    %v1757 = vpop.permute.xlu0 %1756
    %1758 = vrot.lane.b32.xlu0 %v1743, 64
    %v1759 = vpop.permute.xlu0 %1758
    %1768 = vst.msk [vmem:[#allocation2 + $0x6] sm:$0x3] %vm398, %v1745
    %1769 = vst.msk [vmem:[#allocation2 + $0x16] sm:$0x3] %vm398, %v1747
    %1770 = vst.msk [vmem:[#allocation2 + $0x26] sm:$0x3] %vm398, %v1749
    %1771 = vst.msk [vmem:[#allocation2 + $0x36] sm:$0x3] %vm398, %v1751
    %1772 = vst.msk [vmem:[#allocation2 + $0x46] sm:$0x3] %vm398, %v1753
    %1773 = vst.msk [vmem:[#allocation2 + $0x56] sm:$0x3] %vm398, %v1755
    %1774 = vst.msk [vmem:[#allocation2 + $0x66] sm:$0x3] %vm398, %v1757
    %1775 = vst.msk [vmem:[#allocation2 + $0x76] sm:$0x3] %vm398, %v1759
    %1776 = vset.pattern.permute.xlu0 15
    %1777 = vperm.xlu0 %1776, %v12
    %v1778 = vpop.permute.xlu0 %1777
    %1780 = vset.pattern.permute.xlu0 15
    %1781 = vperm.xlu0 %1780, %v13
    %v1782 = vpop.permute.xlu0 %1781
    %1784 = vset.pattern.permute.xlu0 15
    %1785 = vperm.xlu0 %1784, %v14
    %v1786 = vpop.permute.xlu0 %1785
    %1788 = vset.pattern.permute.xlu0 15
    %1789 = vperm.xlu0 %1788, %v15
    %v1790 = vpop.permute.xlu0 %1789
    %1792 = vset.pattern.permute.xlu0 15
    %1793 = vperm.xlu0 %1792, %v16
    %v1794 = vpop.permute.xlu0 %1793
    %1796 = vset.pattern.permute.xlu0 15
    %1797 = vperm.xlu0 %1796, %v17
    %v1798 = vpop.permute.xlu0 %1797
    %1800 = vset.pattern.permute.xlu0 15
    %1801 = vperm.xlu0 %1800, %v18
    %v1802 = vpop.permute.xlu0 %1801
    %1804 = vset.pattern.permute.xlu0 15
    %1805 = vperm.xlu0 %1804, %v19
    %v1806 = vpop.permute.xlu0 %1805
    %v1808 = vadd.f32 %v1778, %v39
    %v1809 = vadd.f32 %v1782, %v43
    %v1810 = vadd.f32 %v1786, %v47
    %v1811 = vadd.f32 %v1790, %v51
    %v1812 = vadd.f32 %v1794, %v55
    %v1813 = vadd.f32 %v1798, %v59
    %v1814 = vadd.f32 %v1802, %v63
    %v1815 = vadd.f32 %v1806, %v67
    %v1825 = vunpack.c.l.s4 1983009808
    %v1826 = vunpack.c.0.s8 %v1825
    %v1827 = vlaneseq
    %v1828 = vshrl.u32 %v1827, 7
    %v1829 = vsub.s32 %v1826, %v1828
    %v1830 = vrot.slane %v1808, %v1829
    %v1832 = vunpack.c.l.s4 1983009808
    %v1833 = vunpack.c.0.s8 %v1832
    %v1834 = vlaneseq
    %v1835 = vshrl.u32 %v1834, 7
    %v1836 = vsub.s32 %v1833, %v1835
    %v1837 = vrot.slane %v1809, %v1836
    %v1839 = vunpack.c.l.s4 1983009808
    %v1840 = vunpack.c.0.s8 %v1839
    %v1841 = vlaneseq
    %v1842 = vshrl.u32 %v1841, 7
    %v1843 = vsub.s32 %v1840, %v1842
    %v1844 = vrot.slane %v1810, %v1843
    %v1846 = vunpack.c.l.s4 1983009808
    %v1847 = vunpack.c.0.s8 %v1846
    %v1848 = vlaneseq
    %v1849 = vshrl.u32 %v1848, 7
    %v1850 = vsub.s32 %v1847, %v1849
    %v1851 = vrot.slane %v1811, %v1850
    %v1853 = vunpack.c.l.s4 1983009808
    %v1854 = vunpack.c.0.s8 %v1853
    %v1855 = vlaneseq
    %v1856 = vshrl.u32 %v1855, 7
    %v1857 = vsub.s32 %v1854, %v1856
    %v1858 = vrot.slane %v1812, %v1857
    %v1860 = vunpack.c.l.s4 1983009808
    %v1861 = vunpack.c.0.s8 %v1860
    %v1862 = vlaneseq
    %v1863 = vshrl.u32 %v1862, 7
    %v1864 = vsub.s32 %v1861, %v1863
    %v1865 = vrot.slane %v1813, %v1864
    %v1867 = vunpack.c.l.s4 1983009808
    %v1868 = vunpack.c.0.s8 %v1867
    %v1869 = vlaneseq
    %v1870 = vshrl.u32 %v1869, 7
    %v1871 = vsub.s32 %v1868, %v1870
    %v1872 = vrot.slane %v1814, %v1871
    %v1874 = vunpack.c.l.s4 1983009808
    %v1875 = vunpack.c.0.s8 %v1874
    %v1876 = vlaneseq
    %v1877 = vshrl.u32 %v1876, 7
    %v1878 = vsub.s32 %v1875, %v1877
    %v1879 = vrot.slane %v1815, %v1878
    %1880 = vrot.lane.b32.xlu0 %v1830, 96
    %v1881 = vpop.permute.xlu0 %1880
    %1882 = vrot.lane.b32.xlu0 %v1837, 96
    %v1883 = vpop.permute.xlu0 %1882
    %1884 = vrot.lane.b32.xlu0 %v1844, 96
    %v1885 = vpop.permute.xlu0 %1884
    %1886 = vrot.lane.b32.xlu0 %v1851, 96
    %v1887 = vpop.permute.xlu0 %1886
    %1888 = vrot.lane.b32.xlu0 %v1858, 96
    %v1889 = vpop.permute.xlu0 %1888
    %1890 = vrot.lane.b32.xlu0 %v1865, 96
    %v1891 = vpop.permute.xlu0 %1890
    %1892 = vrot.lane.b32.xlu0 %v1872, 96
    %v1893 = vpop.permute.xlu0 %1892
    %1894 = vrot.lane.b32.xlu0 %v1879, 96
    %v1895 = vpop.permute.xlu0 %1894
    %1904 = vst.msk [vmem:[#allocation2 + $0x6] sm:$0x3] %vm535, %v1881
    %1905 = vst.msk [vmem:[#allocation2 + $0x16] sm:$0x3] %vm535, %v1883
    %1906 = vst.msk [vmem:[#allocation2 + $0x26] sm:$0x3] %vm535, %v1885
    %1907 = vst.msk [vmem:[#allocation2 + $0x36] sm:$0x3] %vm535, %v1887
    %1908 = vst.msk [vmem:[#allocation2 + $0x46] sm:$0x3] %vm535, %v1889
    %1909 = vst.msk [vmem:[#allocation2 + $0x56] sm:$0x3] %vm535, %v1891
    %1910 = vst.msk [vmem:[#allocation2 + $0x66] sm:$0x3] %vm535, %v1893
    %1911 = vst.msk [vmem:[#allocation2 + $0x76] sm:$0x3] %vm535, %v1895
    %1912 = vset.pattern.permute.xlu0 16
    %1913 = vperm.xlu0 %1912, %v12
    %v1914 = vpop.permute.xlu0 %1913
    %1916 = vset.pattern.permute.xlu0 16
    %1917 = vperm.xlu0 %1916, %v13
    %v1918 = vpop.permute.xlu0 %1917
    %1920 = vset.pattern.permute.xlu0 16
    %1921 = vperm.xlu0 %1920, %v14
    %v1922 = vpop.permute.xlu0 %1921
    %1924 = vset.pattern.permute.xlu0 16
    %1925 = vperm.xlu0 %1924, %v15
    %v1926 = vpop.permute.xlu0 %1925
    %1928 = vset.pattern.permute.xlu0 16
    %1929 = vperm.xlu0 %1928, %v16
    %v1930 = vpop.permute.xlu0 %1929
    %1932 = vset.pattern.permute.xlu0 16
    %1933 = vperm.xlu0 %1932, %v17
    %v1934 = vpop.permute.xlu0 %1933
    %1936 = vset.pattern.permute.xlu0 16
    %1937 = vperm.xlu0 %1936, %v18
    %v1938 = vpop.permute.xlu0 %1937
    %1940 = vset.pattern.permute.xlu0 16
    %1941 = vperm.xlu0 %1940, %v19
    %v1942 = vpop.permute.xlu0 %1941
    %v1944 = vadd.f32 %v1914, %v39
    %v1945 = vadd.f32 %v1918, %v43
    %v1946 = vadd.f32 %v1922, %v47
    %v1947 = vadd.f32 %v1926, %v51
    %v1948 = vadd.f32 %v1930, %v55
    %v1949 = vadd.f32 %v1934, %v59
    %v1950 = vadd.f32 %v1938, %v63
    %v1951 = vadd.f32 %v1942, %v67
    %1952 = vst.msk [vmem:[#allocation2 + $0x8] sm:$0x3] %vm124, %v1944
    %1953 = vst.msk [vmem:[#allocation2 + $0x18] sm:$0x3] %vm124, %v1945
    %1954 = vst.msk [vmem:[#allocation2 + $0x28] sm:$0x3] %vm124, %v1946
    %1955 = vst.msk [vmem:[#allocation2 + $0x38] sm:$0x3] %vm124, %v1947
    %1956 = vst.msk [vmem:[#allocation2 + $0x48] sm:$0x3] %vm124, %v1948
    %1957 = vst.msk [vmem:[#allocation2 + $0x58] sm:$0x3] %vm124, %v1949
    %1958 = vst.msk [vmem:[#allocation2 + $0x68] sm:$0x3] %vm124, %v1950
    %1959 = vst.msk [vmem:[#allocation2 + $0x78] sm:$0x3] %vm124, %v1951
    %1960 = vset.pattern.permute.xlu0 17
    %1961 = vperm.xlu0 %1960, %v12
    %v1962 = vpop.permute.xlu0 %1961
    %1964 = vset.pattern.permute.xlu0 17
    %1965 = vperm.xlu0 %1964, %v13
    %v1966 = vpop.permute.xlu0 %1965
    %1968 = vset.pattern.permute.xlu0 17
    %1969 = vperm.xlu0 %1968, %v14
    %v1970 = vpop.permute.xlu0 %1969
    %1972 = vset.pattern.permute.xlu0 17
    %1973 = vperm.xlu0 %1972, %v15
    %v1974 = vpop.permute.xlu0 %1973
    %1976 = vset.pattern.permute.xlu0 17
    %1977 = vperm.xlu0 %1976, %v16
    %v1978 = vpop.permute.xlu0 %1977
    %1980 = vset.pattern.permute.xlu0 17
    %1981 = vperm.xlu0 %1980, %v17
    %v1982 = vpop.permute.xlu0 %1981
    %1984 = vset.pattern.permute.xlu0 17
    %1985 = vperm.xlu0 %1984, %v18
    %v1986 = vpop.permute.xlu0 %1985
    %1988 = vset.pattern.permute.xlu0 17
    %1989 = vperm.xlu0 %1988, %v19
    %v1990 = vpop.permute.xlu0 %1989
    %v1992 = vadd.f32 %v1962, %v39
    %v1993 = vadd.f32 %v1966, %v43
    %v1994 = vadd.f32 %v1970, %v47
    %v1995 = vadd.f32 %v1974, %v51
    %v1996 = vadd.f32 %v1978, %v55
    %v1997 = vadd.f32 %v1982, %v59
    %v1998 = vadd.f32 %v1986, %v63
    %v1999 = vadd.f32 %v1990, %v67
    %v2009 = vunpack.c.l.s4 1983009808
    %v2010 = vunpack.c.0.s8 %v2009
    %v2011 = vlaneseq
    %v2012 = vshrl.u32 %v2011, 7
    %v2013 = vsub.s32 %v2010, %v2012
    %v2014 = vrot.slane %v1992, %v2013
    %v2016 = vunpack.c.l.s4 1983009808
    %v2017 = vunpack.c.0.s8 %v2016
    %v2018 = vlaneseq
    %v2019 = vshrl.u32 %v2018, 7
    %v2020 = vsub.s32 %v2017, %v2019
    %v2021 = vrot.slane %v1993, %v2020
    %v2023 = vunpack.c.l.s4 1983009808
    %v2024 = vunpack.c.0.s8 %v2023
    %v2025 = vlaneseq
    %v2026 = vshrl.u32 %v2025, 7
    %v2027 = vsub.s32 %v2024, %v2026
    %v2028 = vrot.slane %v1994, %v2027
    %v2030 = vunpack.c.l.s4 1983009808
    %v2031 = vunpack.c.0.s8 %v2030
    %v2032 = vlaneseq
    %v2033 = vshrl.u32 %v2032, 7
    %v2034 = vsub.s32 %v2031, %v2033
    %v2035 = vrot.slane %v1995, %v2034
    %v2037 = vunpack.c.l.s4 1983009808
    %v2038 = vunpack.c.0.s8 %v2037
    %v2039 = vlaneseq
    %v2040 = vshrl.u32 %v2039, 7
    %v2041 = vsub.s32 %v2038, %v2040
    %v2042 = vrot.slane %v1996, %v2041
    %v2044 = vunpack.c.l.s4 1983009808
    %v2045 = vunpack.c.0.s8 %v2044
    %v2046 = vlaneseq
    %v2047 = vshrl.u32 %v2046, 7
    %v2048 = vsub.s32 %v2045, %v2047
    %v2049 = vrot.slane %v1997, %v2048
    %v2051 = vunpack.c.l.s4 1983009808
    %v2052 = vunpack.c.0.s8 %v2051
    %v2053 = vlaneseq
    %v2054 = vshrl.u32 %v2053, 7
    %v2055 = vsub.s32 %v2052, %v2054
    %v2056 = vrot.slane %v1998, %v2055
    %v2058 = vunpack.c.l.s4 1983009808
    %v2059 = vunpack.c.0.s8 %v2058
    %v2060 = vlaneseq
    %v2061 = vshrl.u32 %v2060, 7
    %v2062 = vsub.s32 %v2059, %v2061
    %v2063 = vrot.slane %v1999, %v2062
    %2064 = vrot.lane.b32.xlu0 %v2014, 32
    %v2065 = vpop.permute.xlu0 %2064
    %2066 = vrot.lane.b32.xlu0 %v2021, 32
    %v2067 = vpop.permute.xlu0 %2066
    %2068 = vrot.lane.b32.xlu0 %v2028, 32
    %v2069 = vpop.permute.xlu0 %2068
    %2070 = vrot.lane.b32.xlu0 %v2035, 32
    %v2071 = vpop.permute.xlu0 %2070
    %2072 = vrot.lane.b32.xlu0 %v2042, 32
    %v2073 = vpop.permute.xlu0 %2072
    %2074 = vrot.lane.b32.xlu0 %v2049, 32
    %v2075 = vpop.permute.xlu0 %2074
    %2076 = vrot.lane.b32.xlu0 %v2056, 32
    %v2077 = vpop.permute.xlu0 %2076
    %2078 = vrot.lane.b32.xlu0 %v2063, 32
    %v2079 = vpop.permute.xlu0 %2078
    %2088 = vst.msk [vmem:[#allocation2 + $0x8] sm:$0x3] %vm261, %v2065
    %2089 = vst.msk [vmem:[#allocation2 + $0x18] sm:$0x3] %vm261, %v2067
    %2090 = vst.msk [vmem:[#allocation2 + $0x28] sm:$0x3] %vm261, %v2069
    %2091 = vst.msk [vmem:[#allocation2 + $0x38] sm:$0x3] %vm261, %v2071
    %2092 = vst.msk [vmem:[#allocation2 + $0x48] sm:$0x3] %vm261, %v2073
    %2093 = vst.msk [vmem:[#allocation2 + $0x58] sm:$0x3] %vm261, %v2075
    %2094 = vst.msk [vmem:[#allocation2 + $0x68] sm:$0x3] %vm261, %v2077
    %2095 = vst.msk [vmem:[#allocation2 + $0x78] sm:$0x3] %vm261, %v2079
    %2096 = vset.pattern.permute.xlu0 18
    %2097 = vperm.xlu0 %2096, %v12
    %v2098 = vpop.permute.xlu0 %2097
    %2100 = vset.pattern.permute.xlu0 18
    %2101 = vperm.xlu0 %2100, %v13
    %v2102 = vpop.permute.xlu0 %2101
    %2104 = vset.pattern.permute.xlu0 18
    %2105 = vperm.xlu0 %2104, %v14
    %v2106 = vpop.permute.xlu0 %2105
    %2108 = vset.pattern.permute.xlu0 18
    %2109 = vperm.xlu0 %2108, %v15
    %v2110 = vpop.permute.xlu0 %2109
    %2112 = vset.pattern.permute.xlu0 18
    %2113 = vperm.xlu0 %2112, %v16
    %v2114 = vpop.permute.xlu0 %2113
    %2116 = vset.pattern.permute.xlu0 18
    %2117 = vperm.xlu0 %2116, %v17
    %v2118 = vpop.permute.xlu0 %2117
    %2120 = vset.pattern.permute.xlu0 18
    %2121 = vperm.xlu0 %2120, %v18
    %v2122 = vpop.permute.xlu0 %2121
    %2124 = vset.pattern.permute.xlu0 18
    %2125 = vperm.xlu0 %2124, %v19
    %v2126 = vpop.permute.xlu0 %2125
    %v2128 = vadd.f32 %v2098, %v39
    %v2129 = vadd.f32 %v2102, %v43
    %v2130 = vadd.f32 %v2106, %v47
    %v2131 = vadd.f32 %v2110, %v51
    %v2132 = vadd.f32 %v2114, %v55
    %v2133 = vadd.f32 %v2118, %v59
    %v2134 = vadd.f32 %v2122, %v63
    %v2135 = vadd.f32 %v2126, %v67
    %v2145 = vunpack.c.l.s4 1983009808
    %v2146 = vunpack.c.0.s8 %v2145
    %v2147 = vlaneseq
    %v2148 = vshrl.u32 %v2147, 7
    %v2149 = vsub.s32 %v2146, %v2148
    %v2150 = vrot.slane %v2128, %v2149
    %v2152 = vunpack.c.l.s4 1983009808
    %v2153 = vunpack.c.0.s8 %v2152
    %v2154 = vlaneseq
    %v2155 = vshrl.u32 %v2154, 7
    %v2156 = vsub.s32 %v2153, %v2155
    %v2157 = vrot.slane %v2129, %v2156
    %v2159 = vunpack.c.l.s4 1983009808
    %v2160 = vunpack.c.0.s8 %v2159
    %v2161 = vlaneseq
    %v2162 = vshrl.u32 %v2161, 7
    %v2163 = vsub.s32 %v2160, %v2162
    %v2164 = vrot.slane %v2130, %v2163
    %v2166 = vunpack.c.l.s4 1983009808
    %v2167 = vunpack.c.0.s8 %v2166
    %v2168 = vlaneseq
    %v2169 = vshrl.u32 %v2168, 7
    %v2170 = vsub.s32 %v2167, %v2169
    %v2171 = vrot.slane %v2131, %v2170
    %v2173 = vunpack.c.l.s4 1983009808
    %v2174 = vunpack.c.0.s8 %v2173
    %v2175 = vlaneseq
    %v2176 = vshrl.u32 %v2175, 7
    %v2177 = vsub.s32 %v2174, %v2176
    %v2178 = vrot.slane %v2132, %v2177
    %v2180 = vunpack.c.l.s4 1983009808
    %v2181 = vunpack.c.0.s8 %v2180
    %v2182 = vlaneseq
    %v2183 = vshrl.u32 %v2182, 7
    %v2184 = vsub.s32 %v2181, %v2183
    %v2185 = vrot.slane %v2133, %v2184
    %v2187 = vunpack.c.l.s4 1983009808
    %v2188 = vunpack.c.0.s8 %v2187
    %v2189 = vlaneseq
    %v2190 = vshrl.u32 %v2189, 7
    %v2191 = vsub.s32 %v2188, %v2190
    %v2192 = vrot.slane %v2134, %v2191
    %v2194 = vunpack.c.l.s4 1983009808
    %v2195 = vunpack.c.0.s8 %v2194
    %v2196 = vlaneseq
    %v2197 = vshrl.u32 %v2196, 7
    %v2198 = vsub.s32 %v2195, %v2197
    %v2199 = vrot.slane %v2135, %v2198
    %2200 = vrot.lane.b32.xlu0 %v2150, 64
    %v2201 = vpop.permute.xlu0 %2200
    %2202 = vrot.lane.b32.xlu0 %v2157, 64
    %v2203 = vpop.permute.xlu0 %2202
    %2204 = vrot.lane.b32.xlu0 %v2164, 64
    %v2205 = vpop.permute.xlu0 %2204
    %2206 = vrot.lane.b32.xlu0 %v2171, 64
    %v2207 = vpop.permute.xlu0 %2206
    %2208 = vrot.lane.b32.xlu0 %v2178, 64
    %v2209 = vpop.permute.xlu0 %2208
    %2210 = vrot.lane.b32.xlu0 %v2185, 64
    %v2211 = vpop.permute.xlu0 %2210
    %2212 = vrot.lane.b32.xlu0 %v2192, 64
    %v2213 = vpop.permute.xlu0 %2212
    %2214 = vrot.lane.b32.xlu0 %v2199, 64
    %v2215 = vpop.permute.xlu0 %2214
    %2224 = vst.msk [vmem:[#allocation2 + $0x8] sm:$0x3] %vm398, %v2201
    %2225 = vst.msk [vmem:[#allocation2 + $0x18] sm:$0x3] %vm398, %v2203
    %2226 = vst.msk [vmem:[#allocation2 + $0x28] sm:$0x3] %vm398, %v2205
    %2227 = vst.msk [vmem:[#allocation2 + $0x38] sm:$0x3] %vm398, %v2207
    %2228 = vst.msk [vmem:[#allocation2 + $0x48] sm:$0x3] %vm398, %v2209
    %2229 = vst.msk [vmem:[#allocation2 + $0x58] sm:$0x3] %vm398, %v2211
    %2230 = vst.msk [vmem:[#allocation2 + $0x68] sm:$0x3] %vm398, %v2213
    %2231 = vst.msk [vmem:[#allocation2 + $0x78] sm:$0x3] %vm398, %v2215
    %2232 = vset.pattern.permute.xlu0 19
    %2233 = vperm.xlu0 %2232, %v12
    %v2234 = vpop.permute.xlu0 %2233
    %2236 = vset.pattern.permute.xlu0 19
    %2237 = vperm.xlu0 %2236, %v13
    %v2238 = vpop.permute.xlu0 %2237
    %2240 = vset.pattern.permute.xlu0 19
    %2241 = vperm.xlu0 %2240, %v14
    %v2242 = vpop.permute.xlu0 %2241
    %2244 = vset.pattern.permute.xlu0 19
    %2245 = vperm.xlu0 %2244, %v15
    %v2246 = vpop.permute.xlu0 %2245
    %2248 = vset.pattern.permute.xlu0 19
    %2249 = vperm.xlu0 %2248, %v16
    %v2250 = vpop.permute.xlu0 %2249
    %2252 = vset.pattern.permute.xlu0 19
    %2253 = vperm.xlu0 %2252, %v17
    %v2254 = vpop.permute.xlu0 %2253
    %2256 = vset.pattern.permute.xlu0 19
    %2257 = vperm.xlu0 %2256, %v18
    %v2258 = vpop.permute.xlu0 %2257
    %2260 = vset.pattern.permute.xlu0 19
    %2261 = vperm.xlu0 %2260, %v19
    %v2262 = vpop.permute.xlu0 %2261
    %v2264 = vadd.f32 %v2234, %v39
    %v2265 = vadd.f32 %v2238, %v43
    %v2266 = vadd.f32 %v2242, %v47
    %v2267 = vadd.f32 %v2246, %v51
    %v2268 = vadd.f32 %v2250, %v55
    %v2269 = vadd.f32 %v2254, %v59
    %v2270 = vadd.f32 %v2258, %v63
    %v2271 = vadd.f32 %v2262, %v67
    %v2281 = vunpack.c.l.s4 1983009808
    %v2282 = vunpack.c.0.s8 %v2281
    %v2283 = vlaneseq
    %v2284 = vshrl.u32 %v2283, 7
    %v2285 = vsub.s32 %v2282, %v2284
    %v2286 = vrot.slane %v2264, %v2285
    %v2288 = vunpack.c.l.s4 1983009808
    %v2289 = vunpack.c.0.s8 %v2288
    %v2290 = vlaneseq
    %v2291 = vshrl.u32 %v2290, 7
    %v2292 = vsub.s32 %v2289, %v2291
    %v2293 = vrot.slane %v2265, %v2292
    %v2295 = vunpack.c.l.s4 1983009808
    %v2296 = vunpack.c.0.s8 %v2295
    %v2297 = vlaneseq
    %v2298 = vshrl.u32 %v2297, 7
    %v2299 = vsub.s32 %v2296, %v2298
    %v2300 = vrot.slane %v2266, %v2299
    %v2302 = vunpack.c.l.s4 1983009808
    %v2303 = vunpack.c.0.s8 %v2302
    %v2304 = vlaneseq
    %v2305 = vshrl.u32 %v2304, 7
    %v2306 = vsub.s32 %v2303, %v2305
    %v2307 = vrot.slane %v2267, %v2306
    %v2309 = vunpack.c.l.s4 1983009808
    %v2310 = vunpack.c.0.s8 %v2309
    %v2311 = vlaneseq
    %v2312 = vshrl.u32 %v2311, 7
    %v2313 = vsub.s32 %v2310, %v2312
    %v2314 = vrot.slane %v2268, %v2313
    %v2316 = vunpack.c.l.s4 1983009808
    %v2317 = vunpack.c.0.s8 %v2316
    %v2318 = vlaneseq
    %v2319 = vshrl.u32 %v2318, 7
    %v2320 = vsub.s32 %v2317, %v2319
    %v2321 = vrot.slane %v2269, %v2320
    %v2323 = vunpack.c.l.s4 1983009808
    %v2324 = vunpack.c.0.s8 %v2323
    %v2325 = vlaneseq
    %v2326 = vshrl.u32 %v2325, 7
    %v2327 = vsub.s32 %v2324, %v2326
    %v2328 = vrot.slane %v2270, %v2327
    %v2330 = vunpack.c.l.s4 1983009808
    %v2331 = vunpack.c.0.s8 %v2330
    %v2332 = vlaneseq
    %v2333 = vshrl.u32 %v2332, 7
    %v2334 = vsub.s32 %v2331, %v2333
    %v2335 = vrot.slane %v2271, %v2334
    %2336 = vrot.lane.b32.xlu0 %v2286, 96
    %v2337 = vpop.permute.xlu0 %2336
    %2338 = vrot.lane.b32.xlu0 %v2293, 96
    %v2339 = vpop.permute.xlu0 %2338
    %2340 = vrot.lane.b32.xlu0 %v2300, 96
    %v2341 = vpop.permute.xlu0 %2340
    %2342 = vrot.lane.b32.xlu0 %v2307, 96
    %v2343 = vpop.permute.xlu0 %2342
    %2344 = vrot.lane.b32.xlu0 %v2314, 96
    %v2345 = vpop.permute.xlu0 %2344
    %2346 = vrot.lane.b32.xlu0 %v2321, 96
    %v2347 = vpop.permute.xlu0 %2346
    %2348 = vrot.lane.b32.xlu0 %v2328, 96
    %v2349 = vpop.permute.xlu0 %2348
    %2350 = vrot.lane.b32.xlu0 %v2335, 96
    %v2351 = vpop.permute.xlu0 %2350
    %2360 = vst.msk [vmem:[#allocation2 + $0x8] sm:$0x3] %vm535, %v2337
    %2361 = vst.msk [vmem:[#allocation2 + $0x18] sm:$0x3] %vm535, %v2339
    %2362 = vst.msk [vmem:[#allocation2 + $0x28] sm:$0x3] %vm535, %v2341
    %2363 = vst.msk [vmem:[#allocation2 + $0x38] sm:$0x3] %vm535, %v2343
    %2364 = vst.msk [vmem:[#allocation2 + $0x48] sm:$0x3] %vm535, %v2345
    %2365 = vst.msk [vmem:[#allocation2 + $0x58] sm:$0x3] %vm535, %v2347
    %2366 = vst.msk [vmem:[#allocation2 + $0x68] sm:$0x3] %vm535, %v2349
    %2367 = vst.msk [vmem:[#allocation2 + $0x78] sm:$0x3] %vm535, %v2351
    %2368 = vset.pattern.permute.xlu0 20
    %2369 = vperm.xlu0 %2368, %v12
    %v2370 = vpop.permute.xlu0 %2369
    %2372 = vset.pattern.permute.xlu0 20
    %2373 = vperm.xlu0 %2372, %v13
    %v2374 = vpop.permute.xlu0 %2373
    %2376 = vset.pattern.permute.xlu0 20
    %2377 = vperm.xlu0 %2376, %v14
    %v2378 = vpop.permute.xlu0 %2377
    %2380 = vset.pattern.permute.xlu0 20
    %2381 = vperm.xlu0 %2380, %v15
    %v2382 = vpop.permute.xlu0 %2381
    %2384 = vset.pattern.permute.xlu0 20
    %2385 = vperm.xlu0 %2384, %v16
    %v2386 = vpop.permute.xlu0 %2385
    %2388 = vset.pattern.permute.xlu0 20
    %2389 = vperm.xlu0 %2388, %v17
    %v2390 = vpop.permute.xlu0 %2389
    %2392 = vset.pattern.permute.xlu0 20
    %2393 = vperm.xlu0 %2392, %v18
    %v2394 = vpop.permute.xlu0 %2393
    %2396 = vset.pattern.permute.xlu0 20
    %2397 = vperm.xlu0 %2396, %v19
    %v2398 = vpop.permute.xlu0 %2397
    %v2400 = vadd.f32 %v2370, %v39
    %v2401 = vadd.f32 %v2374, %v43
    %v2402 = vadd.f32 %v2378, %v47
    %v2403 = vadd.f32 %v2382, %v51
    %v2404 = vadd.f32 %v2386, %v55
    %v2405 = vadd.f32 %v2390, %v59
    %v2406 = vadd.f32 %v2394, %v63
    %v2407 = vadd.f32 %v2398, %v67
    %2408 = vst.msk [vmem:[#allocation2 + $0xa] sm:$0x3] %vm124, %v2400
    %2409 = vst.msk [vmem:[#allocation2 + $0x1a] sm:$0x3] %vm124, %v2401
    %2410 = vst.msk [vmem:[#allocation2 + $0x2a] sm:$0x3] %vm124, %v2402
    %2411 = vst.msk [vmem:[#allocation2 + $0x3a] sm:$0x3] %vm124, %v2403
    %2412 = vst.msk [vmem:[#allocation2 + $0x4a] sm:$0x3] %vm124, %v2404
    %2413 = vst.msk [vmem:[#allocation2 + $0x5a] sm:$0x3] %vm124, %v2405
    %2414 = vst.msk [vmem:[#allocation2 + $0x6a] sm:$0x3] %vm124, %v2406
    %2415 = vst.msk [vmem:[#allocation2 + $0x7a] sm:$0x3] %vm124, %v2407
    %2416 = vset.pattern.permute.xlu0 21
    %2417 = vperm.xlu0 %2416, %v12
    %v2418 = vpop.permute.xlu0 %2417
    %2420 = vset.pattern.permute.xlu0 21
    %2421 = vperm.xlu0 %2420, %v13
    %v2422 = vpop.permute.xlu0 %2421
    %2424 = vset.pattern.permute.xlu0 21
    %2425 = vperm.xlu0 %2424, %v14
    %v2426 = vpop.permute.xlu0 %2425
    %2428 = vset.pattern.permute.xlu0 21
    %2429 = vperm.xlu0 %2428, %v15
    %v2430 = vpop.permute.xlu0 %2429
    %2432 = vset.pattern.permute.xlu0 21
    %2433 = vperm.xlu0 %2432, %v16
    %v2434 = vpop.permute.xlu0 %2433
    %2436 = vset.pattern.permute.xlu0 21
    %2437 = vperm.xlu0 %2436, %v17
    %v2438 = vpop.permute.xlu0 %2437
    %2440 = vset.pattern.permute.xlu0 21
    %2441 = vperm.xlu0 %2440, %v18
    %v2442 = vpop.permute.xlu0 %2441
    %2444 = vset.pattern.permute.xlu0 21
    %2445 = vperm.xlu0 %2444, %v19
    %v2446 = vpop.permute.xlu0 %2445
    %v2448 = vadd.f32 %v2418, %v39
    %v2449 = vadd.f32 %v2422, %v43
    %v2450 = vadd.f32 %v2426, %v47
    %v2451 = vadd.f32 %v2430, %v51
    %v2452 = vadd.f32 %v2434, %v55
    %v2453 = vadd.f32 %v2438, %v59
    %v2454 = vadd.f32 %v2442, %v63
    %v2455 = vadd.f32 %v2446, %v67
    %v2465 = vunpack.c.l.s4 1983009808
    %v2466 = vunpack.c.0.s8 %v2465
    %v2467 = vlaneseq
    %v2468 = vshrl.u32 %v2467, 7
    %v2469 = vsub.s32 %v2466, %v2468
    %v2470 = vrot.slane %v2448, %v2469
    %v2472 = vunpack.c.l.s4 1983009808
    %v2473 = vunpack.c.0.s8 %v2472
    %v2474 = vlaneseq
    %v2475 = vshrl.u32 %v2474, 7
    %v2476 = vsub.s32 %v2473, %v2475
    %v2477 = vrot.slane %v2449, %v2476
    %v2479 = vunpack.c.l.s4 1983009808
    %v2480 = vunpack.c.0.s8 %v2479
    %v2481 = vlaneseq
    %v2482 = vshrl.u32 %v2481, 7
    %v2483 = vsub.s32 %v2480, %v2482
    %v2484 = vrot.slane %v2450, %v2483
    %v2486 = vunpack.c.l.s4 1983009808
    %v2487 = vunpack.c.0.s8 %v2486
    %v2488 = vlaneseq
    %v2489 = vshrl.u32 %v2488, 7
    %v2490 = vsub.s32 %v2487, %v2489
    %v2491 = vrot.slane %v2451, %v2490
    %v2493 = vunpack.c.l.s4 1983009808
    %v2494 = vunpack.c.0.s8 %v2493
    %v2495 = vlaneseq
    %v2496 = vshrl.u32 %v2495, 7
    %v2497 = vsub.s32 %v2494, %v2496
    %v2498 = vrot.slane %v2452, %v2497
    %v2500 = vunpack.c.l.s4 1983009808
    %v2501 = vunpack.c.0.s8 %v2500
    %v2502 = vlaneseq
    %v2503 = vshrl.u32 %v2502, 7
    %v2504 = vsub.s32 %v2501, %v2503
    %v2505 = vrot.slane %v2453, %v2504
    %v2507 = vunpack.c.l.s4 1983009808
    %v2508 = vunpack.c.0.s8 %v2507
    %v2509 = vlaneseq
    %v2510 = vshrl.u32 %v2509, 7
    %v2511 = vsub.s32 %v2508, %v2510
    %v2512 = vrot.slane %v2454, %v2511
    %v2514 = vunpack.c.l.s4 1983009808
    %v2515 = vunpack.c.0.s8 %v2514
    %v2516 = vlaneseq
    %v2517 = vshrl.u32 %v2516, 7
    %v2518 = vsub.s32 %v2515, %v2517
    %v2519 = vrot.slane %v2455, %v2518
    %2520 = vrot.lane.b32.xlu0 %v2470, 32
    %v2521 = vpop.permute.xlu0 %2520
    %2522 = vrot.lane.b32.xlu0 %v2477, 32
    %v2523 = vpop.permute.xlu0 %2522
    %2524 = vrot.lane.b32.xlu0 %v2484, 32
    %v2525 = vpop.permute.xlu0 %2524
    %2526 = vrot.lane.b32.xlu0 %v2491, 32
    %v2527 = vpop.permute.xlu0 %2526
    %2528 = vrot.lane.b32.xlu0 %v2498, 32
    %v2529 = vpop.permute.xlu0 %2528
    %2530 = vrot.lane.b32.xlu0 %v2505, 32
    %v2531 = vpop.permute.xlu0 %2530
    %2532 = vrot.lane.b32.xlu0 %v2512, 32
    %v2533 = vpop.permute.xlu0 %2532
    %2534 = vrot.lane.b32.xlu0 %v2519, 32
    %v2535 = vpop.permute.xlu0 %2534
    %2544 = vst.msk [vmem:[#allocation2 + $0xa] sm:$0x3] %vm261, %v2521
    %2545 = vst.msk [vmem:[#allocation2 + $0x1a] sm:$0x3] %vm261, %v2523
    %2546 = vst.msk [vmem:[#allocation2 + $0x2a] sm:$0x3] %vm261, %v2525
    %2547 = vst.msk [vmem:[#allocation2 + $0x3a] sm:$0x3] %vm261, %v2527
    %2548 = vst.msk [vmem:[#allocation2 + $0x4a] sm:$0x3] %vm261, %v2529
    %2549 = vst.msk [vmem:[#allocation2 + $0x5a] sm:$0x3] %vm261, %v2531
    %2550 = vst.msk [vmem:[#allocation2 + $0x6a] sm:$0x3] %vm261, %v2533
    %2551 = vst.msk [vmem:[#allocation2 + $0x7a] sm:$0x3] %vm261, %v2535
    %2552 = vset.pattern.permute.xlu0 22
    %2553 = vperm.xlu0 %2552, %v12
    %v2554 = vpop.permute.xlu0 %2553
    %2556 = vset.pattern.permute.xlu0 22
    %2557 = vperm.xlu0 %2556, %v13
    %v2558 = vpop.permute.xlu0 %2557
    %2560 = vset.pattern.permute.xlu0 22
    %2561 = vperm.xlu0 %2560, %v14
    %v2562 = vpop.permute.xlu0 %2561
    %2564 = vset.pattern.permute.xlu0 22
    %2565 = vperm.xlu0 %2564, %v15
    %v2566 = vpop.permute.xlu0 %2565
    %2568 = vset.pattern.permute.xlu0 22
    %2569 = vperm.xlu0 %2568, %v16
    %v2570 = vpop.permute.xlu0 %2569
    %2572 = vset.pattern.permute.xlu0 22
    %2573 = vperm.xlu0 %2572, %v17
    %v2574 = vpop.permute.xlu0 %2573
    %2576 = vset.pattern.permute.xlu0 22
    %2577 = vperm.xlu0 %2576, %v18
    %v2578 = vpop.permute.xlu0 %2577
    %2580 = vset.pattern.permute.xlu0 22
    %2581 = vperm.xlu0 %2580, %v19
    %v2582 = vpop.permute.xlu0 %2581
    %v2584 = vadd.f32 %v2554, %v39
    %v2585 = vadd.f32 %v2558, %v43
    %v2586 = vadd.f32 %v2562, %v47
    %v2587 = vadd.f32 %v2566, %v51
    %v2588 = vadd.f32 %v2570, %v55
    %v2589 = vadd.f32 %v2574, %v59
    %v2590 = vadd.f32 %v2578, %v63
    %v2591 = vadd.f32 %v2582, %v67
    %v2601 = vunpack.c.l.s4 1983009808
    %v2602 = vunpack.c.0.s8 %v2601
    %v2603 = vlaneseq
    %v2604 = vshrl.u32 %v2603, 7
    %v2605 = vsub.s32 %v2602, %v2604
    %v2606 = vrot.slane %v2584, %v2605
    %v2608 = vunpack.c.l.s4 1983009808
    %v2609 = vunpack.c.0.s8 %v2608
    %v2610 = vlaneseq
    %v2611 = vshrl.u32 %v2610, 7
    %v2612 = vsub.s32 %v2609, %v2611
    %v2613 = vrot.slane %v2585, %v2612
    %v2615 = vunpack.c.l.s4 1983009808
    %v2616 = vunpack.c.0.s8 %v2615
    %v2617 = vlaneseq
    %v2618 = vshrl.u32 %v2617, 7
    %v2619 = vsub.s32 %v2616, %v2618
    %v2620 = vrot.slane %v2586, %v2619
    %v2622 = vunpack.c.l.s4 1983009808
    %v2623 = vunpack.c.0.s8 %v2622
    %v2624 = vlaneseq
    %v2625 = vshrl.u32 %v2624, 7
    %v2626 = vsub.s32 %v2623, %v2625
    %v2627 = vrot.slane %v2587, %v2626
    %v2629 = vunpack.c.l.s4 1983009808
    %v2630 = vunpack.c.0.s8 %v2629
    %v2631 = vlaneseq
    %v2632 = vshrl.u32 %v2631, 7
    %v2633 = vsub.s32 %v2630, %v2632
    %v2634 = vrot.slane %v2588, %v2633
    %v2636 = vunpack.c.l.s4 1983009808
    %v2637 = vunpack.c.0.s8 %v2636
    %v2638 = vlaneseq
    %v2639 = vshrl.u32 %v2638, 7
    %v2640 = vsub.s32 %v2637, %v2639
    %v2641 = vrot.slane %v2589, %v2640
    %v2643 = vunpack.c.l.s4 1983009808
    %v2644 = vunpack.c.0.s8 %v2643
    %v2645 = vlaneseq
    %v2646 = vshrl.u32 %v2645, 7
    %v2647 = vsub.s32 %v2644, %v2646
    %v2648 = vrot.slane %v2590, %v2647
    %v2650 = vunpack.c.l.s4 1983009808
    %v2651 = vunpack.c.0.s8 %v2650
    %v2652 = vlaneseq
    %v2653 = vshrl.u32 %v2652, 7
    %v2654 = vsub.s32 %v2651, %v2653
    %v2655 = vrot.slane %v2591, %v2654
    %2656 = vrot.lane.b32.xlu0 %v2606, 64
    %v2657 = vpop.permute.xlu0 %2656
    %2658 = vrot.lane.b32.xlu0 %v2613, 64
    %v2659 = vpop.permute.xlu0 %2658
    %2660 = vrot.lane.b32.xlu0 %v2620, 64
    %v2661 = vpop.permute.xlu0 %2660
    %2662 = vrot.lane.b32.xlu0 %v2627, 64
    %v2663 = vpop.permute.xlu0 %2662
    %2664 = vrot.lane.b32.xlu0 %v2634, 64
    %v2665 = vpop.permute.xlu0 %2664
    %2666 = vrot.lane.b32.xlu0 %v2641, 64
    %v2667 = vpop.permute.xlu0 %2666
    %2668 = vrot.lane.b32.xlu0 %v2648, 64
    %v2669 = vpop.permute.xlu0 %2668
    %2670 = vrot.lane.b32.xlu0 %v2655, 64
    %v2671 = vpop.permute.xlu0 %2670
    %2680 = vst.msk [vmem:[#allocation2 + $0xa] sm:$0x3] %vm398, %v2657
    %2681 = vst.msk [vmem:[#allocation2 + $0x1a] sm:$0x3] %vm398, %v2659
    %2682 = vst.msk [vmem:[#allocation2 + $0x2a] sm:$0x3] %vm398, %v2661
    %2683 = vst.msk [vmem:[#allocation2 + $0x3a] sm:$0x3] %vm398, %v2663
    %2684 = vst.msk [vmem:[#allocation2 + $0x4a] sm:$0x3] %vm398, %v2665
    %2685 = vst.msk [vmem:[#allocation2 + $0x5a] sm:$0x3] %vm398, %v2667
    %2686 = vst.msk [vmem:[#allocation2 + $0x6a] sm:$0x3] %vm398, %v2669
    %2687 = vst.msk [vmem:[#allocation2 + $0x7a] sm:$0x3] %vm398, %v2671
    %2688 = vset.pattern.permute.xlu0 23
    %2689 = vperm.xlu0 %2688, %v12
    %v2690 = vpop.permute.xlu0 %2689
    %2692 = vset.pattern.permute.xlu0 23
    %2693 = vperm.xlu0 %2692, %v13
    %v2694 = vpop.permute.xlu0 %2693
    %2696 = vset.pattern.permute.xlu0 23
    %2697 = vperm.xlu0 %2696, %v14
    %v2698 = vpop.permute.xlu0 %2697
    %2700 = vset.pattern.permute.xlu0 23
    %2701 = vperm.xlu0 %2700, %v15
    %v2702 = vpop.permute.xlu0 %2701
    %2704 = vset.pattern.permute.xlu0 23
    %2705 = vperm.xlu0 %2704, %v16
    %v2706 = vpop.permute.xlu0 %2705
    %2708 = vset.pattern.permute.xlu0 23
    %2709 = vperm.xlu0 %2708, %v17
    %v2710 = vpop.permute.xlu0 %2709
    %2712 = vset.pattern.permute.xlu0 23
    %2713 = vperm.xlu0 %2712, %v18
    %v2714 = vpop.permute.xlu0 %2713
    %2716 = vset.pattern.permute.xlu0 23
    %2717 = vperm.xlu0 %2716, %v19
    %v2718 = vpop.permute.xlu0 %2717
    %v2720 = vadd.f32 %v2690, %v39
    %v2721 = vadd.f32 %v2694, %v43
    %v2722 = vadd.f32 %v2698, %v47
    %v2723 = vadd.f32 %v2702, %v51
    %v2724 = vadd.f32 %v2706, %v55
    %v2725 = vadd.f32 %v2710, %v59
    %v2726 = vadd.f32 %v2714, %v63
    %v2727 = vadd.f32 %v2718, %v67
    %v2737 = vunpack.c.l.s4 1983009808
    %v2738 = vunpack.c.0.s8 %v2737
    %v2739 = vlaneseq
    %v2740 = vshrl.u32 %v2739, 7
    %v2741 = vsub.s32 %v2738, %v2740
    %v2742 = vrot.slane %v2720, %v2741
    %v2744 = vunpack.c.l.s4 1983009808
    %v2745 = vunpack.c.0.s8 %v2744
    %v2746 = vlaneseq
    %v2747 = vshrl.u32 %v2746, 7
    %v2748 = vsub.s32 %v2745, %v2747
    %v2749 = vrot.slane %v2721, %v2748
    %v2751 = vunpack.c.l.s4 1983009808
    %v2752 = vunpack.c.0.s8 %v2751
    %v2753 = vlaneseq
    %v2754 = vshrl.u32 %v2753, 7
    %v2755 = vsub.s32 %v2752, %v2754
    %v2756 = vrot.slane %v2722, %v2755
    %v2758 = vunpack.c.l.s4 1983009808
    %v2759 = vunpack.c.0.s8 %v2758
    %v2760 = vlaneseq
    %v2761 = vshrl.u32 %v2760, 7
    %v2762 = vsub.s32 %v2759, %v2761
    %v2763 = vrot.slane %v2723, %v2762
    %v2765 = vunpack.c.l.s4 1983009808
    %v2766 = vunpack.c.0.s8 %v2765
    %v2767 = vlaneseq
    %v2768 = vshrl.u32 %v2767, 7
    %v2769 = vsub.s32 %v2766, %v2768
    %v2770 = vrot.slane %v2724, %v2769
    %v2772 = vunpack.c.l.s4 1983009808
    %v2773 = vunpack.c.0.s8 %v2772
    %v2774 = vlaneseq
    %v2775 = vshrl.u32 %v2774, 7
    %v2776 = vsub.s32 %v2773, %v2775
    %v2777 = vrot.slane %v2725, %v2776
    %v2779 = vunpack.c.l.s4 1983009808
    %v2780 = vunpack.c.0.s8 %v2779
    %v2781 = vlaneseq
    %v2782 = vshrl.u32 %v2781, 7
    %v2783 = vsub.s32 %v2780, %v2782
    %v2784 = vrot.slane %v2726, %v2783
    %v2786 = vunpack.c.l.s4 1983009808
    %v2787 = vunpack.c.0.s8 %v2786
    %v2788 = vlaneseq
    %v2789 = vshrl.u32 %v2788, 7
    %v2790 = vsub.s32 %v2787, %v2789
    %v2791 = vrot.slane %v2727, %v2790
    %2792 = vrot.lane.b32.xlu0 %v2742, 96
    %v2793 = vpop.permute.xlu0 %2792
    %2794 = vrot.lane.b32.xlu0 %v2749, 96
    %v2795 = vpop.permute.xlu0 %2794
    %2796 = vrot.lane.b32.xlu0 %v2756, 96
    %v2797 = vpop.permute.xlu0 %2796
    %2798 = vrot.lane.b32.xlu0 %v2763, 96
    %v2799 = vpop.permute.xlu0 %2798
    %2800 = vrot.lane.b32.xlu0 %v2770, 96
    %v2801 = vpop.permute.xlu0 %2800
    %2802 = vrot.lane.b32.xlu0 %v2777, 96
    %v2803 = vpop.permute.xlu0 %2802
    %2804 = vrot.lane.b32.xlu0 %v2784, 96
    %v2805 = vpop.permute.xlu0 %2804
    %2806 = vrot.lane.b32.xlu0 %v2791, 96
    %v2807 = vpop.permute.xlu0 %2806
    %2816 = vst.msk [vmem:[#allocation2 + $0xa] sm:$0x3] %vm535, %v2793
    %2817 = vst.msk [vmem:[#allocation2 + $0x1a] sm:$0x3] %vm535, %v2795
    %2818 = vst.msk [vmem:[#allocation2 + $0x2a] sm:$0x3] %vm535, %v2797
    %2819 = vst.msk [vmem:[#allocation2 + $0x3a] sm:$0x3] %vm535, %v2799
    %2820 = vst.msk [vmem:[#allocation2 + $0x4a] sm:$0x3] %vm535, %v2801
    %2821 = vst.msk [vmem:[#allocation2 + $0x5a] sm:$0x3] %vm535, %v2803
    %2822 = vst.msk [vmem:[#allocation2 + $0x6a] sm:$0x3] %vm535, %v2805
    %2823 = vst.msk [vmem:[#allocation2 + $0x7a] sm:$0x3] %vm535, %v2807
    %2824 = vset.pattern.permute.xlu0 24
    %2825 = vperm.xlu0 %2824, %v12
    %v2826 = vpop.permute.xlu0 %2825
    %2828 = vset.pattern.permute.xlu0 24
    %2829 = vperm.xlu0 %2828, %v13
    %v2830 = vpop.permute.xlu0 %2829
    %2832 = vset.pattern.permute.xlu0 24
    %2833 = vperm.xlu0 %2832, %v14
    %v2834 = vpop.permute.xlu0 %2833
    %2836 = vset.pattern.permute.xlu0 24
    %2837 = vperm.xlu0 %2836, %v15
    %v2838 = vpop.permute.xlu0 %2837
    %2840 = vset.pattern.permute.xlu0 24
    %2841 = vperm.xlu0 %2840, %v16
    %v2842 = vpop.permute.xlu0 %2841
    %2844 = vset.pattern.permute.xlu0 24
    %2845 = vperm.xlu0 %2844, %v17
    %v2846 = vpop.permute.xlu0 %2845
    %2848 = vset.pattern.permute.xlu0 24
    %2849 = vperm.xlu0 %2848, %v18
    %v2850 = vpop.permute.xlu0 %2849
    %2852 = vset.pattern.permute.xlu0 24
    %2853 = vperm.xlu0 %2852, %v19
    %v2854 = vpop.permute.xlu0 %2853
    %v2856 = vadd.f32 %v2826, %v39
    %v2857 = vadd.f32 %v2830, %v43
    %v2858 = vadd.f32 %v2834, %v47
    %v2859 = vadd.f32 %v2838, %v51
    %v2860 = vadd.f32 %v2842, %v55
    %v2861 = vadd.f32 %v2846, %v59
    %v2862 = vadd.f32 %v2850, %v63
    %v2863 = vadd.f32 %v2854, %v67
    %2864 = vst.msk [vmem:[#allocation2 + $0xc] sm:$0x3] %vm124, %v2856
    %2865 = vst.msk [vmem:[#allocation2 + $0x1c] sm:$0x3] %vm124, %v2857
    %2866 = vst.msk [vmem:[#allocation2 + $0x2c] sm:$0x3] %vm124, %v2858
    %2867 = vst.msk [vmem:[#allocation2 + $0x3c] sm:$0x3] %vm124, %v2859
    %2868 = vst.msk [vmem:[#allocation2 + $0x4c] sm:$0x3] %vm124, %v2860
    %2869 = vst.msk [vmem:[#allocation2 + $0x5c] sm:$0x3] %vm124, %v2861
    %2870 = vst.msk [vmem:[#allocation2 + $0x6c] sm:$0x3] %vm124, %v2862
    %2871 = vst.msk [vmem:[#allocation2 + $0x7c] sm:$0x3] %vm124, %v2863
    %2872 = vset.pattern.permute.xlu0 25
    %2873 = vperm.xlu0 %2872, %v12
    %v2874 = vpop.permute.xlu0 %2873
    %2876 = vset.pattern.permute.xlu0 25
    %2877 = vperm.xlu0 %2876, %v13
    %v2878 = vpop.permute.xlu0 %2877
    %2880 = vset.pattern.permute.xlu0 25
    %2881 = vperm.xlu0 %2880, %v14
    %v2882 = vpop.permute.xlu0 %2881
    %2884 = vset.pattern.permute.xlu0 25
    %2885 = vperm.xlu0 %2884, %v15
    %v2886 = vpop.permute.xlu0 %2885
    %2888 = vset.pattern.permute.xlu0 25
    %2889 = vperm.xlu0 %2888, %v16
    %v2890 = vpop.permute.xlu0 %2889
    %2892 = vset.pattern.permute.xlu0 25
    %2893 = vperm.xlu0 %2892, %v17
    %v2894 = vpop.permute.xlu0 %2893
    %2896 = vset.pattern.permute.xlu0 25
    %2897 = vperm.xlu0 %2896, %v18
    %v2898 = vpop.permute.xlu0 %2897
    %2900 = vset.pattern.permute.xlu0 25
    %2901 = vperm.xlu0 %2900, %v19
    %v2902 = vpop.permute.xlu0 %2901
    %v2904 = vadd.f32 %v2874, %v39
    %v2905 = vadd.f32 %v2878, %v43
    %v2906 = vadd.f32 %v2882, %v47
    %v2907 = vadd.f32 %v2886, %v51
    %v2908 = vadd.f32 %v2890, %v55
    %v2909 = vadd.f32 %v2894, %v59
    %v2910 = vadd.f32 %v2898, %v63
    %v2911 = vadd.f32 %v2902, %v67
    %v2921 = vunpack.c.l.s4 1983009808
    %v2922 = vunpack.c.0.s8 %v2921
    %v2923 = vlaneseq
    %v2924 = vshrl.u32 %v2923, 7
    %v2925 = vsub.s32 %v2922, %v2924
    %v2926 = vrot.slane %v2904, %v2925
    %v2928 = vunpack.c.l.s4 1983009808
    %v2929 = vunpack.c.0.s8 %v2928
    %v2930 = vlaneseq
    %v2931 = vshrl.u32 %v2930, 7
    %v2932 = vsub.s32 %v2929, %v2931
    %v2933 = vrot.slane %v2905, %v2932
    %v2935 = vunpack.c.l.s4 1983009808
    %v2936 = vunpack.c.0.s8 %v2935
    %v2937 = vlaneseq
    %v2938 = vshrl.u32 %v2937, 7
    %v2939 = vsub.s32 %v2936, %v2938
    %v2940 = vrot.slane %v2906, %v2939
    %v2942 = vunpack.c.l.s4 1983009808
    %v2943 = vunpack.c.0.s8 %v2942
    %v2944 = vlaneseq
    %v2945 = vshrl.u32 %v2944, 7
    %v2946 = vsub.s32 %v2943, %v2945
    %v2947 = vrot.slane %v2907, %v2946
    %v2949 = vunpack.c.l.s4 1983009808
    %v2950 = vunpack.c.0.s8 %v2949
    %v2951 = vlaneseq
    %v2952 = vshrl.u32 %v2951, 7
    %v2953 = vsub.s32 %v2950, %v2952
    %v2954 = vrot.slane %v2908, %v2953
    %v2956 = vunpack.c.l.s4 1983009808
    %v2957 = vunpack.c.0.s8 %v2956
    %v2958 = vlaneseq
    %v2959 = vshrl.u32 %v2958, 7
    %v2960 = vsub.s32 %v2957, %v2959
    %v2961 = vrot.slane %v2909, %v2960
    %v2963 = vunpack.c.l.s4 1983009808
    %v2964 = vunpack.c.0.s8 %v2963
    %v2965 = vlaneseq
    %v2966 = vshrl.u32 %v2965, 7
    %v2967 = vsub.s32 %v2964, %v2966
    %v2968 = vrot.slane %v2910, %v2967
    %v2970 = vunpack.c.l.s4 1983009808
    %v2971 = vunpack.c.0.s8 %v2970
    %v2972 = vlaneseq
    %v2973 = vshrl.u32 %v2972, 7
    %v2974 = vsub.s32 %v2971, %v2973
    %v2975 = vrot.slane %v2911, %v2974
    %2976 = vrot.lane.b32.xlu0 %v2926, 32
    %v2977 = vpop.permute.xlu0 %2976
    %2978 = vrot.lane.b32.xlu0 %v2933, 32
    %v2979 = vpop.permute.xlu0 %2978
    %2980 = vrot.lane.b32.xlu0 %v2940, 32
    %v2981 = vpop.permute.xlu0 %2980
    %2982 = vrot.lane.b32.xlu0 %v2947, 32
    %v2983 = vpop.permute.xlu0 %2982
    %2984 = vrot.lane.b32.xlu0 %v2954, 32
    %v2985 = vpop.permute.xlu0 %2984
    %2986 = vrot.lane.b32.xlu0 %v2961, 32
    %v2987 = vpop.permute.xlu0 %2986
    %2988 = vrot.lane.b32.xlu0 %v2968, 32
    %v2989 = vpop.permute.xlu0 %2988
    %2990 = vrot.lane.b32.xlu0 %v2975, 32
    %v2991 = vpop.permute.xlu0 %2990
    %3000 = vst.msk [vmem:[#allocation2 + $0xc] sm:$0x3] %vm261, %v2977
    %3001 = vst.msk [vmem:[#allocation2 + $0x1c] sm:$0x3] %vm261, %v2979
    %3002 = vst.msk [vmem:[#allocation2 + $0x2c] sm:$0x3] %vm261, %v2981
    %3003 = vst.msk [vmem:[#allocation2 + $0x3c] sm:$0x3] %vm261, %v2983
    %3004 = vst.msk [vmem:[#allocation2 + $0x4c] sm:$0x3] %vm261, %v2985
    %3005 = vst.msk [vmem:[#allocation2 + $0x5c] sm:$0x3] %vm261, %v2987
    %3006 = vst.msk [vmem:[#allocation2 + $0x6c] sm:$0x3] %vm261, %v2989
    %3007 = vst.msk [vmem:[#allocation2 + $0x7c] sm:$0x3] %vm261, %v2991
    %3008 = vset.pattern.permute.xlu0 26
    %3009 = vperm.xlu0 %3008, %v12
    %v3010 = vpop.permute.xlu0 %3009
    %3012 = vset.pattern.permute.xlu0 26
    %3013 = vperm.xlu0 %3012, %v13
    %v3014 = vpop.permute.xlu0 %3013
    %3016 = vset.pattern.permute.xlu0 26
    %3017 = vperm.xlu0 %3016, %v14
    %v3018 = vpop.permute.xlu0 %3017
    %3020 = vset.pattern.permute.xlu0 26
    %3021 = vperm.xlu0 %3020, %v15
    %v3022 = vpop.permute.xlu0 %3021
    %3024 = vset.pattern.permute.xlu0 26
    %3025 = vperm.xlu0 %3024, %v16
    %v3026 = vpop.permute.xlu0 %3025
    %3028 = vset.pattern.permute.xlu0 26
    %3029 = vperm.xlu0 %3028, %v17
    %v3030 = vpop.permute.xlu0 %3029
    %3032 = vset.pattern.permute.xlu0 26
    %3033 = vperm.xlu0 %3032, %v18
    %v3034 = vpop.permute.xlu0 %3033
    %3036 = vset.pattern.permute.xlu0 26
    %3037 = vperm.xlu0 %3036, %v19
    %v3038 = vpop.permute.xlu0 %3037
    %v3040 = vadd.f32 %v3010, %v39
    %v3041 = vadd.f32 %v3014, %v43
    %v3042 = vadd.f32 %v3018, %v47
    %v3043 = vadd.f32 %v3022, %v51
    %v3044 = vadd.f32 %v3026, %v55
    %v3045 = vadd.f32 %v3030, %v59
    %v3046 = vadd.f32 %v3034, %v63
    %v3047 = vadd.f32 %v3038, %v67
    %v3057 = vunpack.c.l.s4 1983009808
    %v3058 = vunpack.c.0.s8 %v3057
    %v3059 = vlaneseq
    %v3060 = vshrl.u32 %v3059, 7
    %v3061 = vsub.s32 %v3058, %v3060
    %v3062 = vrot.slane %v3040, %v3061
    %v3064 = vunpack.c.l.s4 1983009808
    %v3065 = vunpack.c.0.s8 %v3064
    %v3066 = vlaneseq
    %v3067 = vshrl.u32 %v3066, 7
    %v3068 = vsub.s32 %v3065, %v3067
    %v3069 = vrot.slane %v3041, %v3068
    %v3071 = vunpack.c.l.s4 1983009808
    %v3072 = vunpack.c.0.s8 %v3071
    %v3073 = vlaneseq
    %v3074 = vshrl.u32 %v3073, 7
    %v3075 = vsub.s32 %v3072, %v3074
    %v3076 = vrot.slane %v3042, %v3075
    %v3078 = vunpack.c.l.s4 1983009808
    %v3079 = vunpack.c.0.s8 %v3078
    %v3080 = vlaneseq
    %v3081 = vshrl.u32 %v3080, 7
    %v3082 = vsub.s32 %v3079, %v3081
    %v3083 = vrot.slane %v3043, %v3082
    %v3085 = vunpack.c.l.s4 1983009808
    %v3086 = vunpack.c.0.s8 %v3085
    %v3087 = vlaneseq
    %v3088 = vshrl.u32 %v3087, 7
    %v3089 = vsub.s32 %v3086, %v3088
    %v3090 = vrot.slane %v3044, %v3089
    %v3092 = vunpack.c.l.s4 1983009808
    %v3093 = vunpack.c.0.s8 %v3092
    %v3094 = vlaneseq
    %v3095 = vshrl.u32 %v3094, 7
    %v3096 = vsub.s32 %v3093, %v3095
    %v3097 = vrot.slane %v3045, %v3096
    %v3099 = vunpack.c.l.s4 1983009808
    %v3100 = vunpack.c.0.s8 %v3099
    %v3101 = vlaneseq
    %v3102 = vshrl.u32 %v3101, 7
    %v3103 = vsub.s32 %v3100, %v3102
    %v3104 = vrot.slane %v3046, %v3103
    %v3106 = vunpack.c.l.s4 1983009808
    %v3107 = vunpack.c.0.s8 %v3106
    %v3108 = vlaneseq
    %v3109 = vshrl.u32 %v3108, 7
    %v3110 = vsub.s32 %v3107, %v3109
    %v3111 = vrot.slane %v3047, %v3110
    %3112 = vrot.lane.b32.xlu0 %v3062, 64
    %v3113 = vpop.permute.xlu0 %3112
    %3114 = vrot.lane.b32.xlu0 %v3069, 64
    %v3115 = vpop.permute.xlu0 %3114
    %3116 = vrot.lane.b32.xlu0 %v3076, 64
    %v3117 = vpop.permute.xlu0 %3116
    %3118 = vrot.lane.b32.xlu0 %v3083, 64
    %v3119 = vpop.permute.xlu0 %3118
    %3120 = vrot.lane.b32.xlu0 %v3090, 64
    %v3121 = vpop.permute.xlu0 %3120
    %3122 = vrot.lane.b32.xlu0 %v3097, 64
    %v3123 = vpop.permute.xlu0 %3122
    %3124 = vrot.lane.b32.xlu0 %v3104, 64
    %v3125 = vpop.permute.xlu0 %3124
    %3126 = vrot.lane.b32.xlu0 %v3111, 64
    %v3127 = vpop.permute.xlu0 %3126
    %3136 = vst.msk [vmem:[#allocation2 + $0xc] sm:$0x3] %vm398, %v3113
    %3137 = vst.msk [vmem:[#allocation2 + $0x1c] sm:$0x3] %vm398, %v3115
    %3138 = vst.msk [vmem:[#allocation2 + $0x2c] sm:$0x3] %vm398, %v3117
    %3139 = vst.msk [vmem:[#allocation2 + $0x3c] sm:$0x3] %vm398, %v3119
    %3140 = vst.msk [vmem:[#allocation2 + $0x4c] sm:$0x3] %vm398, %v3121
    %3141 = vst.msk [vmem:[#allocation2 + $0x5c] sm:$0x3] %vm398, %v3123
    %3142 = vst.msk [vmem:[#allocation2 + $0x6c] sm:$0x3] %vm398, %v3125
    %3143 = vst.msk [vmem:[#allocation2 + $0x7c] sm:$0x3] %vm398, %v3127
    %3144 = vset.pattern.permute.xlu0 27
    %3145 = vperm.xlu0 %3144, %v12
    %v3146 = vpop.permute.xlu0 %3145
    %3148 = vset.pattern.permute.xlu0 27
    %3149 = vperm.xlu0 %3148, %v13
    %v3150 = vpop.permute.xlu0 %3149
    %3152 = vset.pattern.permute.xlu0 27
    %3153 = vperm.xlu0 %3152, %v14
    %v3154 = vpop.permute.xlu0 %3153
    %3156 = vset.pattern.permute.xlu0 27
    %3157 = vperm.xlu0 %3156, %v15
    %v3158 = vpop.permute.xlu0 %3157
    %3160 = vset.pattern.permute.xlu0 27
    %3161 = vperm.xlu0 %3160, %v16
    %v3162 = vpop.permute.xlu0 %3161
    %3164 = vset.pattern.permute.xlu0 27
    %3165 = vperm.xlu0 %3164, %v17
    %v3166 = vpop.permute.xlu0 %3165
    %3168 = vset.pattern.permute.xlu0 27
    %3169 = vperm.xlu0 %3168, %v18
    %v3170 = vpop.permute.xlu0 %3169
    %3172 = vset.pattern.permute.xlu0 27
    %3173 = vperm.xlu0 %3172, %v19
    %v3174 = vpop.permute.xlu0 %3173
    %v3176 = vadd.f32 %v3146, %v39
    %v3177 = vadd.f32 %v3150, %v43
    %v3178 = vadd.f32 %v3154, %v47
    %v3179 = vadd.f32 %v3158, %v51
    %v3180 = vadd.f32 %v3162, %v55
    %v3181 = vadd.f32 %v3166, %v59
    %v3182 = vadd.f32 %v3170, %v63
    %v3183 = vadd.f32 %v3174, %v67
    %v3193 = vunpack.c.l.s4 1983009808
    %v3194 = vunpack.c.0.s8 %v3193
    %v3195 = vlaneseq
    %v3196 = vshrl.u32 %v3195, 7
    %v3197 = vsub.s32 %v3194, %v3196
    %v3198 = vrot.slane %v3176, %v3197
    %v3200 = vunpack.c.l.s4 1983009808
    %v3201 = vunpack.c.0.s8 %v3200
    %v3202 = vlaneseq
    %v3203 = vshrl.u32 %v3202, 7
    %v3204 = vsub.s32 %v3201, %v3203
    %v3205 = vrot.slane %v3177, %v3204
    %v3207 = vunpack.c.l.s4 1983009808
    %v3208 = vunpack.c.0.s8 %v3207
    %v3209 = vlaneseq
    %v3210 = vshrl.u32 %v3209, 7
    %v3211 = vsub.s32 %v3208, %v3210
    %v3212 = vrot.slane %v3178, %v3211
    %v3214 = vunpack.c.l.s4 1983009808
    %v3215 = vunpack.c.0.s8 %v3214
    %v3216 = vlaneseq
    %v3217 = vshrl.u32 %v3216, 7
    %v3218 = vsub.s32 %v3215, %v3217
    %v3219 = vrot.slane %v3179, %v3218
    %v3221 = vunpack.c.l.s4 1983009808
    %v3222 = vunpack.c.0.s8 %v3221
    %v3223 = vlaneseq
    %v3224 = vshrl.u32 %v3223, 7
    %v3225 = vsub.s32 %v3222, %v3224
    %v3226 = vrot.slane %v3180, %v3225
    %v3228 = vunpack.c.l.s4 1983009808
    %v3229 = vunpack.c.0.s8 %v3228
    %v3230 = vlaneseq
    %v3231 = vshrl.u32 %v3230, 7
    %v3232 = vsub.s32 %v3229, %v3231
    %v3233 = vrot.slane %v3181, %v3232
    %v3235 = vunpack.c.l.s4 1983009808
    %v3236 = vunpack.c.0.s8 %v3235
    %v3237 = vlaneseq
    %v3238 = vshrl.u32 %v3237, 7
    %v3239 = vsub.s32 %v3236, %v3238
    %v3240 = vrot.slane %v3182, %v3239
    %v3242 = vunpack.c.l.s4 1983009808
    %v3243 = vunpack.c.0.s8 %v3242
    %v3244 = vlaneseq
    %v3245 = vshrl.u32 %v3244, 7
    %v3246 = vsub.s32 %v3243, %v3245
    %v3247 = vrot.slane %v3183, %v3246
    %3248 = vrot.lane.b32.xlu0 %v3198, 96
    %v3249 = vpop.permute.xlu0 %3248
    %3250 = vrot.lane.b32.xlu0 %v3205, 96
    %v3251 = vpop.permute.xlu0 %3250
    %3252 = vrot.lane.b32.xlu0 %v3212, 96
    %v3253 = vpop.permute.xlu0 %3252
    %3254 = vrot.lane.b32.xlu0 %v3219, 96
    %v3255 = vpop.permute.xlu0 %3254
    %3256 = vrot.lane.b32.xlu0 %v3226, 96
    %v3257 = vpop.permute.xlu0 %3256
    %3258 = vrot.lane.b32.xlu0 %v3233, 96
    %v3259 = vpop.permute.xlu0 %3258
    %3260 = vrot.lane.b32.xlu0 %v3240, 96
    %v3261 = vpop.permute.xlu0 %3260
    %3262 = vrot.lane.b32.xlu0 %v3247, 96
    %v3263 = vpop.permute.xlu0 %3262
    %3272 = vst.msk [vmem:[#allocation2 + $0xc] sm:$0x3] %vm535, %v3249
    %3273 = vst.msk [vmem:[#allocation2 + $0x1c] sm:$0x3] %vm535, %v3251
    %3274 = vst.msk [vmem:[#allocation2 + $0x2c] sm:$0x3] %vm535, %v3253
    %3275 = vst.msk [vmem:[#allocation2 + $0x3c] sm:$0x3] %vm535, %v3255
    %3276 = vst.msk [vmem:[#allocation2 + $0x4c] sm:$0x3] %vm535, %v3257
    %3277 = vst.msk [vmem:[#allocation2 + $0x5c] sm:$0x3] %vm535, %v3259
    %3278 = vst.msk [vmem:[#allocation2 + $0x6c] sm:$0x3] %vm535, %v3261
    %3279 = vst.msk [vmem:[#allocation2 + $0x7c] sm:$0x3] %vm535, %v3263
    %3280 = vset.pattern.permute.xlu0 28
    %3281 = vperm.xlu0 %3280, %v12
    %v3282 = vpop.permute.xlu0 %3281
    %3284 = vset.pattern.permute.xlu0 28
    %3285 = vperm.xlu0 %3284, %v13
    %v3286 = vpop.permute.xlu0 %3285
    %3288 = vset.pattern.permute.xlu0 28
    %3289 = vperm.xlu0 %3288, %v14
    %v3290 = vpop.permute.xlu0 %3289
    %3292 = vset.pattern.permute.xlu0 28
    %3293 = vperm.xlu0 %3292, %v15
    %v3294 = vpop.permute.xlu0 %3293
    %3296 = vset.pattern.permute.xlu0 28
    %3297 = vperm.xlu0 %3296, %v16
    %v3298 = vpop.permute.xlu0 %3297
    %3300 = vset.pattern.permute.xlu0 28
    %3301 = vperm.xlu0 %3300, %v17
    %v3302 = vpop.permute.xlu0 %3301
    %3304 = vset.pattern.permute.xlu0 28
    %3305 = vperm.xlu0 %3304, %v18
    %v3306 = vpop.permute.xlu0 %3305
    %3308 = vset.pattern.permute.xlu0 28
    %3309 = vperm.xlu0 %3308, %v19
    %v3310 = vpop.permute.xlu0 %3309
    %v3312 = vadd.f32 %v3282, %v39
    %v3313 = vadd.f32 %v3286, %v43
    %v3314 = vadd.f32 %v3290, %v47
    %v3315 = vadd.f32 %v3294, %v51
    %v3316 = vadd.f32 %v3298, %v55
    %v3317 = vadd.f32 %v3302, %v59
    %v3318 = vadd.f32 %v3306, %v63
    %v3319 = vadd.f32 %v3310, %v67
    %3320 = vst.msk [vmem:[#allocation2 + $0xe] sm:$0x3] %vm124, %v3312
    %3321 = vst.msk [vmem:[#allocation2 + $0x1e] sm:$0x3] %vm124, %v3313
    %3322 = vst.msk [vmem:[#allocation2 + $0x2e] sm:$0x3] %vm124, %v3314
    %3323 = vst.msk [vmem:[#allocation2 + $0x3e] sm:$0x3] %vm124, %v3315
    %3324 = vst.msk [vmem:[#allocation2 + $0x4e] sm:$0x3] %vm124, %v3316
    %3325 = vst.msk [vmem:[#allocation2 + $0x5e] sm:$0x3] %vm124, %v3317
    %3326 = vst.msk [vmem:[#allocation2 + $0x6e] sm:$0x3] %vm124, %v3318
    %3327 = vst.msk [vmem:[#allocation2 + $0x7e] sm:$0x3] %vm124, %v3319
    %3328 = vset.pattern.permute.xlu0 29
    %3329 = vperm.xlu0 %3328, %v12
    %v3330 = vpop.permute.xlu0 %3329
    %3332 = vset.pattern.permute.xlu0 29
    %3333 = vperm.xlu0 %3332, %v13
    %v3334 = vpop.permute.xlu0 %3333
    %3336 = vset.pattern.permute.xlu0 29
    %3337 = vperm.xlu0 %3336, %v14
    %v3338 = vpop.permute.xlu0 %3337
    %3340 = vset.pattern.permute.xlu0 29
    %3341 = vperm.xlu0 %3340, %v15
    %v3342 = vpop.permute.xlu0 %3341
    %3344 = vset.pattern.permute.xlu0 29
    %3345 = vperm.xlu0 %3344, %v16
    %v3346 = vpop.permute.xlu0 %3345
    %3348 = vset.pattern.permute.xlu0 29
    %3349 = vperm.xlu0 %3348, %v17
    %v3350 = vpop.permute.xlu0 %3349
    %3352 = vset.pattern.permute.xlu0 29
    %3353 = vperm.xlu0 %3352, %v18
    %v3354 = vpop.permute.xlu0 %3353
    %3356 = vset.pattern.permute.xlu0 29
    %3357 = vperm.xlu0 %3356, %v19
    %v3358 = vpop.permute.xlu0 %3357
    %v3360 = vadd.f32 %v3330, %v39
    %v3361 = vadd.f32 %v3334, %v43
    %v3362 = vadd.f32 %v3338, %v47
    %v3363 = vadd.f32 %v3342, %v51
    %v3364 = vadd.f32 %v3346, %v55
    %v3365 = vadd.f32 %v3350, %v59
    %v3366 = vadd.f32 %v3354, %v63
    %v3367 = vadd.f32 %v3358, %v67
    %v3377 = vunpack.c.l.s4 1983009808
    %v3378 = vunpack.c.0.s8 %v3377
    %v3379 = vlaneseq
    %v3380 = vshrl.u32 %v3379, 7
    %v3381 = vsub.s32 %v3378, %v3380
    %v3382 = vrot.slane %v3360, %v3381
    %v3384 = vunpack.c.l.s4 1983009808
    %v3385 = vunpack.c.0.s8 %v3384
    %v3386 = vlaneseq
    %v3387 = vshrl.u32 %v3386, 7
    %v3388 = vsub.s32 %v3385, %v3387
    %v3389 = vrot.slane %v3361, %v3388
    %v3391 = vunpack.c.l.s4 1983009808
    %v3392 = vunpack.c.0.s8 %v3391
    %v3393 = vlaneseq
    %v3394 = vshrl.u32 %v3393, 7
    %v3395 = vsub.s32 %v3392, %v3394
    %v3396 = vrot.slane %v3362, %v3395
    %v3398 = vunpack.c.l.s4 1983009808
    %v3399 = vunpack.c.0.s8 %v3398
    %v3400 = vlaneseq
    %v3401 = vshrl.u32 %v3400, 7
    %v3402 = vsub.s32 %v3399, %v3401
    %v3403 = vrot.slane %v3363, %v3402
    %v3405 = vunpack.c.l.s4 1983009808
    %v3406 = vunpack.c.0.s8 %v3405
    %v3407 = vlaneseq
    %v3408 = vshrl.u32 %v3407, 7
    %v3409 = vsub.s32 %v3406, %v3408
    %v3410 = vrot.slane %v3364, %v3409
    %v3412 = vunpack.c.l.s4 1983009808
    %v3413 = vunpack.c.0.s8 %v3412
    %v3414 = vlaneseq
    %v3415 = vshrl.u32 %v3414, 7
    %v3416 = vsub.s32 %v3413, %v3415
    %v3417 = vrot.slane %v3365, %v3416
    %v3419 = vunpack.c.l.s4 1983009808
    %v3420 = vunpack.c.0.s8 %v3419
    %v3421 = vlaneseq
    %v3422 = vshrl.u32 %v3421, 7
    %v3423 = vsub.s32 %v3420, %v3422
    %v3424 = vrot.slane %v3366, %v3423
    %v3426 = vunpack.c.l.s4 1983009808
    %v3427 = vunpack.c.0.s8 %v3426
    %v3428 = vlaneseq
    %v3429 = vshrl.u32 %v3428, 7
    %v3430 = vsub.s32 %v3427, %v3429
    %v3431 = vrot.slane %v3367, %v3430
    %3432 = vrot.lane.b32.xlu0 %v3382, 32
    %v3433 = vpop.permute.xlu0 %3432
    %3434 = vrot.lane.b32.xlu0 %v3389, 32
    %v3435 = vpop.permute.xlu0 %3434
    %3436 = vrot.lane.b32.xlu0 %v3396, 32
    %v3437 = vpop.permute.xlu0 %3436
    %3438 = vrot.lane.b32.xlu0 %v3403, 32
    %v3439 = vpop.permute.xlu0 %3438
    %3440 = vrot.lane.b32.xlu0 %v3410, 32
    %v3441 = vpop.permute.xlu0 %3440
    %3442 = vrot.lane.b32.xlu0 %v3417, 32
    %v3443 = vpop.permute.xlu0 %3442
    %3444 = vrot.lane.b32.xlu0 %v3424, 32
    %v3445 = vpop.permute.xlu0 %3444
    %3446 = vrot.lane.b32.xlu0 %v3431, 32
    %v3447 = vpop.permute.xlu0 %3446
    %3456 = vst.msk [vmem:[#allocation2 + $0xe] sm:$0x3] %vm261, %v3433
    %3457 = vst.msk [vmem:[#allocation2 + $0x1e] sm:$0x3] %vm261, %v3435
    %3458 = vst.msk [vmem:[#allocation2 + $0x2e] sm:$0x3] %vm261, %v3437
    %3459 = vst.msk [vmem:[#allocation2 + $0x3e] sm:$0x3] %vm261, %v3439
    %3460 = vst.msk [vmem:[#allocation2 + $0x4e] sm:$0x3] %vm261, %v3441
    %3461 = vst.msk [vmem:[#allocation2 + $0x5e] sm:$0x3] %vm261, %v3443
    %3462 = vst.msk [vmem:[#allocation2 + $0x6e] sm:$0x3] %vm261, %v3445
    %3463 = vst.msk [vmem:[#allocation2 + $0x7e] sm:$0x3] %vm261, %v3447
    %3464 = vset.pattern.permute.xlu0 30
    %3465 = vperm.xlu0 %3464, %v12
    %v3466 = vpop.permute.xlu0 %3465
    %3468 = vset.pattern.permute.xlu0 30
    %3469 = vperm.xlu0 %3468, %v13
    %v3470 = vpop.permute.xlu0 %3469
    %3472 = vset.pattern.permute.xlu0 30
    %3473 = vperm.xlu0 %3472, %v14
    %v3474 = vpop.permute.xlu0 %3473
    %3476 = vset.pattern.permute.xlu0 30
    %3477 = vperm.xlu0 %3476, %v15
    %v3478 = vpop.permute.xlu0 %3477
    %3480 = vset.pattern.permute.xlu0 30
    %3481 = vperm.xlu0 %3480, %v16
    %v3482 = vpop.permute.xlu0 %3481
    %3484 = vset.pattern.permute.xlu0 30
    %3485 = vperm.xlu0 %3484, %v17
    %v3486 = vpop.permute.xlu0 %3485
    %3488 = vset.pattern.permute.xlu0 30
    %3489 = vperm.xlu0 %3488, %v18
    %v3490 = vpop.permute.xlu0 %3489
    %3492 = vset.pattern.permute.xlu0 30
    %3493 = vperm.xlu0 %3492, %v19
    %v3494 = vpop.permute.xlu0 %3493
    %v3496 = vadd.f32 %v3466, %v39
    %v3497 = vadd.f32 %v3470, %v43
    %v3498 = vadd.f32 %v3474, %v47
    %v3499 = vadd.f32 %v3478, %v51
    %v3500 = vadd.f32 %v3482, %v55
    %v3501 = vadd.f32 %v3486, %v59
    %v3502 = vadd.f32 %v3490, %v63
    %v3503 = vadd.f32 %v3494, %v67
    %v3513 = vunpack.c.l.s4 1983009808
    %v3514 = vunpack.c.0.s8 %v3513
    %v3515 = vlaneseq
    %v3516 = vshrl.u32 %v3515, 7
    %v3517 = vsub.s32 %v3514, %v3516
    %v3518 = vrot.slane %v3496, %v3517
    %v3520 = vunpack.c.l.s4 1983009808
    %v3521 = vunpack.c.0.s8 %v3520
    %v3522 = vlaneseq
    %v3523 = vshrl.u32 %v3522, 7
    %v3524 = vsub.s32 %v3521, %v3523
    %v3525 = vrot.slane %v3497, %v3524
    %v3527 = vunpack.c.l.s4 1983009808
    %v3528 = vunpack.c.0.s8 %v3527
    %v3529 = vlaneseq
    %v3530 = vshrl.u32 %v3529, 7
    %v3531 = vsub.s32 %v3528, %v3530
    %v3532 = vrot.slane %v3498, %v3531
    %v3534 = vunpack.c.l.s4 1983009808
    %v3535 = vunpack.c.0.s8 %v3534
    %v3536 = vlaneseq
    %v3537 = vshrl.u32 %v3536, 7
    %v3538 = vsub.s32 %v3535, %v3537
    %v3539 = vrot.slane %v3499, %v3538
    %v3541 = vunpack.c.l.s4 1983009808
    %v3542 = vunpack.c.0.s8 %v3541
    %v3543 = vlaneseq
    %v3544 = vshrl.u32 %v3543, 7
    %v3545 = vsub.s32 %v3542, %v3544
    %v3546 = vrot.slane %v3500, %v3545
    %v3548 = vunpack.c.l.s4 1983009808
    %v3549 = vunpack.c.0.s8 %v3548
    %v3550 = vlaneseq
    %v3551 = vshrl.u32 %v3550, 7
    %v3552 = vsub.s32 %v3549, %v3551
    %v3553 = vrot.slane %v3501, %v3552
    %v3555 = vunpack.c.l.s4 1983009808
    %v3556 = vunpack.c.0.s8 %v3555
    %v3557 = vlaneseq
    %v3558 = vshrl.u32 %v3557, 7
    %v3559 = vsub.s32 %v3556, %v3558
    %v3560 = vrot.slane %v3502, %v3559
    %v3562 = vunpack.c.l.s4 1983009808
    %v3563 = vunpack.c.0.s8 %v3562
    %v3564 = vlaneseq
    %v3565 = vshrl.u32 %v3564, 7
    %v3566 = vsub.s32 %v3563, %v3565
    %v3567 = vrot.slane %v3503, %v3566
    %3568 = vrot.lane.b32.xlu0 %v3518, 64
    %v3569 = vpop.permute.xlu0 %3568
    %3570 = vrot.lane.b32.xlu0 %v3525, 64
    %v3571 = vpop.permute.xlu0 %3570
    %3572 = vrot.lane.b32.xlu0 %v3532, 64
    %v3573 = vpop.permute.xlu0 %3572
    %3574 = vrot.lane.b32.xlu0 %v3539, 64
    %v3575 = vpop.permute.xlu0 %3574
    %3576 = vrot.lane.b32.xlu0 %v3546, 64
    %v3577 = vpop.permute.xlu0 %3576
    %3578 = vrot.lane.b32.xlu0 %v3553, 64
    %v3579 = vpop.permute.xlu0 %3578
    %3580 = vrot.lane.b32.xlu0 %v3560, 64
    %v3581 = vpop.permute.xlu0 %3580
    %3582 = vrot.lane.b32.xlu0 %v3567, 64
    %v3583 = vpop.permute.xlu0 %3582
    %3592 = vst.msk [vmem:[#allocation2 + $0xe] sm:$0x3] %vm398, %v3569
    %3593 = vst.msk [vmem:[#allocation2 + $0x1e] sm:$0x3] %vm398, %v3571
    %3594 = vst.msk [vmem:[#allocation2 + $0x2e] sm:$0x3] %vm398, %v3573
    %3595 = vst.msk [vmem:[#allocation2 + $0x3e] sm:$0x3] %vm398, %v3575
    %3596 = vst.msk [vmem:[#allocation2 + $0x4e] sm:$0x3] %vm398, %v3577
    %3597 = vst.msk [vmem:[#allocation2 + $0x5e] sm:$0x3] %vm398, %v3579
    %3598 = vst.msk [vmem:[#allocation2 + $0x6e] sm:$0x3] %vm398, %v3581
    %3599 = vst.msk [vmem:[#allocation2 + $0x7e] sm:$0x3] %vm398, %v3583
    %3600 = vset.pattern.permute.xlu0 31
    %3601 = vperm.xlu0 %3600, %v12
    %v3602 = vpop.permute.xlu0 %3601
    %3604 = vset.pattern.permute.xlu0 31
    %3605 = vperm.xlu0 %3604, %v13
    %v3606 = vpop.permute.xlu0 %3605
    %3608 = vset.pattern.permute.xlu0 31
    %3609 = vperm.xlu0 %3608, %v14
    %v3610 = vpop.permute.xlu0 %3609
    %3612 = vset.pattern.permute.xlu0 31
    %3613 = vperm.xlu0 %3612, %v15
    %v3614 = vpop.permute.xlu0 %3613
    %3616 = vset.pattern.permute.xlu0 31
    %3617 = vperm.xlu0 %3616, %v16
    %v3618 = vpop.permute.xlu0 %3617
    %3620 = vset.pattern.permute.xlu0 31
    %3621 = vperm.xlu0 %3620, %v17
    %v3622 = vpop.permute.xlu0 %3621
    %3624 = vset.pattern.permute.xlu0 31
    %3625 = vperm.xlu0 %3624, %v18
    %v3626 = vpop.permute.xlu0 %3625
    %3628 = vset.pattern.permute.xlu0 31
    %3629 = vperm.xlu0 %3628, %v19
    %v3630 = vpop.permute.xlu0 %3629
    %v3632 = vadd.f32 %v3602, %v39
    %v3633 = vadd.f32 %v3606, %v43
    %v3634 = vadd.f32 %v3610, %v47
    %v3635 = vadd.f32 %v3614, %v51
    %v3636 = vadd.f32 %v3618, %v55
    %v3637 = vadd.f32 %v3622, %v59
    %v3638 = vadd.f32 %v3626, %v63
    %v3639 = vadd.f32 %v3630, %v67
    %v3649 = vunpack.c.l.s4 1983009808
    %v3650 = vunpack.c.0.s8 %v3649
    %v3651 = vlaneseq
    %v3652 = vshrl.u32 %v3651, 7
    %v3653 = vsub.s32 %v3650, %v3652
    %v3654 = vrot.slane %v3632, %v3653
    %v3656 = vunpack.c.l.s4 1983009808
    %v3657 = vunpack.c.0.s8 %v3656
    %v3658 = vlaneseq
    %v3659 = vshrl.u32 %v3658, 7
    %v3660 = vsub.s32 %v3657, %v3659
    %v3661 = vrot.slane %v3633, %v3660
    %v3663 = vunpack.c.l.s4 1983009808
    %v3664 = vunpack.c.0.s8 %v3663
    %v3665 = vlaneseq
    %v3666 = vshrl.u32 %v3665, 7
    %v3667 = vsub.s32 %v3664, %v3666
    %v3668 = vrot.slane %v3634, %v3667
    %v3670 = vunpack.c.l.s4 1983009808
    %v3671 = vunpack.c.0.s8 %v3670
    %v3672 = vlaneseq
    %v3673 = vshrl.u32 %v3672, 7
    %v3674 = vsub.s32 %v3671, %v3673
    %v3675 = vrot.slane %v3635, %v3674
    %v3677 = vunpack.c.l.s4 1983009808
    %v3678 = vunpack.c.0.s8 %v3677
    %v3679 = vlaneseq
    %v3680 = vshrl.u32 %v3679, 7
    %v3681 = vsub.s32 %v3678, %v3680
    %v3682 = vrot.slane %v3636, %v3681
    %v3684 = vunpack.c.l.s4 1983009808
    %v3685 = vunpack.c.0.s8 %v3684
    %v3686 = vlaneseq
    %v3687 = vshrl.u32 %v3686, 7
    %v3688 = vsub.s32 %v3685, %v3687
    %v3689 = vrot.slane %v3637, %v3688
    %v3691 = vunpack.c.l.s4 1983009808
    %v3692 = vunpack.c.0.s8 %v3691
    %v3693 = vlaneseq
    %v3694 = vshrl.u32 %v3693, 7
    %v3695 = vsub.s32 %v3692, %v3694
    %v3696 = vrot.slane %v3638, %v3695
    %v3698 = vunpack.c.l.s4 1983009808
    %v3699 = vunpack.c.0.s8 %v3698
    %v3700 = vlaneseq
    %v3701 = vshrl.u32 %v3700, 7
    %v3702 = vsub.s32 %v3699, %v3701
    %v3703 = vrot.slane %v3639, %v3702
    %3704 = vrot.lane.b32.xlu0 %v3654, 96
    %v3705 = vpop.permute.xlu0 %3704
    %3706 = vrot.lane.b32.xlu0 %v3661, 96
    %v3707 = vpop.permute.xlu0 %3706
    %3708 = vrot.lane.b32.xlu0 %v3668, 96
    %v3709 = vpop.permute.xlu0 %3708
    %3710 = vrot.lane.b32.xlu0 %v3675, 96
    %v3711 = vpop.permute.xlu0 %3710
    %3712 = vrot.lane.b32.xlu0 %v3682, 96
    %v3713 = vpop.permute.xlu0 %3712
    %3714 = vrot.lane.b32.xlu0 %v3689, 96
    %v3715 = vpop.permute.xlu0 %3714
    %3716 = vrot.lane.b32.xlu0 %v3696, 96
    %v3717 = vpop.permute.xlu0 %3716
    %3718 = vrot.lane.b32.xlu0 %v3703, 96
    %v3719 = vpop.permute.xlu0 %3718
    %3728 = vst.msk [vmem:[#allocation2 + $0xe] sm:$0x3] %vm535, %v3705
    %3729 = vst.msk [vmem:[#allocation2 + $0x1e] sm:$0x3] %vm535, %v3707
    %3730 = vst.msk [vmem:[#allocation2 + $0x2e] sm:$0x3] %vm535, %v3709
    %3731 = vst.msk [vmem:[#allocation2 + $0x3e] sm:$0x3] %vm535, %v3711
    %3732 = vst.msk [vmem:[#allocation2 + $0x4e] sm:$0x3] %vm535, %v3713
    %3733 = vst.msk [vmem:[#allocation2 + $0x5e] sm:$0x3] %vm535, %v3715
    %3734 = vst.msk [vmem:[#allocation2 + $0x6e] sm:$0x3] %vm535, %v3717
    %3735 = vst.msk [vmem:[#allocation2 + $0x7e] sm:$0x3] %vm535, %v3719
    // Predicated region
    $region10: #{positional_encoding_forward.1} parent=1 // pred_check
      _
    $region11: #{positional_encoding_forward.1} parent=1 // pred_check_branch
      %3737 = sbr.rel (0) target = $region13
    $region12: #{positional_encoding_forward.1} parent=1 // pred_region
      %s3739 = ssub.s32 2048, 2048
      %3740 = vsyncadd [#allocation3], %s3739
      %s3741 = sshll.u32 [#allocation2], 4
      %s3742 = int_to_ptr.vmem [resolvable:$true] %s3741
      %3747 = dma.vmem_to_hbm [thread:$0]  %s3742, 2048, %s2, [#allocation3], 256, 256, 16
    $region13: #{positional_encoding_forward.1} parent=1 // pred_fallthru
      _
    // Predicated region
    $region14: #{positional_encoding_forward.1} parent=1 // pred_check
      _
    $region15: #{positional_encoding_forward.1} parent=1 // pred_check_branch
      %3749 = sbr.rel (0) target = $region17
    $region16: #{positional_encoding_forward.1} parent=1 // pred_region
      %3750 = dma.done [#allocation3], 2048
    $region17: #{positional_encoding_forward.1} parent=1 // pred_fallthru
      _
    %3751 = vsyncpa [#allocation3], 1

</llo_original>
